<compile_context>
chip_gen: v7x
topology: tpu7x:2x2x1
jax: 0.10.0
libtpu: 0.0.40
codegen_flags: <defaults>
</compile_context>

<pallas_src>
import functools

import jax
import jax.numpy as jnp
import numpy as np
from jax.experimental import pallas as pl
from jax.experimental.pallas import tpu as pltpu

LN_EPS = 1e-5  # PyTorch nn.LayerNorm default


# --------------------------- small helpers -----------------------------------

@functools.lru_cache(maxsize=None)
def _vmem_limit_bytes():
    """Per-generation VMEM budget: ~3/4 of physical (96 MiB v5e/v6e, 48 MiB v7x)."""
    try:
        info = pltpu.get_tpu_info()
        cap = getattr(info, "vmem_capacity_bytes", None)
        if cap:
            return int(min(cap * 3 // 4, 112 * 1024 * 1024))
    except Exception:
        pass
    return 48 * 1024 * 1024  # conservative fallback (fits v7x's 64 MiB)


def _compiler_params(n_parallel=1):
    return pltpu.CompilerParams(
        dimension_semantics=("parallel",) * n_parallel,
        vmem_limit_bytes=_vmem_limit_bytes(),
    )


def _choose_batch_tile(B, S, D):
    """Sequences per grid step for the attention-block kernel (>=2 steps)."""
    budget = int(_vmem_limit_bytes() * 0.6)
    w_bytes = 2 * (D * 3 * D) * 2  # bf16 packed QKV weight, double-buffered

    def fits(tb):
        blocks = 2 * (2 * tb * S * D * 2)            # x in + attn out (bf16, 2 bufs)
        scratch = tb * S * (3 * D * 2 + D * 4)       # qkv bf16 + attn f32 scratch
        tmp = S * 3 * D * 4 + tb * S * S * 4         # per-seq qkv f32 + score tiles
        return w_bytes + blocks + scratch + tmp <= budget

    for tb in (8, 4, 2, 1):
        if B % tb == 0 and B // tb >= 2 and fits(tb):
            return tb
    return 1


def _choose_row_tile(M, D, Dm):
    """Row tile for the out-proj+MLP kernel: multiple of 16, >=2 steps, VMEM-aware.
    Returns (tm, M_pad); rows are padded to M_pad when M isn't divisible."""
    budget = int(_vmem_limit_bytes() * 0.6)
    w_bytes = 2 * (D * D + 2 * D * Dm) * 2  # bf16 wo/w1/w2, double-buffered

    def fits(tm):
        act = 2 * (3 * tm * D * 2)           # attn + x in, x out (bf16, 2 bufs)
        tmp = tm * (2 * D + Dm) * 4          # f32 intermediates (y, h1, h2)
        return w_bytes + act + tmp <= budget

    tiles = (512, 256, 128, 64, 32, 16)
    for tm in tiles:
        if M % tm == 0 and M // tm >= 2 and fits(tm):
            return tm, M
    M_pad = -(-M // 16) * 16
    for tm in tiles:
        if M_pad % tm == 0 and M_pad // tm >= 2 and fits(tm):
            return tm, M_pad
    return 16, M_pad


def _ln(x, g, b):
    mu = jnp.mean(x, axis=-1, keepdims=True)
    var = jnp.mean(jnp.square(x - mu), axis=-1, keepdims=True)
    return (x - mu) * jax.lax.rsqrt(var + LN_EPS) * g + b


# --------------------------- Pallas kernels ----------------------------------

def _attn_block_kernel(x_ref, g_ref, b_ref, wqkv_ref, bqkv_ref, o_ref,
                       qkv_scr, attn_scr, *, n_heads, scale):
    # x block: (TB, S, D) bf16.  Weights: packed (D, 3D) bf16.
    TB, S, D = x_ref.shape
    Dh = D // n_heads

    # Causal mask built in-kernel (no (S,S) operand DMA'd per grid step).
    row = jax.lax.broadcasted_iota(jnp.int32, (S, S), 0)
    col = jax.lax.broadcasted_iota(jnp.int32, (S, S), 1)
    mask = jnp.where(row >= col, 0.0, -1e9).astype(jnp.float32)

    g = g_ref[...]
    beta = b_ref[...]
    wqkv = wqkv_ref[...]
    bqkv = bqkv_ref[...]

    # LN1 + one packed QKV matmul per sequence; q/k/v stay in VMEM scratch.
    for b in range(TB):                              # static unroll
        xb = x_ref[b].astype(jnp.float32)            # (S, D)
        h = _ln(xb, g, beta).astype(jnp.bfloat16)
        qkv = jnp.dot(h, wqkv, preferred_element_type=jnp.float32) + bqkv
        qkv_scr[b] = qkv.astype(jnp.bfloat16)        # (S, 3D)

    # Per-head attention, batched over the TB sequences (single batched dots).
    for hd in range(n_heads):                        # static unroll
        lo = hd * Dh
        qh = qkv_scr[:, :, lo:lo + Dh]
        kh = qkv_scr[:, :, D + lo:D + lo + Dh]
        vh = qkv_scr[:, :, 2 * D + lo:2 * D + lo + Dh]
        s = jnp.einsum("bqd,bkd->bqk", qh, kh,
                       preferred_element_type=jnp.float32)
        s = s * scale + mask
        m = jnp.max(s, axis=-1, keepdims=True)
        p = jnp.exp(s - m)
        # Denominator >= 1 after max-subtraction -> approx reciprocal is safe.
        p = p * pl.reciprocal(jnp.sum(p, axis=-1, keepdims=True), approx=True)
        attn_scr[:, :, lo:lo + Dh] = jnp.einsum(
            "bqk,bkd->bqd", p.astype(jnp.bfloat16), vh,
            preferred_element_type=jnp.float32)

    # Single lane-dense bf16 store of the full (TB, S, D) tile.
    o_ref[...] = attn_scr[...].astype(o_ref.dtype)


def _proj_mlp_block_kernel(a_ref, x_ref, wo_ref, bo_ref, g2_ref, b2_ref,
                           w1_ref, b1_ref, w2_ref, bf2_ref, o_ref):
    # out-proj + residual + LN2 + fc1(QuickGELU) + fc2 + residual, fused.
    x = x_ref[...].astype(jnp.float32)                                    # (TM, D)
    y = jnp.dot(a_ref[...], wo_ref[...],
                preferred_element_type=jnp.float32) + bo_ref[...] + x
    h = _ln(y, g2_ref[...], b2_ref[...]).astype(jnp.bfloat16)
    h1 = jnp.dot(h, w1_ref[...], preferred_element_type=jnp.float32) + b1_ref[...]
    # CLIP QuickGELU: x * sigmoid(1.702 x) — exact division (per review, the
    # approx reciprocal here compounded error across layers).
    h1 = h1 * (1.0 / (1.0 + jnp.exp(-1.702 * h1)))
    h2 = jnp.dot(h1.astype(jnp.bfloat16), w2_ref[...],
                 preferred_element_type=jnp.float32) + bf2_ref[...]
    o_ref[...] = (y + h2).astype(o_ref.dtype)


# --------------------------- Pallas wrappers ----------------------------------

def attn_block(x, ln_g, ln_b, wqkv, bqkv, *, n_heads, scale):
    B, S, D = x.shape
    tb = _choose_batch_tile(B, S, D)
    blk = pl.BlockSpec((tb, S, D), lambda i: (i, 0, 0))
    return pl.pallas_call(
        functools.partial(_attn_block_kernel, n_heads=n_heads, scale=scale),
        out_shape=jax.ShapeDtypeStruct((B, S, D), jnp.bfloat16),
        grid=(B // tb,),
        in_specs=[blk,
                  pl.BlockSpec((1, D), lambda i: (0, 0)),
                  pl.BlockSpec((1, D), lambda i: (0, 0)),
                  pl.BlockSpec((D, 3 * D), lambda i: (0, 0)),
                  pl.BlockSpec((1, 3 * D), lambda i: (0, 0))],
        out_specs=blk,
        scratch_shapes=[pltpu.VMEM((tb, S, 3 * D), jnp.bfloat16),
                        pltpu.VMEM((tb, S, D), jnp.float32)],
        compiler_params=_compiler_params(1),
    )(x, ln_g, ln_b, wqkv, bqkv)


def proj_mlp_block(attn, x, wo, bo, ln2_g, ln2_b, w1, b1, w2, b2):
    M, D = x.shape
    Dm = w1.shape[1]
    tm, M_pad = _choose_row_tile(M, D, Dm)
    if M_pad != M:
        pad = ((0, M_pad - M), (0, 0))
        attn = jnp.pad(attn, pad)
        x = jnp.pad(x, pad)
    row = pl.BlockSpec((tm, D), lambda i: (i, 0))
    out = pl.pallas_call(
        _proj_mlp_block_kernel,
        out_shape=jax.ShapeDtypeStruct((M_pad, D), jnp.bfloat16),
        grid=(M_pad // tm,),
        in_specs=[row, row,
                  pl.BlockSpec((D, D), lambda i: (0, 0)),
                  pl.BlockSpec((1, D), lambda i: (0, 0)),
                  pl.BlockSpec((1, D), lambda i: (0, 0)),
                  pl.BlockSpec((1, D), lambda i: (0, 0)),
                  pl.BlockSpec((D, Dm), lambda i: (0, 0)),
                  pl.BlockSpec((1, Dm), lambda i: (0, 0)),
                  pl.BlockSpec((Dm, D), lambda i: (0, 0)),
                  pl.BlockSpec((1, D), lambda i: (0, 0))],
        out_specs=row,
        compiler_params=_compiler_params(1),
    )(attn, x, wo, bo, ln2_g, ln2_b, w1, b1, w2, b2)
    return out[:M] if M_pad != M else out


# --------------------------- parameter prep (one-time) ------------------------

def prepare_params(params):
    """Cast matmul weights to bf16 and reshape biases/LN params ONCE, outside
    the jitted forward (per review: no per-call weight casting in HBM)."""
    D = params["pos_emb"].shape[-1]
    prep = {
        "pos_emb": params["pos_emb"],
        "lnf_g": params["lnf_g"], "lnf_b": params["lnf_b"],
        "text_proj": params["text_proj"],
        "layers": [],
    }
    for lp in params["layers"]:
        Dm = lp["fc1_w"].shape[1]
        prep["layers"].append({
            "ln1_g": lp["ln1_g"].reshape(1, D),
            "ln1_b": lp["ln1_b"].reshape(1, D),
            "w_qkv": lp["attn_in_w"].astype(jnp.bfloat16),       # packed (D, 3D)
            "b_qkv": lp["attn_in_b"].reshape(1, 3 * D),
            "wo": lp["attn_out_w"].astype(jnp.bfloat16),
            "bo": lp["attn_out_b"].reshape(1, D),
            "ln2_g": lp["ln2_g"].reshape(1, D),
            "ln2_b": lp["ln2_b"].reshape(1, D),
            "w1": lp["fc1_w"].astype(jnp.bfloat16),
            "b1": lp["fc1_b"].reshape(1, Dm),
            "w2": lp["fc2_w"].astype(jnp.bfloat16),
            "b2": lp["fc2_b"].reshape(1, D),
        })
    return prep


# --------------------------- TextEncoder forward ------------------------------

def text_encoder_forward(prep, prompts, tokenized_prompts, *, n_heads):
    B, S, D = prompts.shape
    Dh = D // n_heads
    scale = 1.0 / np.sqrt(Dh)

    # x = prompts + positional_embedding; residual stream kept bf16 between
    # kernels (all accumulation / LN stats stay f32 inside the kernels).
    x = (prompts + prep["pos_emb"][None]).astype(jnp.bfloat16)

    for lp in prep["layers"]:
        attn = attn_block(x, lp["ln1_g"], lp["ln1_b"], lp["w_qkv"], lp["b_qkv"],
                          n_heads=n_heads, scale=scale)            # (B,S,D) bf16
        x = proj_mlp_block(attn.reshape(B * S, D), x.reshape(B * S, D),
                           lp["wo"], lp["bo"], lp["ln2_g"], lp["ln2_b"],
                           lp["w1"], lp["b1"], lp["w2"], lp["b2"]
                           ).reshape(B, S, D)                      # (B,S,D) bf16

    # EOT gather + ln_final + text_projection: tiny (M = B rows) — a Pallas
    # kernel here costs more than the matmul, so it stays in plain XLA.
    eot = jnp.argmax(tokenized_prompts, axis=-1)
    pooled = x.astype(jnp.float32)[jnp.arange(B), eot]             # (B, D)
    pooled = _ln(pooled, prep["lnf_g"], prep["lnf_b"])
    return pooled @ prep["text_proj"]                              # (B, E)


# --------------------------- pure-JAX reference --------------------------------

def reference_forward(params, prompts, tokenized_prompts, *, n_heads):
    B, S, D = prompts.shape
    Dh = D // n_heads
    scale = 1.0 / np.sqrt(Dh)
    mask = jnp.where(jnp.tril(jnp.ones((S, S), dtype=bool)),
                     0.0, -1e9).astype(jnp.float32)

    x = prompts + params["pos_emb"][None]
    for lp in params["layers"]:
        h = _ln(x, lp["ln1_g"], lp["ln1_b"])
        qkv = h @ lp["attn_in_w"] + lp["attn_in_b"]
        qkv = qkv.reshape(B, S, 3, n_heads, Dh)
        q = qkv[:, :, 0].transpose(0, 2, 1, 3)
        k = qkv[:, :, 1].transpose(0, 2, 1, 3)
        v = qkv[:, :, 2].transpose(0, 2, 1, 3)
        s = jnp.einsum("bhqd,bhkd->bhqk", q, k) * scale + mask
        p = jax.nn.softmax(s, axis=-1)
        a = jnp.einsum("bhqk,bhkd->bhqd", p, v)
        a = a.transpose(0, 2, 1, 3).reshape(B, S, D)
        x = x + (a @ lp["attn_out_w"] + lp["attn_out_b"])
        h = _ln(x, lp["ln2_g"], lp["ln2_b"])
        h = h @ lp["fc1_w"] + lp["fc1_b"]
        h = h * jax.nn.sigmoid(1.702 * h)
        x = x + (h @ lp["fc2_w"] + lp["fc2_b"])
    x = _ln(x, params["lnf_g"], params["lnf_b"])
    eot = jnp.argmax(tokenized_prompts, axis=-1)
    return x[jnp.arange(B), eot] @ params["text_proj"]


# --------------------------- parameter init ------------------------------------

def init_params(key, *, n_layers, d_model, d_mlp, seq_len, embed_dim):
    scale = 0.02
    keys = iter(jax.random.split(key, 12 * n_layers + 8))

    def nrm(shape):
        return scale * jax.random.normal(next(keys), shape, jnp.float32)

    params = {
        "pos_emb": nrm((seq_len, d_model)),
        "lnf_g": 1.0 + nrm((d_model,)),
        "lnf_b": nrm((d_model,)),
        "text_proj": nrm((d_model, embed_dim)),
        "layers": [],
    }
    for _ in range(n_layers):
        params["layers"].append({
            "ln1_g": 1.0 + nrm((d_model,)),
            "ln1_b": nrm((d_model,)),
            "attn_in_w": nrm((d_model, 3 * d_model)),
            "attn_in_b": nrm((3 * d_model,)),
            "attn_out_w": nrm((d_model, d_model)),
            "attn_out_b": nrm((d_model,)),
            "ln2_g": 1.0 + nrm((d_model,)),
            "ln2_b": nrm((d_model,)),
            "fc1_w": nrm((d_model, d_mlp)),
            "fc1_b": nrm((d_mlp,)),
            "fc2_w": nrm((d_mlp, d_model)),
            "fc2_b": nrm((d_model,)),
        })
    return params


if __name__ == "__main__":
    B, S, D, H, L, D_MLP, E = 4, 16, 64, 4, 2, 256, 32

    key = jax.random.PRNGKey(0)
    k_param, k_prompt, k_tok = jax.random.split(key, 3)

    params = init_params(k_param, n_layers=L, d_model=D, d_mlp=D_MLP,
                         seq_len=S, embed_dim=E)
    prompts = 0.02 * jax.random.normal(k_prompt, (B, S, D), jnp.float32)
    tokenized_prompts = jax.random.randint(k_tok, (B, S), 1, 1000, jnp.int32)

    # One-time weight prep (bf16 cast, packed QKV, bias/LN reshape) — hoisted
    # out of the jitted forward so it is not re-done per call.
    prep = prepare_params(params)

    fwd = jax.jit(functools.partial(text_encoder_forward, n_heads=H))
    out = jax.block_until_ready(fwd(prep, prompts, tokenized_prompts))

    ref = reference_forward(params, prompts, tokenized_prompts, n_heads=H)
    # Tolerance relaxed vs the pure-f32 reference: matmuls run bf16 and the
    # residual stream is stored bf16 between kernels.
    np.testing.assert_allclose(np.asarray(out), np.asarray(ref),
                               rtol=4e-2, atol=4e-3)
    print("KERNEL_OK")
</pallas_src>

<mosaic_0001>
module attributes {stable_mosaic.version = 11 : i64} {
  func.func @_proj_mlp_block_kernel(%arg0: i32, %arg1: memref<32x64xbf16, #tpu.memory_space<vmem>>, %arg2: memref<32x64xbf16, #tpu.memory_space<vmem>>, %arg3: memref<64x64xbf16, #tpu.memory_space<vmem>>, %arg4: memref<1x64xf32, #tpu.memory_space<vmem>>, %arg5: memref<1x64xf32, #tpu.memory_space<vmem>>, %arg6: memref<1x64xf32, #tpu.memory_space<vmem>>, %arg7: memref<64x256xbf16, #tpu.memory_space<vmem>>, %arg8: memref<1x256xf32, #tpu.memory_space<vmem>>, %arg9: memref<256x64xbf16, #tpu.memory_space<vmem>>, %arg10: memref<1x64xf32, #tpu.memory_space<vmem>>, %arg11: memref<32x64xbf16, #tpu.memory_space<vmem>>) attributes {dimension_semantics = [#tpu.dimension_semantics<parallel>], iteration_bounds = array<i64: 2>, scalar_prefetch = 0 : i64, scratch_operands = 0 : i64, tpu.core_type = #tpu.core_type<tc>, window_params = [{transform_indices = @transform_0, window_bounds = array<i64: 32, 64>}, {transform_indices = @transform_1, window_bounds = array<i64: 32, 64>}, {pipeline_mode = #tpu.pipeline_mode<synchronous>, transform_indices = @transform_2, window_bounds = array<i64: 64, 64>}, {pipeline_mode = #tpu.pipeline_mode<synchronous>, transform_indices = @transform_3, window_bounds = array<i64: 1, 64>}, {pipeline_mode = #tpu.pipeline_mode<synchronous>, transform_indices = @transform_4, window_bounds = array<i64: 1, 64>}, {pipeline_mode = #tpu.pipeline_mode<synchronous>, transform_indices = @transform_5, window_bounds = array<i64: 1, 64>}, {pipeline_mode = #tpu.pipeline_mode<synchronous>, transform_indices = @transform_6, window_bounds = array<i64: 64, 256>}, {pipeline_mode = #tpu.pipeline_mode<synchronous>, transform_indices = @transform_7, window_bounds = array<i64: 1, 256>}, {pipeline_mode = #tpu.pipeline_mode<synchronous>, transform_indices = @transform_8, window_bounds = array<i64: 256, 64>}, {pipeline_mode = #tpu.pipeline_mode<synchronous>, transform_indices = @transform_9, window_bounds = array<i64: 1, 64>}, {transform_indices = @transform_10, window_bounds = array<i64: 32, 64>}]} {
    %c0 = arith.constant 0 : index
    %c0_0 = arith.constant 0 : index
    %0 = vector.load %arg2[%c0, %c0_0] : memref<32x64xbf16, #tpu.memory_space<vmem>>, vector<32x64xbf16>
    %1 = arith.extf %0 : vector<32x64xbf16> to vector<32x64xf32>
    %c0_1 = arith.constant 0 : index
    %c0_2 = arith.constant 0 : index
    %2 = vector.load %arg1[%c0_1, %c0_2] : memref<32x64xbf16, #tpu.memory_space<vmem>>, vector<32x64xbf16>
    %c0_3 = arith.constant 0 : index
    %c0_4 = arith.constant 0 : index
    %3 = vector.load %arg3[%c0_3, %c0_4] : memref<64x64xbf16, #tpu.memory_space<vmem>>, vector<64x64xbf16>
    %cst = arith.constant dense<0.000000e+00> : vector<32x64xf32>
    %4 = tpu.matmul %2, %3, %cst {dimension_numbers = #tpu.dot_dimension_numbers<[1], [0], [0], [1], [0, 0, 1, 1], [], []>} : vector<32x64xbf16>, vector<64x64xbf16>, vector<32x64xf32> -> vector<32x64xf32>
    %c0_5 = arith.constant 0 : index
    %c0_6 = arith.constant 0 : index
    %5 = vector.load %arg4[%c0_5, %c0_6] : memref<1x64xf32, #tpu.memory_space<vmem>>, vector<1x64xf32>
    %6 = vector.broadcast %5 : vector<1x64xf32> to vector<32x64xf32>
    %7 = arith.addf %4, %6 : vector<32x64xf32>
    %8 = arith.addf %7, %1 : vector<32x64xf32>
    %c0_7 = arith.constant 0 : index
    %c0_8 = arith.constant 0 : index
    %9 = vector.load %arg5[%c0_7, %c0_8] : memref<1x64xf32, #tpu.memory_space<vmem>>, vector<1x64xf32>
    %c0_9 = arith.constant 0 : index
    %c0_10 = arith.constant 0 : index
    %10 = vector.load %arg6[%c0_9, %c0_10] : memref<1x64xf32, #tpu.memory_space<vmem>>, vector<1x64xf32>
    %cst_11 = arith.constant dense<0.000000e+00> : vector<32xf32>
    %11 = vector.multi_reduction <add>, %8, %cst_11 [1] : vector<32x64xf32> to vector<32xf32>
    %12 = vector.shape_cast %11 : vector<32xf32> to vector<32x1xf32>
    %cst_12 = arith.constant 6.400000e+01 : f32
    %13 = vector.broadcast %cst_12 : f32 to vector<32x1xf32>
    %14 = arith.divf %12, %13 : vector<32x1xf32>
    %15 = vector.broadcast %14 : vector<32x1xf32> to vector<32x64xf32>
    %16 = arith.subf %8, %15 : vector<32x64xf32>
    %17 = arith.mulf %16, %16 : vector<32x64xf32>
    %cst_13 = arith.constant dense<0.000000e+00> : vector<32xf32>
    %18 = vector.multi_reduction <add>, %17, %cst_13 [1] : vector<32x64xf32> to vector<32xf32>
    %19 = vector.shape_cast %18 : vector<32xf32> to vector<32x1xf32>
    %cst_14 = arith.constant 6.400000e+01 : f32
    %20 = vector.broadcast %cst_14 : f32 to vector<32x1xf32>
    %21 = arith.divf %19, %20 : vector<32x1xf32>
    %22 = vector.broadcast %14 : vector<32x1xf32> to vector<32x64xf32>
    %23 = arith.subf %8, %22 : vector<32x64xf32>
    %cst_15 = arith.constant 9.99999974E-6 : f32
    %24 = vector.broadcast %cst_15 : f32 to vector<32x1xf32>
    %25 = arith.addf %21, %24 : vector<32x1xf32>
    %26 = math.rsqrt %25 : vector<32x1xf32>
    %27 = vector.broadcast %26 : vector<32x1xf32> to vector<32x64xf32>
    %28 = arith.mulf %23, %27 : vector<32x64xf32>
    %29 = vector.broadcast %9 : vector<1x64xf32> to vector<32x64xf32>
    %30 = arith.mulf %28, %29 : vector<32x64xf32>
    %31 = vector.broadcast %10 : vector<1x64xf32> to vector<32x64xf32>
    %32 = arith.addf %30, %31 : vector<32x64xf32>
    %33 = arith.truncf %32 : vector<32x64xf32> to vector<32x64xbf16>
    %c0_16 = arith.constant 0 : index
    %c0_17 = arith.constant 0 : index
    %34 = vector.load %arg7[%c0_16, %c0_17] : memref<64x256xbf16, #tpu.memory_space<vmem>>, vector<64x256xbf16>
    %cst_18 = arith.constant dense<0.000000e+00> : vector<32x256xf32>
    %35 = tpu.matmul %33, %34, %cst_18 {dimension_numbers = #tpu.dot_dimension_numbers<[1], [0], [0], [1], [0, 0, 1, 1], [], []>} : vector<32x64xbf16>, vector<64x256xbf16>, vector<32x256xf32> -> vector<32x256xf32>
    %c0_19 = arith.constant 0 : index
    %c0_20 = arith.constant 0 : index
    %36 = vector.load %arg8[%c0_19, %c0_20] : memref<1x256xf32, #tpu.memory_space<vmem>>, vector<1x256xf32>
    %37 = vector.broadcast %36 : vector<1x256xf32> to vector<32x256xf32>
    %38 = arith.addf %35, %37 : vector<32x256xf32>
    %cst_21 = arith.constant -1.702000e+00 : f32
    %39 = vector.broadcast %cst_21 : f32 to vector<32x256xf32>
    %40 = arith.mulf %39, %38 : vector<32x256xf32>
    %41 = math.exp %40 : vector<32x256xf32>
    %cst_22 = arith.constant 1.000000e+00 : f32
    %42 = vector.broadcast %cst_22 : f32 to vector<32x256xf32>
    %43 = arith.addf %42, %41 : vector<32x256xf32>
    %cst_23 = arith.constant 1.000000e+00 : f32
    %44 = vector.broadcast %cst_23 : f32 to vector<32x256xf32>
    %45 = arith.divf %44, %43 : vector<32x256xf32>
    %46 = arith.mulf %38, %45 : vector<32x256xf32>
    %47 = arith.truncf %46 : vector<32x256xf32> to vector<32x256xbf16>
    %c0_24 = arith.constant 0 : index
    %c0_25 = arith.constant 0 : index
    %48 = vector.load %arg9[%c0_24, %c0_25] : memref<256x64xbf16, #tpu.memory_space<vmem>>, vector<256x64xbf16>
    %cst_26 = arith.constant dense<0.000000e+00> : vector<32x64xf32>
    %49 = tpu.matmul %47, %48, %cst_26 {dimension_numbers = #tpu.dot_dimension_numbers<[1], [0], [0], [1], [0, 0, 1, 1], [], []>} : vector<32x256xbf16>, vector<256x64xbf16>, vector<32x64xf32> -> vector<32x64xf32>
    %c0_27 = arith.constant 0 : index
    %c0_28 = arith.constant 0 : index
    %50 = vector.load %arg10[%c0_27, %c0_28] : memref<1x64xf32, #tpu.memory_space<vmem>>, vector<1x64xf32>
    %51 = vector.broadcast %50 : vector<1x64xf32> to vector<32x64xf32>
    %52 = arith.addf %49, %51 : vector<32x64xf32>
    %53 = arith.addf %8, %52 : vector<32x64xf32>
    %54 = arith.truncf %53 : vector<32x64xf32> to vector<32x64xbf16>
    %c0_29 = arith.constant 0 : index
    %c0_30 = arith.constant 0 : index
    %55 = vector.load %arg11[%c0_29, %c0_30] : memref<32x64xbf16, #tpu.memory_space<vmem>>, vector<32x64xbf16>
    tpu.vector_store %arg11[%c0_29, %c0_30], %54 {strides = array<i32>} : memref<32x64xbf16, #tpu.memory_space<vmem>>, vector<32x64xbf16>,
    return
  }
  func.func @transform_0(%arg0: i32) -> (i32, i32) {
    %c0_i32 = arith.constant 0 : i32
    %c0_i32_0 = arith.constant 0 : i32
    return %arg0, %c0_i32 : i32, i32
  }
  func.func @transform_1(%arg0: i32) -> (i32, i32) {
    %c0_i32 = arith.constant 0 : i32
    %c0_i32_0 = arith.constant 0 : i32
    return %arg0, %c0_i32 : i32, i32
  }
  func.func @transform_2(%arg0: i32) -> (i32, i32) {
    %c0_i32 = arith.constant 0 : i32
    %c0_i32_0 = arith.constant 0 : i32
    %c0_i32_1 = arith.constant 0 : i32
    return %c0_i32, %c0_i32_0 : i32, i32
  }
  func.func @transform_3(%arg0: i32) -> (i32, i32) {
    %c0_i32 = arith.constant 0 : i32
    %c0_i32_0 = arith.constant 0 : i32
    %c0_i32_1 = arith.constant 0 : i32
    return %c0_i32, %c0_i32_0 : i32, i32
  }
  func.func @transform_4(%arg0: i32) -> (i32, i32) {
    %c0_i32 = arith.constant 0 : i32
    %c0_i32_0 = arith.constant 0 : i32
    %c0_i32_1 = arith.constant 0 : i32
    return %c0_i32, %c0_i32_0 : i32, i32
  }
  func.func @transform_5(%arg0: i32) -> (i32, i32) {
    %c0_i32 = arith.constant 0 : i32
    %c0_i32_0 = arith.constant 0 : i32
    %c0_i32_1 = arith.constant 0 : i32
    return %c0_i32, %c0_i32_0 : i32, i32
  }
  func.func @transform_6(%arg0: i32) -> (i32, i32) {
    %c0_i32 = arith.constant 0 : i32
    %c0_i32_0 = arith.constant 0 : i32
    %c0_i32_1 = arith.constant 0 : i32
    return %c0_i32, %c0_i32_0 : i32, i32
  }
  func.func @transform_7(%arg0: i32) -> (i32, i32) {
    %c0_i32 = arith.constant 0 : i32
    %c0_i32_0 = arith.constant 0 : i32
    %c0_i32_1 = arith.constant 0 : i32
    return %c0_i32, %c0_i32_0 : i32, i32
  }
  func.func @transform_8(%arg0: i32) -> (i32, i32) {
    %c0_i32 = arith.constant 0 : i32
    %c0_i32_0 = arith.constant 0 : i32
    %c0_i32_1 = arith.constant 0 : i32
    return %c0_i32, %c0_i32_0 : i32, i32
  }
  func.func @transform_9(%arg0: i32) -> (i32, i32) {
    %c0_i32 = arith.constant 0 : i32
    %c0_i32_0 = arith.constant 0 : i32
    %c0_i32_1 = arith.constant 0 : i32
    return %c0_i32, %c0_i32_0 : i32, i32
  }
  func.func @transform_10(%arg0: i32) -> (i32, i32) {
    %c0_i32 = arith.constant 0 : i32
    %c0_i32_0 = arith.constant 0 : i32
    return %arg0, %c0_i32 : i32, i32
  }
}

module attributes {stable_mosaic.version = 11 : i64} {
  func.func @_attn_block_kernel(%arg0: i32, %arg1: memref<2x16x64xbf16, #tpu.memory_space<vmem>>, %arg2: memref<1x64xf32, #tpu.memory_space<vmem>>, %arg3: memref<1x64xf32, #tpu.memory_space<vmem>>, %arg4: memref<64x192xbf16, #tpu.memory_space<vmem>>, %arg5: memref<1x192xf32, #tpu.memory_space<vmem>>, %arg6: memref<2x16x64xbf16, #tpu.memory_space<vmem>>, %arg7: memref<2x16x192xbf16, #tpu.memory_space<vmem>>, %arg8: memref<2x16x64xf32, #tpu.memory_space<vmem>>) attributes {dimension_semantics = [#tpu.dimension_semantics<parallel>], iteration_bounds = array<i64: 2>, scalar_prefetch = 0 : i64, scratch_operands = 2 : i64, tpu.core_type = #tpu.core_type<tc>, window_params = [{transform_indices = @transform_0, window_bounds = array<i64: 2, 16, 64>}, {pipeline_mode = #tpu.pipeline_mode<synchronous>, transform_indices = @transform_1, window_bounds = array<i64: 1, 64>}, {pipeline_mode = #tpu.pipeline_mode<synchronous>, transform_indices = @transform_2, window_bounds = array<i64: 1, 64>}, {pipeline_mode = #tpu.pipeline_mode<synchronous>, transform_indices = @transform_3, window_bounds = array<i64: 64, 192>}, {pipeline_mode = #tpu.pipeline_mode<synchronous>, transform_indices = @transform_4, window_bounds = array<i64: 1, 192>}, {transform_indices = @transform_5, window_bounds = array<i64: 2, 16, 64>}]} {
    %0 = tpu.iota {dimensions = array<i32: 0>} : vector<16x16xi32>
    %1 = tpu.iota {dimensions = array<i32: 1>} : vector<16x16xi32>
    %2 = arith.cmpi sge, %0, %1 : vector<16x16xi32>
    %cst = arith.constant 0.000000e+00 : f32
    %cst_0 = arith.constant -1.000000e+09 : f32
    %3 = vector.broadcast %cst : f32 to vector<16x16xf32>
    %4 = vector.broadcast %cst_0 : f32 to vector<16x16xf32>
    %5 = arith.select %2, %3, %4 : vector<16x16xi1>, vector<16x16xf32>
    %c0 = arith.constant 0 : index
    %c0_1 = arith.constant 0 : index
    %6 = vector.load %arg2[%c0, %c0_1] : memref<1x64xf32, #tpu.memory_space<vmem>>, vector<1x64xf32>
    %c0_2 = arith.constant 0 : index
    %c0_3 = arith.constant 0 : index
    %7 = vector.load %arg3[%c0_2, %c0_3] : memref<1x64xf32, #tpu.memory_space<vmem>>, vector<1x64xf32>
    %c0_4 = arith.constant 0 : index
    %c0_5 = arith.constant 0 : index
    %8 = vector.load %arg4[%c0_4, %c0_5] : memref<64x192xbf16, #tpu.memory_space<vmem>>, vector<64x192xbf16>
    %c0_6 = arith.constant 0 : index
    %c0_7 = arith.constant 0 : index
    %9 = vector.load %arg5[%c0_6, %c0_7] : memref<1x192xf32, #tpu.memory_space<vmem>>, vector<1x192xf32>
    %c0_8 = arith.constant 0 : index
    %c0_9 = arith.constant 0 : index
    %c0_10 = arith.constant 0 : index
    %10 = vector.load %arg1[%c0_8, %c0_9, %c0_10] : memref<2x16x64xbf16, #tpu.memory_space<vmem>>, vector<1x16x64xbf16>
    %11 = vector.shape_cast %10 : vector<1x16x64xbf16> to vector<16x64xbf16>
    %12 = arith.extf %11 : vector<16x64xbf16> to vector<16x64xf32>
    %cst_11 = arith.constant dense<0.000000e+00> : vector<16xf32>
    %13 = vector.multi_reduction <add>, %12, %cst_11 [1] : vector<16x64xf32> to vector<16xf32>
    %14 = vector.shape_cast %13 : vector<16xf32> to vector<16x1xf32>
    %cst_12 = arith.constant 6.400000e+01 : f32
    %15 = vector.broadcast %cst_12 : f32 to vector<16x1xf32>
    %16 = arith.divf %14, %15 : vector<16x1xf32>
    %17 = vector.broadcast %16 : vector<16x1xf32> to vector<16x64xf32>
    %18 = arith.subf %12, %17 : vector<16x64xf32>
    %19 = arith.mulf %18, %18 : vector<16x64xf32>
    %cst_13 = arith.constant dense<0.000000e+00> : vector<16xf32>
    %20 = vector.multi_reduction <add>, %19, %cst_13 [1] : vector<16x64xf32> to vector<16xf32>
    %21 = vector.shape_cast %20 : vector<16xf32> to vector<16x1xf32>
    %cst_14 = arith.constant 6.400000e+01 : f32
    %22 = vector.broadcast %cst_14 : f32 to vector<16x1xf32>
    %23 = arith.divf %21, %22 : vector<16x1xf32>
    %24 = vector.broadcast %16 : vector<16x1xf32> to vector<16x64xf32>
    %25 = arith.subf %12, %24 : vector<16x64xf32>
    %cst_15 = arith.constant 9.99999974E-6 : f32
    %26 = vector.broadcast %cst_15 : f32 to vector<16x1xf32>
    %27 = arith.addf %23, %26 : vector<16x1xf32>
    %28 = math.rsqrt %27 : vector<16x1xf32>
    %29 = vector.broadcast %28 : vector<16x1xf32> to vector<16x64xf32>
    %30 = arith.mulf %25, %29 : vector<16x64xf32>
    %31 = vector.broadcast %6 : vector<1x64xf32> to vector<16x64xf32>
    %32 = arith.mulf %30, %31 : vector<16x64xf32>
    %33 = vector.broadcast %7 : vector<1x64xf32> to vector<16x64xf32>
    %34 = arith.addf %32, %33 : vector<16x64xf32>
    %35 = arith.truncf %34 : vector<16x64xf32> to vector<16x64xbf16>
    %cst_16 = arith.constant dense<0.000000e+00> : vector<16x192xf32>
    %36 = tpu.matmul %35, %8, %cst_16 {dimension_numbers = #tpu.dot_dimension_numbers<[1], [0], [0], [1], [0, 0, 1, 1], [], []>} : vector<16x64xbf16>, vector<64x192xbf16>, vector<16x192xf32> -> vector<16x192xf32>
    %37 = vector.broadcast %9 : vector<1x192xf32> to vector<16x192xf32>
    %38 = arith.addf %36, %37 : vector<16x192xf32>
    %39 = arith.truncf %38 : vector<16x192xf32> to vector<16x192xbf16>
    %c0_17 = arith.constant 0 : index
    %c0_18 = arith.constant 0 : index
    %c0_19 = arith.constant 0 : index
    %40 = vector.load %arg7[%c0_17, %c0_18, %c0_19] : memref<2x16x192xbf16, #tpu.memory_space<vmem>>, vector<1x16x192xbf16>
    %41 = vector.shape_cast %40 : vector<1x16x192xbf16> to vector<16x192xbf16>
    %42 = vector.shape_cast %39 : vector<16x192xbf16> to vector<1x16x192xbf16>
    tpu.vector_store %arg7[%c0_17, %c0_18, %c0_19], %42 {strides = array<i32>} : memref<2x16x192xbf16, #tpu.memory_space<vmem>>, vector<1x16x192xbf16>,
    %c1 = arith.constant 1 : index
    %c0_20 = arith.constant 0 : index
    %c0_21 = arith.constant 0 : index
    %43 = vector.load %arg1[%c1, %c0_20, %c0_21] : memref<2x16x64xbf16, #tpu.memory_space<vmem>>, vector<1x16x64xbf16>
    %44 = vector.shape_cast %43 : vector<1x16x64xbf16> to vector<16x64xbf16>
    %45 = arith.extf %44 : vector<16x64xbf16> to vector<16x64xf32>
    %cst_22 = arith.constant dense<0.000000e+00> : vector<16xf32>
    %46 = vector.multi_reduction <add>, %45, %cst_22 [1] : vector<16x64xf32> to vector<16xf32>
    %47 = vector.shape_cast %46 : vector<16xf32> to vector<16x1xf32>
    %cst_23 = arith.constant 6.400000e+01 : f32
    %48 = vector.broadcast %cst_23 : f32 to vector<16x1xf32>
    %49 = arith.divf %47, %48 : vector<16x1xf32>
    %50 = vector.broadcast %49 : vector<16x1xf32> to vector<16x64xf32>
    %51 = arith.subf %45, %50 : vector<16x64xf32>
    %52 = arith.mulf %51, %51 : vector<16x64xf32>
    %cst_24 = arith.constant dense<0.000000e+00> : vector<16xf32>
    %53 = vector.multi_reduction <add>, %52, %cst_24 [1] : vector<16x64xf32> to vector<16xf32>
    %54 = vector.shape_cast %53 : vector<16xf32> to vector<16x1xf32>
    %cst_25 = arith.constant 6.400000e+01 : f32
    %55 = vector.broadcast %cst_25 : f32 to vector<16x1xf32>
    %56 = arith.divf %54, %55 : vector<16x1xf32>
    %57 = vector.broadcast %49 : vector<16x1xf32> to vector<16x64xf32>
    %58 = arith.subf %45, %57 : vector<16x64xf32>
    %cst_26 = arith.constant 9.99999974E-6 : f32
    %59 = vector.broadcast %cst_26 : f32 to vector<16x1xf32>
    %60 = arith.addf %56, %59 : vector<16x1xf32>
    %61 = math.rsqrt %60 : vector<16x1xf32>
    %62 = vector.broadcast %61 : vector<16x1xf32> to vector<16x64xf32>
    %63 = arith.mulf %58, %62 : vector<16x64xf32>
    %64 = vector.broadcast %6 : vector<1x64xf32> to vector<16x64xf32>
    %65 = arith.mulf %63, %64 : vector<16x64xf32>
    %66 = vector.broadcast %7 : vector<1x64xf32> to vector<16x64xf32>
    %67 = arith.addf %65, %66 : vector<16x64xf32>
    %68 = arith.truncf %67 : vector<16x64xf32> to vector<16x64xbf16>
    %cst_27 = arith.constant dense<0.000000e+00> : vector<16x192xf32>
    %69 = tpu.matmul %68, %8, %cst_27 {dimension_numbers = #tpu.dot_dimension_numbers<[1], [0], [0], [1], [0, 0, 1, 1], [], []>} : vector<16x64xbf16>, vector<64x192xbf16>, vector<16x192xf32> -> vector<16x192xf32>
    %70 = vector.broadcast %9 : vector<1x192xf32> to vector<16x192xf32>
    %71 = arith.addf %69, %70 : vector<16x192xf32>
    %72 = arith.truncf %71 : vector<16x192xf32> to vector<16x192xbf16>
    %c1_28 = arith.constant 1 : index
    %c0_29 = arith.constant 0 : index
    %c0_30 = arith.constant 0 : index
    %73 = vector.load %arg7[%c1_28, %c0_29, %c0_30] : memref<2x16x192xbf16, #tpu.memory_space<vmem>>, vector<1x16x192xbf16>
    %74 = vector.shape_cast %73 : vector<1x16x192xbf16> to vector<16x192xbf16>
    %75 = vector.shape_cast %72 : vector<16x192xbf16> to vector<1x16x192xbf16>
    tpu.vector_store %arg7[%c1_28, %c0_29, %c0_30], %75 {strides = array<i32>} : memref<2x16x192xbf16, #tpu.memory_space<vmem>>, vector<1x16x192xbf16>,
    %c0_31 = arith.constant 0 : index
    %c0_32 = arith.constant 0 : index
    %c0_33 = arith.constant 0 : index
    %76 = vector.load %arg7[%c0_31, %c0_32, %c0_33] : memref<2x16x192xbf16, #tpu.memory_space<vmem>>, vector<2x16x16xbf16>
    %c0_34 = arith.constant 0 : index
    %c0_35 = arith.constant 0 : index
    %c64 = arith.constant 64 : index
    %77 = vector.load %arg7[%c0_34, %c0_35, %c64] : memref<2x16x192xbf16, #tpu.memory_space<vmem>>, vector<2x16x16xbf16>
    %c0_36 = arith.constant 0 : index
    %c0_37 = arith.constant 0 : index
    %c128 = arith.constant 128 : index
    %78 = vector.load %arg7[%c0_36, %c0_37, %c128] : memref<2x16x192xbf16, #tpu.memory_space<vmem>>, vector<2x16x16xbf16>
    "tpu.trace_start"() <{level = 10 : i32, message = "bqd,bkd->bqk"}> : () -> ()
    %cst_38 = arith.constant dense<0.000000e+00> : vector<2x16x16xf32>
    %79 = tpu.matmul %76, %77, %cst_38 {dimension_numbers = #tpu.dot_dimension_numbers<[2], [2], [1], [1], [0, 0, 0, 1, 1, 1], [0], [0]>} : vector<2x16x16xbf16>, vector<2x16x16xbf16>, vector<2x16x16xf32> -> vector<2x16x16xf32>
    "tpu.trace_stop"() : () -> ()
    %cst_39 = arith.constant 2.500000e-01 : f32
    %80 = vector.broadcast %cst_39 : f32 to vector<2x16x16xf32>
    %81 = arith.mulf %79, %80 : vector<2x16x16xf32>
    %82 = vector.shape_cast %5 : vector<16x16xf32> to vector<1x16x16xf32>
    %83 = vector.broadcast %82 : vector<1x16x16xf32> to vector<2x16x16xf32>
    %84 = arith.addf %81, %83 : vector<2x16x16xf32>
    %cst_40 = arith.constant dense<0xFF800000> : vector<2x16xf32>
    %85 = vector.multi_reduction <maximumf>, %84, %cst_40 [2] : vector<2x16x16xf32> to vector<2x16xf32>
    %86 = vector.shape_cast %85 : vector<2x16xf32> to vector<2x16x1xf32>
    %87 = vector.broadcast %86 : vector<2x16x1xf32> to vector<2x16x16xf32>
    %88 = arith.subf %84, %87 : vector<2x16x16xf32>
    %89 = math.exp %88 : vector<2x16x16xf32>
    %cst_41 = arith.constant dense<0.000000e+00> : vector<2x16xf32>
    %90 = vector.multi_reduction <add>, %89, %cst_41 [2] : vector<2x16x16xf32> to vector<2x16xf32>
    %91 = vector.shape_cast %90 : vector<2x16xf32> to vector<2x16x1xf32>
    %92 = tpu.reciprocal %91 {approx = true} : vector<2x16x1xf32> -> vector<2x16x1xf32>
    %93 = vector.broadcast %92 : vector<2x16x1xf32> to vector<2x16x16xf32>
    %94 = arith.mulf %89, %93 : vector<2x16x16xf32>
    %95 = arith.truncf %94 : vector<2x16x16xf32> to vector<2x16x16xbf16>
    "tpu.trace_start"() <{level = 10 : i32, message = "bqk,bkd->bqd"}> : () -> ()
    %cst_42 = arith.constant dense<0.000000e+00> : vector<2x16x16xf32>
    %96 = tpu.matmul %95, %78, %cst_42 {dimension_numbers = #tpu.dot_dimension_numbers<[2], [1], [1], [2], [0, 0, 0, 1, 1, 2], [0], [0]>} : vector<2x16x16xbf16>, vector<2x16x16xbf16>, vector<2x16x16xf32> -> vector<2x16x16xf32>
    "tpu.trace_stop"() : () -> ()
    %c0_43 = arith.constant 0 : index
    %c0_44 = arith.constant 0 : index
    %c0_45 = arith.constant 0 : index
    %97 = vector.load %arg8[%c0_43, %c0_44, %c0_45] : memref<2x16x64xf32, #tpu.memory_space<vmem>>, vector<2x16x16xf32>
    tpu.vector_store %arg8[%c0_43, %c0_44, %c0_45], %96 {strides = array<i32>} : memref<2x16x64xf32, #tpu.memory_space<vmem>>, vector<2x16x16xf32>,
    %c0_46 = arith.constant 0 : index
    %c0_47 = arith.constant 0 : index
    %c16 = arith.constant 16 : index
    %98 = vector.load %arg7[%c0_46, %c0_47, %c16] : memref<2x16x192xbf16, #tpu.memory_space<vmem>>, vector<2x16x16xbf16>
    %c0_48 = arith.constant 0 : index
    %c0_49 = arith.constant 0 : index
    %c80 = arith.constant 80 : index
    %99 = vector.load %arg7[%c0_48, %c0_49, %c80] : memref<2x16x192xbf16, #tpu.memory_space<vmem>>, vector<2x16x16xbf16>
    %c0_50 = arith.constant 0 : index
    %c0_51 = arith.constant 0 : index
    %c144 = arith.constant 144 : index
    %100 = vector.load %arg7[%c0_50, %c0_51, %c144] : memref<2x16x192xbf16, #tpu.memory_space<vmem>>, vector<2x16x16xbf16>
    "tpu.trace_start"() <{level = 10 : i32, message = "bqd,bkd->bqk"}> : () -> ()
    %cst_52 = arith.constant dense<0.000000e+00> : vector<2x16x16xf32>
    %101 = tpu.matmul %98, %99, %cst_52 {dimension_numbers = #tpu.dot_dimension_numbers<[2], [2], [1], [1], [0, 0, 0, 1, 1, 1], [0], [0]>} : vector<2x16x16xbf16>, vector<2x16x16xbf16>, vector<2x16x16xf32> -> vector<2x16x16xf32>
    "tpu.trace_stop"() : () -> ()
    %cst_53 = arith.constant 2.500000e-01 : f32
    %102 = vector.broadcast %cst_53 : f32 to vector<2x16x16xf32>
    %103 = arith.mulf %101, %102 : vector<2x16x16xf32>
    %104 = vector.shape_cast %5 : vector<16x16xf32> to vector<1x16x16xf32>
    %105 = vector.broadcast %104 : vector<1x16x16xf32> to vector<2x16x16xf32>
    %106 = arith.addf %103, %105 : vector<2x16x16xf32>
    %cst_54 = arith.constant dense<0xFF800000> : vector<2x16xf32>
    %107 = vector.multi_reduction <maximumf>, %106, %cst_54 [2] : vector<2x16x16xf32> to vector<2x16xf32>
    %108 = vector.shape_cast %107 : vector<2x16xf32> to vector<2x16x1xf32>
    %109 = vector.broadcast %108 : vector<2x16x1xf32> to vector<2x16x16xf32>
    %110 = arith.subf %106, %109 : vector<2x16x16xf32>
    %111 = math.exp %110 : vector<2x16x16xf32>
    %cst_55 = arith.constant dense<0.000000e+00> : vector<2x16xf32>
    %112 = vector.multi_reduction <add>, %111, %cst_55 [2] : vector<2x16x16xf32> to vector<2x16xf32>
    %113 = vector.shape_cast %112 : vector<2x16xf32> to vector<2x16x1xf32>
    %114 = tpu.reciprocal %113 {approx = true} : vector<2x16x1xf32> -> vector<2x16x1xf32>
    %115 = vector.broadcast %114 : vector<2x16x1xf32> to vector<2x16x16xf32>
    %116 = arith.mulf %111, %115 : vector<2x16x16xf32>
    %117 = arith.truncf %116 : vector<2x16x16xf32> to vector<2x16x16xbf16>
    "tpu.trace_start"() <{level = 10 : i32, message = "bqk,bkd->bqd"}> : () -> ()
    %cst_56 = arith.constant dense<0.000000e+00> : vector<2x16x16xf32>
    %118 = tpu.matmul %117, %100, %cst_56 {dimension_numbers = #tpu.dot_dimension_numbers<[2], [1], [1], [2], [0, 0, 0, 1, 1, 2], [0], [0]>} : vector<2x16x16xbf16>, vector<2x16x16xbf16>, vector<2x16x16xf32> -> vector<2x16x16xf32>
    "tpu.trace_stop"() : () -> ()
    %c0_57 = arith.constant 0 : index
    %c0_58 = arith.constant 0 : index
    %c16_59 = arith.constant 16 : index
    %119 = vector.load %arg8[%c0_57, %c0_58, %c16_59] : memref<2x16x64xf32, #tpu.memory_space<vmem>>, vector<2x16x16xf32>
    tpu.vector_store %arg8[%c0_57, %c0_58, %c16_59], %118 {strides = array<i32>} : memref<2x16x64xf32, #tpu.memory_space<vmem>>, vector<2x16x16xf32>,
    %c0_60 = arith.constant 0 : index
    %c0_61 = arith.constant 0 : index
    %c32 = arith.constant 32 : index
    %120 = vector.load %arg7[%c0_60, %c0_61, %c32] : memref<2x16x192xbf16, #tpu.memory_space<vmem>>, vector<2x16x16xbf16>
    %c0_62 = arith.constant 0 : index
    %c0_63 = arith.constant 0 : index
    %c96 = arith.constant 96 : index
    %121 = vector.load %arg7[%c0_62, %c0_63, %c96] : memref<2x16x192xbf16, #tpu.memory_space<vmem>>, vector<2x16x16xbf16>
    %c0_64 = arith.constant 0 : index
    %c0_65 = arith.constant 0 : index
    %c160 = arith.constant 160 : index
    %122 = vector.load %arg7[%c0_64, %c0_65, %c160] : memref<2x16x192xbf16, #tpu.memory_space<vmem>>, vector<2x16x16xbf16>
    "tpu.trace_start"() <{level = 10 : i32, message = "bqd,bkd->bqk"}> : () -> ()
    %cst_66 = arith.constant dense<0.000000e+00> : vector<2x16x16xf32>
    %123 = tpu.matmul %120, %121, %cst_66 {dimension_numbers = #tpu.dot_dimension_numbers<[2], [2], [1], [1], [0, 0, 0, 1, 1, 1], [0], [0]>} : vector<2x16x16xbf16>, vector<2x16x16xbf16>, vector<2x16x16xf32> -> vector<2x16x16xf32>
    "tpu.trace_stop"() : () -> ()
    %cst_67 = arith.constant 2.500000e-01 : f32
    %124 = vector.broadcast %cst_67 : f32 to vector<2x16x16xf32>
    %125 = arith.mulf %123, %124 : vector<2x16x16xf32>
    %126 = vector.shape_cast %5 : vector<16x16xf32> to vector<1x16x16xf32>
    %127 = vector.broadcast %126 : vector<1x16x16xf32> to vector<2x16x16xf32>
    %128 = arith.addf %125, %127 : vector<2x16x16xf32>
    %cst_68 = arith.constant dense<0xFF800000> : vector<2x16xf32>
    %129 = vector.multi_reduction <maximumf>, %128, %cst_68 [2] : vector<2x16x16xf32> to vector<2x16xf32>
    %130 = vector.shape_cast %129 : vector<2x16xf32> to vector<2x16x1xf32>
    %131 = vector.broadcast %130 : vector<2x16x1xf32> to vector<2x16x16xf32>
    %132 = arith.subf %128, %131 : vector<2x16x16xf32>
    %133 = math.exp %132 : vector<2x16x16xf32>
    %cst_69 = arith.constant dense<0.000000e+00> : vector<2x16xf32>
    %134 = vector.multi_reduction <add>, %133, %cst_69 [2] : vector<2x16x16xf32> to vector<2x16xf32>
    %135 = vector.shape_cast %134 : vector<2x16xf32> to vector<2x16x1xf32>
    %136 = tpu.reciprocal %135 {approx = true} : vector<2x16x1xf32> -> vector<2x16x1xf32>
    %137 = vector.broadcast %136 : vector<2x16x1xf32> to vector<2x16x16xf32>
    %138 = arith.mulf %133, %137 : vector<2x16x16xf32>
    %139 = arith.truncf %138 : vector<2x16x16xf32> to vector<2x16x16xbf16>
    "tpu.trace_start"() <{level = 10 : i32, message = "bqk,bkd->bqd"}> : () -> ()
    %cst_70 = arith.constant dense<0.000000e+00> : vector<2x16x16xf32>
    %140 = tpu.matmul %139, %122, %cst_70 {dimension_numbers = #tpu.dot_dimension_numbers<[2], [1], [1], [2], [0, 0, 0, 1, 1, 2], [0], [0]>} : vector<2x16x16xbf16>, vector<2x16x16xbf16>, vector<2x16x16xf32> -> vector<2x16x16xf32>
    "tpu.trace_stop"() : () -> ()
    %c0_71 = arith.constant 0 : index
    %c0_72 = arith.constant 0 : index
    %c32_73 = arith.constant 32 : index
    %141 = vector.load %arg8[%c0_71, %c0_72, %c32_73] : memref<2x16x64xf32, #tpu.memory_space<vmem>>, vector<2x16x16xf32>
    tpu.vector_store %arg8[%c0_71, %c0_72, %c32_73], %140 {strides = array<i32>} : memref<2x16x64xf32, #tpu.memory_space<vmem>>, vector<2x16x16xf32>,
    %c0_74 = arith.constant 0 : index
    %c0_75 = arith.constant 0 : index
    %c48 = arith.constant 48 : index
    %142 = vector.load %arg7[%c0_74, %c0_75, %c48] : memref<2x16x192xbf16, #tpu.memory_space<vmem>>, vector<2x16x16xbf16>
    %c0_76 = arith.constant 0 : index
    %c0_77 = arith.constant 0 : index
    %c112 = arith.constant 112 : index
    %143 = vector.load %arg7[%c0_76, %c0_77, %c112] : memref<2x16x192xbf16, #tpu.memory_space<vmem>>, vector<2x16x16xbf16>
    %c0_78 = arith.constant 0 : index
    %c0_79 = arith.constant 0 : index
    %c176 = arith.constant 176 : index
    %144 = vector.load %arg7[%c0_78, %c0_79, %c176] : memref<2x16x192xbf16, #tpu.memory_space<vmem>>, vector<2x16x16xbf16>
    "tpu.trace_start"() <{level = 10 : i32, message = "bqd,bkd->bqk"}> : () -> ()
    %cst_80 = arith.constant dense<0.000000e+00> : vector<2x16x16xf32>
    %145 = tpu.matmul %142, %143, %cst_80 {dimension_numbers = #tpu.dot_dimension_numbers<[2], [2], [1], [1], [0, 0, 0, 1, 1, 1], [0], [0]>} : vector<2x16x16xbf16>, vector<2x16x16xbf16>, vector<2x16x16xf32> -> vector<2x16x16xf32>
    "tpu.trace_stop"() : () -> ()
    %cst_81 = arith.constant 2.500000e-01 : f32
    %146 = vector.broadcast %cst_81 : f32 to vector<2x16x16xf32>
    %147 = arith.mulf %145, %146 : vector<2x16x16xf32>
    %148 = vector.shape_cast %5 : vector<16x16xf32> to vector<1x16x16xf32>
    %149 = vector.broadcast %148 : vector<1x16x16xf32> to vector<2x16x16xf32>
    %150 = arith.addf %147, %149 : vector<2x16x16xf32>
    %cst_82 = arith.constant dense<0xFF800000> : vector<2x16xf32>
    %151 = vector.multi_reduction <maximumf>, %150, %cst_82 [2] : vector<2x16x16xf32> to vector<2x16xf32>
    %152 = vector.shape_cast %151 : vector<2x16xf32> to vector<2x16x1xf32>
    %153 = vector.broadcast %152 : vector<2x16x1xf32> to vector<2x16x16xf32>
    %154 = arith.subf %150, %153 : vector<2x16x16xf32>
    %155 = math.exp %154 : vector<2x16x16xf32>
    %cst_83 = arith.constant dense<0.000000e+00> : vector<2x16xf32>
    %156 = vector.multi_reduction <add>, %155, %cst_83 [2] : vector<2x16x16xf32> to vector<2x16xf32>
    %157 = vector.shape_cast %156 : vector<2x16xf32> to vector<2x16x1xf32>
    %158 = tpu.reciprocal %157 {approx = true} : vector<2x16x1xf32> -> vector<2x16x1xf32>
    %159 = vector.broadcast %158 : vector<2x16x1xf32> to vector<2x16x16xf32>
    %160 = arith.mulf %155, %159 : vector<2x16x16xf32>
    %161 = arith.truncf %160 : vector<2x16x16xf32> to vector<2x16x16xbf16>
    "tpu.trace_start"() <{level = 10 : i32, message = "bqk,bkd->bqd"}> : () -> ()
    %cst_84 = arith.constant dense<0.000000e+00> : vector<2x16x16xf32>
    %162 = tpu.matmul %161, %144, %cst_84 {dimension_numbers = #tpu.dot_dimension_numbers<[2], [1], [1], [2], [0, 0, 0, 1, 1, 2], [0], [0]>} : vector<2x16x16xbf16>, vector<2x16x16xbf16>, vector<2x16x16xf32> -> vector<2x16x16xf32>
    "tpu.trace_stop"() : () -> ()
    %c0_85 = arith.constant 0 : index
    %c0_86 = arith.constant 0 : index
    %c48_87 = arith.constant 48 : index
    %163 = vector.load %arg8[%c0_85, %c0_86, %c48_87] : memref<2x16x64xf32, #tpu.memory_space<vmem>>, vector<2x16x16xf32>
    tpu.vector_store %arg8[%c0_85, %c0_86, %c48_87], %162 {strides = array<i32>} : memref<2x16x64xf32, #tpu.memory_space<vmem>>, vector<2x16x16xf32>,
    %c0_88 = arith.constant 0 : index
    %c0_89 = arith.constant 0 : index
    %c0_90 = arith.constant 0 : index
    %164 = vector.load %arg8[%c0_88, %c0_89, %c0_90] : memref<2x16x64xf32, #tpu.memory_space<vmem>>, vector<2x16x64xf32>
    %165 = arith.truncf %164 : vector<2x16x64xf32> to vector<2x16x64xbf16>
    %c0_91 = arith.constant 0 : index
    %c0_92 = arith.constant 0 : index
    %c0_93 = arith.constant 0 : index
    %166 = vector.load %arg6[%c0_91, %c0_92, %c0_93] : memref<2x16x64xbf16, #tpu.memory_space<vmem>>, vector<2x16x64xbf16>
    tpu.vector_store %arg6[%c0_91, %c0_92, %c0_93], %165 {strides = array<i32>} : memref<2x16x64xbf16, #tpu.memory_space<vmem>>, vector<2x16x64xbf16>,
    return
  }
  func.func @transform_0(%arg0: i32) -> (i32, i32, i32) {
    %c0_i32 = arith.constant 0 : i32
    %c0_i32_0 = arith.constant 0 : i32
    %c0_i32_1 = arith.constant 0 : i32
    return %arg0, %c0_i32, %c0_i32_0 : i32, i32, i32
  }
  func.func @transform_1(%arg0: i32) -> (i32, i32) {
    %c0_i32 = arith.constant 0 : i32
    %c0_i32_0 = arith.constant 0 : i32
    %c0_i32_1 = arith.constant 0 : i32
    return %c0_i32, %c0_i32_0 : i32, i32
  }
  func.func @transform_2(%arg0: i32) -> (i32, i32) {
    %c0_i32 = arith.constant 0 : i32
    %c0_i32_0 = arith.constant 0 : i32
    %c0_i32_1 = arith.constant 0 : i32
    return %c0_i32, %c0_i32_0 : i32, i32
  }
  func.func @transform_3(%arg0: i32) -> (i32, i32) {
    %c0_i32 = arith.constant 0 : i32
    %c0_i32_0 = arith.constant 0 : i32
    %c0_i32_1 = arith.constant 0 : i32
    return %c0_i32, %c0_i32_0 : i32, i32
  }
  func.func @transform_4(%arg0: i32) -> (i32, i32) {
    %c0_i32 = arith.constant 0 : i32
    %c0_i32_0 = arith.constant 0 : i32
    %c0_i32_1 = arith.constant 0 : i32
    return %c0_i32, %c0_i32_0 : i32, i32
  }
  func.func @transform_5(%arg0: i32) -> (i32, i32, i32) {
    %c0_i32 = arith.constant 0 : i32
    %c0_i32_0 = arith.constant 0 : i32
    %c0_i32_1 = arith.constant 0 : i32
    return %arg0, %c0_i32, %c0_i32_0 : i32, i32, i32
  }
}

</mosaic_0001>

<llo_original>
// kernel: text_encoder_forward.5
$region0: #{text_encoder_forward.5}
  #allocation0 [shape = 'u32[]', space=smem, size = 0x4, offset = 0x4, fixed_abs, tag = 'smem constant byte address 0x4 - core index']
  #allocation1 [shape = 'u32[144,128]{1,0:T(1,128)}', space=vmem, size = 0x12000, scoped, tag = 'internal scratch']
  %s0 = inlined_call_operand.vmem [shape: bf16[64,64], index: 0, kind: input, shape index: {}]
  %s1 = inlined_call_operand.vmem [shape: bf16[64,64], index: 1, kind: input, shape index: {}]
  %s2 = inlined_call_operand.vmem [shape: bf16[64,64], index: 2, kind: input, shape index: {}]
  %s3 = inlined_call_operand.vmem [shape: f32[1,64], index: 3, kind: input, shape index: {}]
  %s4 = inlined_call_operand.vmem [shape: f32[1,64], index: 4, kind: input, shape index: {}]
  %s5 = inlined_call_operand.vmem [shape: f32[1,64], index: 5, kind: input, shape index: {}]
  %s6 = inlined_call_operand.vmem [shape: bf16[64,256], index: 6, kind: input, shape index: {}]
  %s7 = inlined_call_operand.vmem [shape: f32[1,256], index: 7, kind: input, shape index: {}]
  %s8 = inlined_call_operand.vmem [shape: bf16[256,64], index: 8, kind: input, shape index: {}]
  %s9 = inlined_call_operand.vmem [shape: f32[1,64], index: 9, kind: input, shape index: {}]
  %s10 = inlined_call_operand.vmem [shape: bf16[64,64], index: 10, kind: output, shape index: {}]
  %s11 = sld [smem:[#allocation0]]
  $region73: #{text_encoder_forward.5} parent=0
    _
  %s13 = ssub.s32 1, %s11
  %s14 = scalar_select 0, %s13, %s11
  loop: start=0, step=1, limit=4
  $region2: #{text_encoder_forward.5} parent=0 // loop_pre_header
    _
  $region3: #{text_encoder_forward.5} parent=0 // loop_header
    %s16 = sphi 0, %s20
    %p17 = scmp.ge.s32.totalorder %s16, 4
    %s26 = sphi 0, %s28
    %s29 = sphi 0, %s26
    %s30 = sphi 0, %s29
    %s46 = sphi 0, %s30
    %s52 = sphi 0, %s54
    %s55 = sphi 0, %s52
    %s56 = sphi 0, %s55
    %s72 = sphi 0, %s56
    %s76 = sphi 0, %s76
    %s78 = sphi 0, %s76
    %s79 = sphi 0, %s78
    %s93 = sphi 0, %s79
    %s97 = sphi 0, %s97
    %s99 = sphi 0, %s97
    %s100 = sphi 0, %s99
    %s114 = sphi 0, %s100
    %s118 = sphi 0, %s118
    %s120 = sphi 0, %s118
    %s121 = sphi 0, %s120
    %s135 = sphi 0, %s121
    %s139 = sphi 0, %s139
    %s141 = sphi 0, %s139
    %s142 = sphi 0, %s141
    %s156 = sphi 0, %s142
    %s160 = sphi 0, %s160
    %s162 = sphi 0, %s160
    %s163 = sphi 0, %s162
    %s177 = sphi 0, %s163
    %s181 = sphi 0, %s181
    %s183 = sphi 0, %s181
    %s184 = sphi 0, %s183
    %s198 = sphi 0, %s184
    %s202 = sphi 0, %s202
    %s204 = sphi 0, %s202
    %s205 = sphi 0, %s204
    %s219 = sphi 0, %s205
    %s223 = sphi 0, %s223
    %s225 = sphi 0, %s223
    %s226 = sphi 0, %s225
    %s240 = sphi 0, %s226
    %s246 = sphi 0, %s248
    %s249 = sphi 0, %s246
    %s250 = sphi 0, %s249
    %s266 = sphi 0, %s250
  $region4: #{text_encoder_forward.5} parent=0 // loop_header_branch
    %19 = sbr.rel (%p17) target = $region8
  $region5: #{text_encoder_forward.5} parent=0 // loop_body
    %s21 = ssub.s32 %s16, 1
    %s22 = ssub.s32 %s16, 2
    %s23 = sadd.s32 %s16, 1
    %s24 = ssub.s32 %s16, %s23
    %p25 = scmp.eq.s32.totalorder %s24, 0
    %s27 = sadd.s32 %s26, 1
    %s28 = scalar_select %p25, %s26, %s27
    %p31 = pneg %p25
    %p32 = scmp.eq.s32.totalorder %s16, 1
    %p33 = por %p31, %p32
    %p34 = scmp.ne.s32.totalorder %s26, %s29
    %p35 = scmp.eq.s32.totalorder %s16, 0
    %p36 = por %p34, %p35
    %p37 = scmp.ne.s32.totalorder %s26, %s29
    %p38 = scmp.eq.s32.totalorder %s21, 1
    %p39 = por %p37, %p38
    %p40 = scmp.ne.s32.totalorder %s29, %s30
    %p41 = scmp.eq.s32.totalorder %s21, 0
    %p42 = por %p40, %p41
    %p43 = scmp.ne.s32.totalorder %s29, %s30
    %p44 = scmp.eq.s32.totalorder %s22, 1
    %p45 = por %p43, %p44
    %p47 = scmp.ne.s32.totalorder %s30, %s46
    %p48 = scmp.eq.s32.totalorder %s22, 0
    %p49 = por %p47, %p48
    %s50 = ssub.s32 %s16, %s23
    %p51 = scmp.eq.s32.totalorder %s50, 0
    %s53 = sadd.s32 %s52, 1
    %s54 = scalar_select %p51, %s52, %s53
    %p57 = pneg %p51
    %p58 = scmp.eq.s32.totalorder %s16, 1
    %p59 = por %p57, %p58
    %p60 = scmp.ne.s32.totalorder %s52, %s55
    %p61 = scmp.eq.s32.totalorder %s16, 0
    %p62 = por %p60, %p61
    %p63 = scmp.ne.s32.totalorder %s52, %s55
    %p64 = scmp.eq.s32.totalorder %s21, 1
    %p65 = por %p63, %p64
    %p66 = scmp.ne.s32.totalorder %s55, %s56
    %p67 = scmp.eq.s32.totalorder %s21, 0
    %p68 = por %p66, %p67
    %p69 = scmp.ne.s32.totalorder %s55, %s56
    %p70 = scmp.eq.s32.totalorder %s22, 1
    %p71 = por %p69, %p70
    %p73 = scmp.ne.s32.totalorder %s56, %s72
    %p74 = scmp.eq.s32.totalorder %s22, 0
    %p75 = por %p73, %p74
    %s77 = sadd.s32 %s76, 1
    %p80 = scmp.eq.s32.totalorder %s16, 1
    %p81 = scmp.ne.s32.totalorder %s76, %s78
    %p82 = scmp.eq.s32.totalorder %s16, 0
    %p83 = por %p81, %p82
    %p84 = scmp.ne.s32.totalorder %s76, %s78
    %p85 = scmp.eq.s32.totalorder %s21, 1
    %p86 = por %p84, %p85
    %p87 = scmp.ne.s32.totalorder %s78, %s79
    %p88 = scmp.eq.s32.totalorder %s21, 0
    %p89 = por %p87, %p88
    %p90 = scmp.ne.s32.totalorder %s78, %s79
    %p91 = scmp.eq.s32.totalorder %s22, 1
    %p92 = por %p90, %p91
    %p94 = scmp.ne.s32.totalorder %s79, %s93
    %p95 = scmp.eq.s32.totalorder %s22, 0
    %p96 = por %p94, %p95
    %s98 = sadd.s32 %s97, 1
    %p101 = scmp.eq.s32.totalorder %s16, 1
    %p102 = scmp.ne.s32.totalorder %s97, %s99
    %p103 = scmp.eq.s32.totalorder %s16, 0
    %p104 = por %p102, %p103
    %p105 = scmp.ne.s32.totalorder %s97, %s99
    %p106 = scmp.eq.s32.totalorder %s21, 1
    %p107 = por %p105, %p106
    %p108 = scmp.ne.s32.totalorder %s99, %s100
    %p109 = scmp.eq.s32.totalorder %s21, 0
    %p110 = por %p108, %p109
    %p111 = scmp.ne.s32.totalorder %s99, %s100
    %p112 = scmp.eq.s32.totalorder %s22, 1
    %p113 = por %p111, %p112
    %p115 = scmp.ne.s32.totalorder %s100, %s114
    %p116 = scmp.eq.s32.totalorder %s22, 0
    %p117 = por %p115, %p116
    %s119 = sadd.s32 %s118, 1
    %p122 = scmp.eq.s32.totalorder %s16, 1
    %p123 = scmp.ne.s32.totalorder %s118, %s120
    %p124 = scmp.eq.s32.totalorder %s16, 0
    %p125 = por %p123, %p124
    %p126 = scmp.ne.s32.totalorder %s118, %s120
    %p127 = scmp.eq.s32.totalorder %s21, 1
    %p128 = por %p126, %p127
    %p129 = scmp.ne.s32.totalorder %s120, %s121
    %p130 = scmp.eq.s32.totalorder %s21, 0
    %p131 = por %p129, %p130
    %p132 = scmp.ne.s32.totalorder %s120, %s121
    %p133 = scmp.eq.s32.totalorder %s22, 1
    %p134 = por %p132, %p133
    %p136 = scmp.ne.s32.totalorder %s121, %s135
    %p137 = scmp.eq.s32.totalorder %s22, 0
    %p138 = por %p136, %p137
    %s140 = sadd.s32 %s139, 1
    %p143 = scmp.eq.s32.totalorder %s16, 1
    %p144 = scmp.ne.s32.totalorder %s139, %s141
    %p145 = scmp.eq.s32.totalorder %s16, 0
    %p146 = por %p144, %p145
    %p147 = scmp.ne.s32.totalorder %s139, %s141
    %p148 = scmp.eq.s32.totalorder %s21, 1
    %p149 = por %p147, %p148
    %p150 = scmp.ne.s32.totalorder %s141, %s142
    %p151 = scmp.eq.s32.totalorder %s21, 0
    %p152 = por %p150, %p151
    %p153 = scmp.ne.s32.totalorder %s141, %s142
    %p154 = scmp.eq.s32.totalorder %s22, 1
    %p155 = por %p153, %p154
    %p157 = scmp.ne.s32.totalorder %s142, %s156
    %p158 = scmp.eq.s32.totalorder %s22, 0
    %p159 = por %p157, %p158
    %s161 = sadd.s32 %s160, 1
    %p164 = scmp.eq.s32.totalorder %s16, 1
    %p165 = scmp.ne.s32.totalorder %s160, %s162
    %p166 = scmp.eq.s32.totalorder %s16, 0
    %p167 = por %p165, %p166
    %p168 = scmp.ne.s32.totalorder %s160, %s162
    %p169 = scmp.eq.s32.totalorder %s21, 1
    %p170 = por %p168, %p169
    %p171 = scmp.ne.s32.totalorder %s162, %s163
    %p172 = scmp.eq.s32.totalorder %s21, 0
    %p173 = por %p171, %p172
    %p174 = scmp.ne.s32.totalorder %s162, %s163
    %p175 = scmp.eq.s32.totalorder %s22, 1
    %p176 = por %p174, %p175
    %p178 = scmp.ne.s32.totalorder %s163, %s177
    %p179 = scmp.eq.s32.totalorder %s22, 0
    %p180 = por %p178, %p179
    %s182 = sadd.s32 %s181, 1
    %p185 = scmp.eq.s32.totalorder %s16, 1
    %p186 = scmp.ne.s32.totalorder %s181, %s183
    %p187 = scmp.eq.s32.totalorder %s16, 0
    %p188 = por %p186, %p187
    %p189 = scmp.ne.s32.totalorder %s181, %s183
    %p190 = scmp.eq.s32.totalorder %s21, 1
    %p191 = por %p189, %p190
    %p192 = scmp.ne.s32.totalorder %s183, %s184
    %p193 = scmp.eq.s32.totalorder %s21, 0
    %p194 = por %p192, %p193
    %p195 = scmp.ne.s32.totalorder %s183, %s184
    %p196 = scmp.eq.s32.totalorder %s22, 1
    %p197 = por %p195, %p196
    %p199 = scmp.ne.s32.totalorder %s184, %s198
    %p200 = scmp.eq.s32.totalorder %s22, 0
    %p201 = por %p199, %p200
    %s203 = sadd.s32 %s202, 1
    %p206 = scmp.eq.s32.totalorder %s16, 1
    %p207 = scmp.ne.s32.totalorder %s202, %s204
    %p208 = scmp.eq.s32.totalorder %s16, 0
    %p209 = por %p207, %p208
    %p210 = scmp.ne.s32.totalorder %s202, %s204
    %p211 = scmp.eq.s32.totalorder %s21, 1
    %p212 = por %p210, %p211
    %p213 = scmp.ne.s32.totalorder %s204, %s205
    %p214 = scmp.eq.s32.totalorder %s21, 0
    %p215 = por %p213, %p214
    %p216 = scmp.ne.s32.totalorder %s204, %s205
    %p217 = scmp.eq.s32.totalorder %s22, 1
    %p218 = por %p216, %p217
    %p220 = scmp.ne.s32.totalorder %s205, %s219
    %p221 = scmp.eq.s32.totalorder %s22, 0
    %p222 = por %p220, %p221
    %s224 = sadd.s32 %s223, 1
    %p227 = scmp.eq.s32.totalorder %s16, 1
    %p228 = scmp.ne.s32.totalorder %s223, %s225
    %p229 = scmp.eq.s32.totalorder %s16, 0
    %p230 = por %p228, %p229
    %p231 = scmp.ne.s32.totalorder %s223, %s225
    %p232 = scmp.eq.s32.totalorder %s21, 1
    %p233 = por %p231, %p232
    %p234 = scmp.ne.s32.totalorder %s225, %s226
    %p235 = scmp.eq.s32.totalorder %s21, 0
    %p236 = por %p234, %p235
    %p237 = scmp.ne.s32.totalorder %s225, %s226
    %p238 = scmp.eq.s32.totalorder %s22, 1
    %p239 = por %p237, %p238
    %p241 = scmp.ne.s32.totalorder %s226, %s240
    %p242 = scmp.eq.s32.totalorder %s22, 0
    %p243 = por %p241, %p242
    %s244 = ssub.s32 %s16, %s23
    %p245 = scmp.eq.s32.totalorder %s244, 0
    %s247 = sadd.s32 %s246, 1
    %s248 = scalar_select %p245, %s246, %s247
    %p251 = pneg %p245
    %p252 = scmp.eq.s32.totalorder %s16, 1
    %p253 = por %p251, %p252
    %p254 = scmp.ne.s32.totalorder %s246, %s249
    %p255 = scmp.eq.s32.totalorder %s16, 0
    %p256 = por %p254, %p255
    %p257 = scmp.ne.s32.totalorder %s246, %s249
    %p258 = scmp.eq.s32.totalorder %s21, 1
    %p259 = por %p257, %p258
    %p260 = scmp.ne.s32.totalorder %s249, %s250
    %p261 = scmp.eq.s32.totalorder %s21, 0
    %p262 = por %p260, %p261
    %p263 = scmp.ne.s32.totalorder %s249, %s250
    %p264 = scmp.eq.s32.totalorder %s22, 1
    %p265 = por %p263, %p264
    %p267 = scmp.ne.s32.totalorder %s250, %s266
    %p268 = scmp.eq.s32.totalorder %s22, 0
    %p269 = por %p267, %p268
    %p270 = scmp.le.s32.totalorder 1, %s16
    %p271 = scmp.lt.s32.totalorder %s16, 3
    %p272 = pnand %p270, %p271
    %p273 = pneg %p272
    // Predicated region
    $region9: #{text_encoder_forward.5} parent=5 // pred_check
      _
    $region10: #{text_encoder_forward.5} parent=5 // pred_check_branch
      %275 = sbr.rel (%p272) target = $region12
    $region11: #{text_encoder_forward.5} parent=5 // pred_region
      %s276 = ssub.s32 %s16, 1
      // Predicated region
      $region13: #{text_encoder_forward.5} parent=11 // pred_check
        %p277 = pneg %p89
      $region14: #{text_encoder_forward.5} parent=11 // pred_check_branch
        %279 = sbr.rel (%p277) target = $region16
      $region15: #{text_encoder_forward.5} parent=11 // pred_region
        _
      $region16: #{text_encoder_forward.5} parent=11 // pred_fallthru
        _
      // Predicated region
      $region17: #{text_encoder_forward.5} parent=11 // pred_check
        %p280 = pneg %p110
      $region18: #{text_encoder_forward.5} parent=11 // pred_check_branch
        %282 = sbr.rel (%p280) target = $region20
      $region19: #{text_encoder_forward.5} parent=11 // pred_region
        _
      $region20: #{text_encoder_forward.5} parent=11 // pred_fallthru
        _
      // Predicated region
      $region21: #{text_encoder_forward.5} parent=11 // pred_check
        %p283 = pneg %p131
      $region22: #{text_encoder_forward.5} parent=11 // pred_check_branch
        %285 = sbr.rel (%p283) target = $region24
      $region23: #{text_encoder_forward.5} parent=11 // pred_region
        _
      $region24: #{text_encoder_forward.5} parent=11 // pred_fallthru
        _
      // Predicated region
      $region25: #{text_encoder_forward.5} parent=11 // pred_check
        %p286 = pneg %p152
      $region26: #{text_encoder_forward.5} parent=11 // pred_check_branch
        %288 = sbr.rel (%p286) target = $region28
      $region27: #{text_encoder_forward.5} parent=11 // pred_region
        _
      $region28: #{text_encoder_forward.5} parent=11 // pred_fallthru
        _
      // Predicated region
      $region29: #{text_encoder_forward.5} parent=11 // pred_check
        %p289 = pneg %p173
      $region30: #{text_encoder_forward.5} parent=11 // pred_check_branch
        %291 = sbr.rel (%p289) target = $region32
      $region31: #{text_encoder_forward.5} parent=11 // pred_region
        _
      $region32: #{text_encoder_forward.5} parent=11 // pred_fallthru
        _
      // Predicated region
      $region33: #{text_encoder_forward.5} parent=11 // pred_check
        %p292 = pneg %p194
      $region34: #{text_encoder_forward.5} parent=11 // pred_check_branch
        %294 = sbr.rel (%p292) target = $region36
      $region35: #{text_encoder_forward.5} parent=11 // pred_region
        _
      $region36: #{text_encoder_forward.5} parent=11 // pred_fallthru
        _
      // Predicated region
      $region37: #{text_encoder_forward.5} parent=11 // pred_check
        %p295 = pneg %p215
      $region38: #{text_encoder_forward.5} parent=11 // pred_check_branch
        %297 = sbr.rel (%p295) target = $region40
      $region39: #{text_encoder_forward.5} parent=11 // pred_region
        _
      $region40: #{text_encoder_forward.5} parent=11 // pred_fallthru
        _
      // Predicated region
      $region41: #{text_encoder_forward.5} parent=11 // pred_check
        %p298 = pneg %p236
      $region42: #{text_encoder_forward.5} parent=11 // pred_check_branch
        %300 = sbr.rel (%p298) target = $region44
      $region43: #{text_encoder_forward.5} parent=11 // pred_region
        _
      $region44: #{text_encoder_forward.5} parent=11 // pred_fallthru
        _
    $region12: #{text_encoder_forward.5} parent=5 // pred_fallthru
      _
    %p301 = scmp.lt.s32.totalorder %s16, 2
    // Predicated region
    $region45: #{text_encoder_forward.5} parent=5 // pred_check
      %p302 = pneg %p301
    $region46: #{text_encoder_forward.5} parent=5 // pred_check_branch
      %304 = sbr.rel (%p302) target = $region48
    $region47: #{text_encoder_forward.5} parent=5 // pred_region
      // Predicated region
      $region49: #{text_encoder_forward.5} parent=47 // pred_check
        %p305 = pneg %p36
      $region50: #{text_encoder_forward.5} parent=47 // pred_check_branch
        %307 = sbr.rel (%p305) target = $region52
      $region51: #{text_encoder_forward.5} parent=47 // pred_region
        %s308 = smul.u32 4, %s16
        %p309 = scmp.lt.s32.totalorder %s308, 7
        %s310 = scalar_select %p309, %s308, 7
        %s311 = smul.addr %s310, 4
        %s312 = scalar_lea.vmem %s0, %s311
        %s313 = smul.u32 4, %s16
      $region52: #{text_encoder_forward.5} parent=47 // pred_fallthru
        _
      // Predicated region
      $region53: #{text_encoder_forward.5} parent=47 // pred_check
        %p314 = pneg %p62
      $region54: #{text_encoder_forward.5} parent=47 // pred_check_branch
        %316 = sbr.rel (%p314) target = $region56
      $region55: #{text_encoder_forward.5} parent=47 // pred_region
        %s317 = smul.u32 4, %s16
        %p318 = scmp.lt.s32.totalorder %s317, 7
        %s319 = scalar_select %p318, %s317, 7
        %s320 = smul.addr %s319, 4
        %s321 = scalar_lea.vmem %s1, %s320
        %s322 = smul.u32 4, %s16
      $region56: #{text_encoder_forward.5} parent=47 // pred_fallthru
        _
    $region48: #{text_encoder_forward.5} parent=5 // pred_fallthru
      _
    %p323 = scmp.le.s32.totalorder 1, %s16
    %p324 = scmp.lt.s32.totalorder %s16, 3
    %p325 = pnand %p323, %p324
    %p326 = pneg %p325
    // Predicated region
    $region57: #{text_encoder_forward.5} parent=5 // pred_check
      _
    $region58: #{text_encoder_forward.5} parent=5 // pred_check_branch
      %328 = sbr.rel (%p325) target = $region60
    $region59: #{text_encoder_forward.5} parent=5 // pred_region
      %s329 = ssub.s32 %s16, 1
      %s330 = smul.u32 4, %s21
      %p331 = scmp.lt.s32.totalorder %s330, 7
      %s332 = scalar_select %p331, %s330, 7
      %s333 = smul.addr %s332, 4
      %s334 = scalar_lea.vmem %s0, %s333
      %p335 = pneg %p42
      %p336 = pneg %p39
      %s337 = smul.u32 4, %s21
      %p338 = scmp.lt.s32.totalorder %s337, 7
      %s339 = scalar_select %p338, %s337, 7
      %s340 = smul.addr %s339, 4
      %s341 = scalar_lea.vmem %s1, %s340
      %p342 = pneg %p68
      %p343 = pneg %p65
      %p344 = pneg %p89
      %p345 = pneg %p86
      %p346 = pneg %p110
      %p347 = pneg %p107
      %p348 = pneg %p131
      %p349 = pneg %p128
      %p350 = pneg %p152
      %p351 = pneg %p149
      %p352 = pneg %p173
      %p353 = pneg %p170
      %p354 = pneg %p194
      %p355 = pneg %p191
      %p356 = pneg %p215
      %p357 = pneg %p212
      %p358 = pneg %p236
      %p359 = pneg %p233
      %p360 = pneg %p262
      %p361 = pneg %p259
      %s362 = smul.u32 4, %s21
      %p363 = scmp.lt.s32.totalorder %s362, 7
      %s364 = scalar_select %p363, %s362, 7
      %s365 = smul.addr %s364, 4
      %s366 = scalar_lea.vmem %s10, %s365
      %s367 = smul.u32 4, %s21
      %p368 = scmp.lt.s32.totalorder %s367, 7
      %s369 = scalar_select %p368, %s367, 7
      %s370 = smul.addr %s369, 4
      %s371 = scalar_lea.vmem %s0, %s370
      %s372 = smul.u32 4, %s21
      %s373 = smul.u32 4, %s21
      %p374 = scmp.lt.s32.totalorder %s373, 7
      %s375 = scalar_select %p374, %s373, 7
      %s376 = smul.addr %s375, 4
      %s377 = scalar_lea.vmem %s1, %s376
      %s378 = smul.u32 4, %s21
      %s379 = smul.u32 4, %s21
      %p380 = scmp.lt.s32.totalorder %s379, 7
      %s381 = scalar_select %p380, %s379, 7
      %s382 = smul.addr %s381, 4
      %s383 = scalar_lea.vmem %s10, %s382
      %s384 = smul.u32 4, %s21
      %v386 = vld [vmem:[%s377] sm:$0xf]
      %v387 = vld [vmem:[%s377 + $0x4] sm:$0xf]
      %v388 = vld [vmem:[%s377 + $0x8] sm:$0xf]
      %v389 = vld [vmem:[%s377 + $0xc] sm:$0xf]
      %v390 = vunpack.c.l.bf16 %v386
      %v391 = vunpack.c.l.bf16 %v387
      %v392 = vunpack.c.l.bf16 %v388
      %v393 = vunpack.c.l.bf16 %v389
      %v394 = vld [vmem:[%s371] sm:$0xf]
      %v395 = vld [vmem:[%s371 + $0x4] sm:$0xf]
      %v396 = vld [vmem:[%s371 + $0x8] sm:$0xf]
      %v397 = vld [vmem:[%s371 + $0xc] sm:$0xf]
      %v398 = vld [vmem:[%s2] sm:$0xf]
      %v399 = vld [vmem:[%s2 + $0x4] sm:$0xf]
      %v400 = vld [vmem:[%s2 + $0x8] sm:$0xf]
      %v401 = vld [vmem:[%s2 + $0xc] sm:$0xf]
      %v402 = vld [vmem:[%s2 + $0x10] sm:$0xf]
      %v403 = vld [vmem:[%s2 + $0x14] sm:$0xf]
      %v404 = vld [vmem:[%s2 + $0x18] sm:$0xf]
      %v405 = vld [vmem:[%s2 + $0x1c] sm:$0xf]
      %v406 = vld [vmem:[%s3] sm:$0x1]
      %v408 = vlaneseq
      %v409 = vshrl.u32 %v408, 7
      %v410 = vsub.s32 0, %v409
      %v411 = vrot.slane %v406, %v410
      %v417 = vunpack.c.l.b16 %v394
      %v418 = vunpack.c.l.b16 %v395
      %v419 = vunpack.c.l.b16 %v396
      %v420 = vunpack.c.l.b16 %v397
      %v421 = vpack.c.b16 %v418, %v417
      %v422 = vpack.c.b16 %v420, %v419
      %v431 = vunpack.c.l.b16 %v398
      %v432 = vunpack.c.l.b16 %v399
      %v433 = vunpack.c.l.b16 %v400
      %v434 = vunpack.c.l.b16 %v401
      %v435 = vunpack.c.l.b16 %v402
      %v436 = vunpack.c.l.b16 %v403
      %v437 = vunpack.c.l.b16 %v404
      %v438 = vunpack.c.l.b16 %v405
      %v439 = vpack.c.b16 %v432, %v431
      %v440 = vpack.c.b16 %v434, %v433
      %v441 = vpack.c.b16 %v436, %v435
      %v442 = vpack.c.b16 %v438, %v437
      %vm447 = vcmask 523264
      %v449 = vsel %vm447, %v421, 0
      %v452 = vsel %vm447, %v422, 0
      %454 = vmatprep.subr.bf16.mxu0 0
      %455 = vmatpush1.bf16.msra.mxu0 %v439
      %456 = vmatprep.subr.bf16.mxu0 0
      %457 = vmatpush1.bf16.msra.mxu0 %v440
      %458 = vmatprep.subr.bf16.mxu0 0
      %459 = vmatpush1.bf16.msra.mxu0 %v441
      %460 = vmatprep.subr.bf16.mxu0 0
      %461 = vmatpush1.bf16.msra.mxu0 %v442
      %462 = vmatprep.subr.bf16.mxu0 0
      %463 = vmatpush1.bf16.msra.mxu0 0
      %464 = vmatprep.subr.bf16.mxu0 0
      %465 = vmatpush1.bf16.msra.mxu0 0
      %466 = vmatprep.subr.bf16.mxu0 0
      %467 = vmatpush1.bf16.msra.mxu0 0
      %468 = vmatprep.subr.bf16.mxu0 0
      %469 = vmatpush1.bf16.msra.mxu0 0
      %470 = vmatprep.subr.bf16.mxu0 0
      %471 = vmatpush1.bf16.msra.mxu0 0
      %472 = vmatprep.subr.bf16.mxu0 0
      %473 = vmatpush1.bf16.msra.mxu0 0
      %474 = vmatprep.subr.bf16.mxu0 0
      %475 = vmatpush1.bf16.msra.mxu0 0
      %476 = vmatprep.subr.bf16.mxu0 0
      %477 = vmatpush1.bf16.msra.mxu0 0
      %478 = vmatprep.subr.bf16.mxu0 0
      %479 = vmatpush1.bf16.msra.mxu0 0
      %480 = vmatprep.subr.bf16.mxu0 0
      %481 = vmatpush1.bf16.msra.mxu0 0
      %482 = vmatprep.subr.bf16.mxu0 0
      %483 = vmatpush1.bf16.msra.mxu0 0
      %484 = vmatprep.subr.bf16.mxu0 0
      %485 = vmatpush1.bf16.msra.mxu0 0
      %486 = vmatprep.mubr.bf16.mxu0 0
      %487 = vmatmul.mubr.bf16.gmra.mrb[0].mxu0 %v449
      %v488 = vpop.f32.mrb[0].mxu0
      %v489 = vadd.f32 %v411, %v488
      %v490 = vpop.f32.mrb[0].mxu0
      %v491 = vpop.f32.mrb[0].mxu0
      %v492 = vadd.f32 %v411, %v491
      %v493 = vpop.f32.mrb[0].mxu0
      %494 = vmatprep.mubr.bf16.mxu0 0
      %495 = vmatmul.mubr.bf16.gmra.mrb[0].mxu0 %v452
      %v496 = vpop.f32.mrb[0].mxu0
      %v497 = vadd.f32 %v411, %v496
      %v498 = vpop.f32.mrb[0].mxu0
      %v499 = vpop.f32.mrb[0].mxu0
      %v500 = vadd.f32 %v411, %v499
      %v501 = vpop.f32.mrb[0].mxu0
      %502 = vdwg.mxu0
      %v503 = vadd.f32 %v489, %v390
      %v504 = vadd.f32 %v492, %v391
      %v505 = vadd.f32 %v497, %v392
      %v506 = vadd.f32 %v500, %v393
      %v507 = vld [vmem:[%s4] sm:$0x1]
      %v508 = vld [vmem:[%s5] sm:$0x1]
      %v509 = vsel %vm447, %v503, 0.0
      %510 = vadd.xlane.f32.xlu0 %v509
      %v511 = vpop.xlane.xlu0 %510
      %v512 = vsel %vm447, %v504, 0.0
      %513 = vadd.xlane.f32.xlu0 %v512
      %v514 = vpop.xlane.xlu0 %513
      %v515 = vsel %vm447, %v505, 0.0
      %516 = vadd.xlane.f32.xlu0 %v515
      %v517 = vpop.xlane.xlu0 %516
      %v518 = vsel %vm447, %v506, 0.0
      %519 = vadd.xlane.f32.xlu0 %v518
      %v520 = vpop.xlane.xlu0 %519
      %v521 = vrcp.pop 64.0
      %v522 = vmul.f32 %v511, %v521
      %v523 = vmul.f32 %v514, %v521
      %v524 = vmul.f32 %v517, %v521
      %v525 = vmul.f32 %v520, %v521
      %v526 = vsub.f32 %v503, %v522
      %v527 = vsub.f32 %v504, %v523
      %v528 = vsub.f32 %v505, %v524
      %v529 = vsub.f32 %v506, %v525
      %v530 = vmul.f32 %v526, %v526
      %v531 = vmul.f32 %v527, %v527
      %v532 = vmul.f32 %v528, %v528
      %v533 = vmul.f32 %v529, %v529
      %v534 = vsel %vm447, %v530, 0.0
      %535 = vadd.xlane.f32.xlu0 %v534
      %v536 = vpop.xlane.xlu0 %535
      %v537 = vsel %vm447, %v531, 0.0
      %538 = vadd.xlane.f32.xlu0 %v537
      %v539 = vpop.xlane.xlu0 %538
      %v540 = vsel %vm447, %v532, 0.0
      %541 = vadd.xlane.f32.xlu0 %v540
      %v542 = vpop.xlane.xlu0 %541
      %v543 = vsel %vm447, %v533, 0.0
      %544 = vadd.xlane.f32.xlu0 %v543
      %v545 = vpop.xlane.xlu0 %544
      %v546 = vmul.f32 %v536, %v521
      %v547 = vmul.f32 %v539, %v521
      %v548 = vmul.f32 %v542, %v521
      %v549 = vmul.f32 %v545, %v521
      %v550 = vadd.f32 %v546, 1e-05
      %v551 = vadd.f32 %v547, 1e-05
      %v552 = vadd.f32 %v548, 1e-05
      %v553 = vadd.f32 %v549, 1e-05
      %v554 = vrsqrt.pop %v550
      %v555 = vrsqrt.pop %v551
      %v556 = vrsqrt.pop %v552
      %v557 = vrsqrt.pop %v553
      %v558 = vmul.f32 %v526, %v554
      %v559 = vmul.f32 %v527, %v555
      %v560 = vmul.f32 %v528, %v556
      %v561 = vmul.f32 %v529, %v557
      %v563 = vlaneseq
      %v564 = vshrl.u32 %v563, 7
      %v565 = vsub.s32 0, %v564
      %v566 = vrot.slane %v507, %v565
      %v568 = vmul.f32 %v558, %v566
      %v569 = vmul.f32 %v559, %v566
      %v570 = vmul.f32 %v560, %v566
      %v571 = vmul.f32 %v561, %v566
      %v573 = vlaneseq
      %v574 = vshrl.u32 %v573, 7
      %v575 = vsub.s32 0, %v574
      %v576 = vrot.slane %v508, %v575
      %v578 = vadd.f32 %v568, %v576
      %v579 = vadd.f32 %v569, %v576
      %v580 = vadd.f32 %v570, %v576
      %v581 = vadd.f32 %v571, %v576
      %v582 = vpack.c.bf16 %v579, %v578
      %v583 = vpack.c.bf16 %v581, %v580
      %v584 = vld [vmem:[%s6] sm:$0xff]
      %v585 = vld [vmem:[%s6 + $0x8] sm:$0xff]
      %v586 = vld [vmem:[%s6 + $0x10] sm:$0xff]
      %v587 = vld [vmem:[%s6 + $0x18] sm:$0xff]
      %v588 = vld [vmem:[%s6 + $0x20] sm:$0xff]
      %v589 = vld [vmem:[%s6 + $0x28] sm:$0xff]
      %v590 = vld [vmem:[%s6 + $0x30] sm:$0xff]
      %v591 = vld [vmem:[%s6 + $0x38] sm:$0xff]
      %v592 = vld [vmem:[%s7] sm:$0x3]
      %v594 = vlaneseq
      %v595 = vshrl.u32 %v594, 7
      %v596 = vsub.s32 0, %v595
      %v597 = vrot.slane %v592, %v596
      %v598 = vlaneseq
      %v599 = vshrl.u32 %v598, 7
      %v600 = vsub.s32 1, %v599
      %v601 = vrot.slane %v592, %v600
      %v612 = vunpack.c.l.b16 %v584
      %v613 = vunpack.c.h.b16 %v584
      %v614 = vunpack.c.l.b16 %v585
      %v615 = vunpack.c.h.b16 %v585
      %v616 = vunpack.c.l.b16 %v586
      %v617 = vunpack.c.h.b16 %v586
      %v618 = vunpack.c.l.b16 %v587
      %v619 = vunpack.c.h.b16 %v587
      %v620 = vunpack.c.l.b16 %v588
      %v621 = vunpack.c.h.b16 %v588
      %v622 = vunpack.c.l.b16 %v589
      %v623 = vunpack.c.h.b16 %v589
      %v624 = vunpack.c.l.b16 %v590
      %v625 = vunpack.c.h.b16 %v590
      %v626 = vunpack.c.l.b16 %v591
      %v627 = vunpack.c.h.b16 %v591
      %v628 = vpack.c.b16 %v614, %v612
      %v629 = vpack.c.b16 %v615, %v613
      %v630 = vpack.c.b16 %v618, %v616
      %v631 = vpack.c.b16 %v619, %v617
      %v632 = vpack.c.b16 %v622, %v620
      %v633 = vpack.c.b16 %v623, %v621
      %v634 = vpack.c.b16 %v626, %v624
      %v635 = vpack.c.b16 %v627, %v625
      %v645 = vsel %vm447, %v582, 0
      %v648 = vsel %vm447, %v583, 0
      %650 = vmatprep.subr.bf16.mxu0 %v629
      %651 = vmatpush1.bf16.msra.mxu0 %v628
      %652 = vmatprep.subr.bf16.mxu0 %v631
      %653 = vmatpush1.bf16.msra.mxu0 %v630
      %654 = vmatprep.subr.bf16.mxu0 %v633
      %655 = vmatpush1.bf16.msra.mxu0 %v632
      %656 = vmatprep.subr.bf16.mxu0 %v635
      %657 = vmatpush1.bf16.msra.mxu0 %v634
      %658 = vmatprep.subr.bf16.mxu0 0
      %659 = vmatpush1.bf16.msra.mxu0 0
      %660 = vmatprep.subr.bf16.mxu0 0
      %661 = vmatpush1.bf16.msra.mxu0 0
      %662 = vmatprep.subr.bf16.mxu0 0
      %663 = vmatpush1.bf16.msra.mxu0 0
      %664 = vmatprep.subr.bf16.mxu0 0
      %665 = vmatpush1.bf16.msra.mxu0 0
      %666 = vmatprep.subr.bf16.mxu0 0
      %667 = vmatpush1.bf16.msra.mxu0 0
      %668 = vmatprep.subr.bf16.mxu0 0
      %669 = vmatpush1.bf16.msra.mxu0 0
      %670 = vmatprep.subr.bf16.mxu0 0
      %671 = vmatpush1.bf16.msra.mxu0 0
      %672 = vmatprep.subr.bf16.mxu0 0
      %673 = vmatpush1.bf16.msra.mxu0 0
      %674 = vmatprep.subr.bf16.mxu0 0
      %675 = vmatpush1.bf16.msra.mxu0 0
      %676 = vmatprep.subr.bf16.mxu0 0
      %677 = vmatpush1.bf16.msra.mxu0 0
      %678 = vmatprep.subr.bf16.mxu0 0
      %679 = vmatpush1.bf16.msra.mxu0 0
      %680 = vmatprep.subr.bf16.mxu0 0
      %681 = vmatpush1.bf16.msra.mxu0 0
      %682 = vmatprep.mubr.bf16.mxu0 0
      %683 = vmatmul.mubr.bf16.gmra.mrb[0].mxu0 %v645
      %v684 = vpop.f32.mrb[0].mxu0
      %v685 = vadd.f32 %v597, %v684
      %v686 = vpop.f32.mrb[0].mxu0
      %v687 = vadd.f32 %v601, %v686
      %v688 = vpop.f32.mrb[0].mxu0
      %v689 = vadd.f32 %v597, %v688
      %v690 = vpop.f32.mrb[0].mxu0
      %v691 = vadd.f32 %v601, %v690
      %692 = vmatprep.mubr.bf16.mxu0 0
      %693 = vmatmul.mubr.bf16.gmra.mrb[0].mxu0 %v648
      %v694 = vpop.f32.mrb[0].mxu0
      %v695 = vadd.f32 %v597, %v694
      %v696 = vpop.f32.mrb[0].mxu0
      %v697 = vadd.f32 %v601, %v696
      %v698 = vpop.f32.mrb[0].mxu0
      %v699 = vadd.f32 %v597, %v698
      %v700 = vpop.f32.mrb[0].mxu0
      %v701 = vadd.f32 %v601, %v700
      %702 = vdwg.mxu0
      %v703 = vmul.f32 %v685, -1.702
      %v704 = vmul.f32 %v687, -1.702
      %v705 = vmul.f32 %v689, -1.702
      %v706 = vmul.f32 %v691, -1.702
      %v707 = vmul.f32 %v695, -1.702
      %v708 = vmul.f32 %v697, -1.702
      %v709 = vmul.f32 %v699, -1.702
      %v710 = vmul.f32 %v701, -1.702
      %v711 = vmul.f32 %v703, 1.442695
      %v712 = vpow.pop %v711
      %v713 = vmul.f32 %v704, 1.442695
      %v714 = vpow.pop %v713
      %v715 = vmul.f32 %v705, 1.442695
      %v716 = vpow.pop %v715
      %v717 = vmul.f32 %v706, 1.442695
      %v718 = vpow.pop %v717
      %v719 = vmul.f32 %v707, 1.442695
      %v720 = vpow.pop %v719
      %v721 = vmul.f32 %v708, 1.442695
      %v722 = vpow.pop %v721
      %v723 = vmul.f32 %v709, 1.442695
      %v724 = vpow.pop %v723
      %v725 = vmul.f32 %v710, 1.442695
      %v726 = vpow.pop %v725
      %v727 = vadd.f32 %v712, 1.0
      %v728 = vadd.f32 %v714, 1.0
      %v729 = vadd.f32 %v716, 1.0
      %v730 = vadd.f32 %v718, 1.0
      %v731 = vadd.f32 %v720, 1.0
      %v732 = vadd.f32 %v722, 1.0
      %v733 = vadd.f32 %v724, 1.0
      %v734 = vadd.f32 %v726, 1.0
      %v735 = vrcp.pop %v727
      %v736 = vmul.f32 1.0, %v735
      %v737 = vrcp.pop %v728
      %v738 = vmul.f32 1.0, %v737
      %v739 = vrcp.pop %v729
      %v740 = vmul.f32 1.0, %v739
      %v741 = vrcp.pop %v730
      %v742 = vmul.f32 1.0, %v741
      %v743 = vrcp.pop %v731
      %v744 = vmul.f32 1.0, %v743
      %v745 = vrcp.pop %v732
      %v746 = vmul.f32 1.0, %v745
      %v747 = vrcp.pop %v733
      %v748 = vmul.f32 1.0, %v747
      %v749 = vrcp.pop %v734
      %v750 = vmul.f32 1.0, %v749
      %v751 = vmul.f32 %v685, %v736
      %v752 = vmul.f32 %v687, %v738
      %v753 = vmul.f32 %v689, %v740
      %v754 = vmul.f32 %v691, %v742
      %v755 = vmul.f32 %v695, %v744
      %v756 = vmul.f32 %v697, %v746
      %v757 = vmul.f32 %v699, %v748
      %v758 = vmul.f32 %v701, %v750
      %v759 = vpack.c.bf16 %v753, %v751
      %v760 = vpack.c.bf16 %v754, %v752
      %v761 = vpack.c.bf16 %v757, %v755
      %v762 = vpack.c.bf16 %v758, %v756
      %v763 = vld [vmem:[%s8] sm:$0xf]
      %v764 = vld [vmem:[%s8 + $0x4] sm:$0xf]
      %v765 = vld [vmem:[%s8 + $0x8] sm:$0xf]
      %v766 = vld [vmem:[%s8 + $0xc] sm:$0xf]
      %v767 = vld [vmem:[%s8 + $0x10] sm:$0xf]
      %v768 = vld [vmem:[%s8 + $0x14] sm:$0xf]
      %v769 = vld [vmem:[%s8 + $0x18] sm:$0xf]
      %v770 = vld [vmem:[%s8 + $0x1c] sm:$0xf]
      %v771 = vld [vmem:[%s8 + $0x20] sm:$0xf]
      %v772 = vld [vmem:[%s8 + $0x24] sm:$0xf]
      %v773 = vld [vmem:[%s8 + $0x28] sm:$0xf]
      %v774 = vld [vmem:[%s8 + $0x2c] sm:$0xf]
      %v775 = vld [vmem:[%s8 + $0x30] sm:$0xf]
      %v776 = vld [vmem:[%s8 + $0x34] sm:$0xf]
      %v777 = vld [vmem:[%s8 + $0x38] sm:$0xf]
      %v778 = vld [vmem:[%s8 + $0x3c] sm:$0xf]
      %v779 = vld [vmem:[%s8 + $0x40] sm:$0xf]
      %v780 = vld [vmem:[%s8 + $0x44] sm:$0xf]
      %v781 = vld [vmem:[%s8 + $0x48] sm:$0xf]
      %v782 = vld [vmem:[%s8 + $0x4c] sm:$0xf]
      %v783 = vld [vmem:[%s8 + $0x50] sm:$0xf]
      %v784 = vld [vmem:[%s8 + $0x54] sm:$0xf]
      %v785 = vld [vmem:[%s8 + $0x58] sm:$0xf]
      %v786 = vld [vmem:[%s8 + $0x5c] sm:$0xf]
      %v787 = vld [vmem:[%s8 + $0x60] sm:$0xf]
      %v788 = vld [vmem:[%s8 + $0x64] sm:$0xf]
      %v789 = vld [vmem:[%s8 + $0x68] sm:$0xf]
      %v790 = vld [vmem:[%s8 + $0x6c] sm:$0xf]
      %v791 = vld [vmem:[%s8 + $0x70] sm:$0xf]
      %v792 = vld [vmem:[%s8 + $0x74] sm:$0xf]
      %v793 = vld [vmem:[%s8 + $0x78] sm:$0xf]
      %v794 = vld [vmem:[%s8 + $0x7c] sm:$0xf]
      %v795 = vld [vmem:[%s9] sm:$0x1]
      %v797 = vlaneseq
      %v798 = vshrl.u32 %v797, 7
      %v799 = vsub.s32 0, %v798
      %v800 = vrot.slane %v795, %v799
      %v834 = vunpack.c.l.b16 %v763
      %v835 = vunpack.c.l.b16 %v764
      %v836 = vunpack.c.l.b16 %v765
      %v837 = vunpack.c.l.b16 %v766
      %v838 = vunpack.c.l.b16 %v767
      %v839 = vunpack.c.l.b16 %v768
      %v840 = vunpack.c.l.b16 %v769
      %v841 = vunpack.c.l.b16 %v770
      %v842 = vunpack.c.l.b16 %v771
      %v843 = vunpack.c.l.b16 %v772
      %v844 = vunpack.c.l.b16 %v773
      %v845 = vunpack.c.l.b16 %v774
      %v846 = vunpack.c.l.b16 %v775
      %v847 = vunpack.c.l.b16 %v776
      %v848 = vunpack.c.l.b16 %v777
      %v849 = vunpack.c.l.b16 %v778
      %v850 = vunpack.c.l.b16 %v779
      %v851 = vunpack.c.l.b16 %v780
      %v852 = vunpack.c.l.b16 %v781
      %v853 = vunpack.c.l.b16 %v782
      %v854 = vunpack.c.l.b16 %v783
      %v855 = vunpack.c.l.b16 %v784
      %v856 = vunpack.c.l.b16 %v785
      %v857 = vunpack.c.l.b16 %v786
      %v858 = vunpack.c.l.b16 %v787
      %v859 = vunpack.c.l.b16 %v788
      %v860 = vunpack.c.l.b16 %v789
      %v861 = vunpack.c.l.b16 %v790
      %v862 = vunpack.c.l.b16 %v791
      %v863 = vunpack.c.l.b16 %v792
      %v864 = vunpack.c.l.b16 %v793
      %v865 = vunpack.c.l.b16 %v794
      %v866 = vpack.c.b16 %v835, %v834
      %v867 = vpack.c.b16 %v837, %v836
      %v868 = vpack.c.b16 %v839, %v838
      %v869 = vpack.c.b16 %v841, %v840
      %v870 = vpack.c.b16 %v843, %v842
      %v871 = vpack.c.b16 %v845, %v844
      %v872 = vpack.c.b16 %v847, %v846
      %v873 = vpack.c.b16 %v849, %v848
      %v874 = vpack.c.b16 %v851, %v850
      %v875 = vpack.c.b16 %v853, %v852
      %v876 = vpack.c.b16 %v855, %v854
      %v877 = vpack.c.b16 %v857, %v856
      %v878 = vpack.c.b16 %v859, %v858
      %v879 = vpack.c.b16 %v861, %v860
      %v880 = vpack.c.b16 %v863, %v862
      %v881 = vpack.c.b16 %v865, %v864
      %898 = vmatprep.subr.bf16.mxu0 0
      %899 = vmatpush1.bf16.msra.mxu0 %v866
      %900 = vmatprep.subr.bf16.mxu0 0
      %901 = vmatpush1.bf16.msra.mxu0 %v867
      %902 = vmatprep.subr.bf16.mxu0 0
      %903 = vmatpush1.bf16.msra.mxu0 %v868
      %904 = vmatprep.subr.bf16.mxu0 0
      %905 = vmatpush1.bf16.msra.mxu0 %v869
      %906 = vmatprep.subr.bf16.mxu0 0
      %907 = vmatpush1.bf16.msra.mxu0 %v870
      %908 = vmatprep.subr.bf16.mxu0 0
      %909 = vmatpush1.bf16.msra.mxu0 %v871
      %910 = vmatprep.subr.bf16.mxu0 0
      %911 = vmatpush1.bf16.msra.mxu0 %v872
      %912 = vmatprep.subr.bf16.mxu0 0
      %913 = vmatpush1.bf16.msra.mxu0 %v873
      %914 = vmatprep.subr.bf16.mxu0 0
      %915 = vmatpush1.bf16.msra.mxu0 %v874
      %916 = vmatprep.subr.bf16.mxu0 0
      %917 = vmatpush1.bf16.msra.mxu0 %v875
      %918 = vmatprep.subr.bf16.mxu0 0
      %919 = vmatpush1.bf16.msra.mxu0 %v876
      %920 = vmatprep.subr.bf16.mxu0 0
      %921 = vmatpush1.bf16.msra.mxu0 %v877
      %922 = vmatprep.subr.bf16.mxu0 0
      %923 = vmatpush1.bf16.msra.mxu0 %v878
      %924 = vmatprep.subr.bf16.mxu0 0
      %925 = vmatpush1.bf16.msra.mxu0 %v879
      %926 = vmatprep.subr.bf16.mxu0 0
      %927 = vmatpush1.bf16.msra.mxu0 %v880
      %928 = vmatprep.subr.bf16.mxu0 0
      %929 = vmatpush1.bf16.msra.mxu0 %v881
      %930 = vmatprep.mubr.bf16.mxu0 %v760
      %931 = vmatmul.mubr.bf16.gmra.mrb[0].mxu0 %v759
      %v932 = vpop.f32.mrb[0].mxu0
      %v933 = vadd.f32 %v800, %v932
      %v934 = vpop.f32.mrb[0].mxu0
      %v935 = vpop.f32.mrb[0].mxu0
      %v936 = vadd.f32 %v800, %v935
      %v937 = vpop.f32.mrb[0].mxu0
      %938 = vmatprep.mubr.bf16.mxu0 %v762
      %939 = vmatmul.mubr.bf16.gmra.mrb[0].mxu0 %v761
      %v940 = vpop.f32.mrb[0].mxu0
      %v941 = vadd.f32 %v800, %v940
      %v942 = vpop.f32.mrb[0].mxu0
      %v943 = vpop.f32.mrb[0].mxu0
      %v944 = vadd.f32 %v800, %v943
      %v945 = vpop.f32.mrb[0].mxu0
      %946 = vdwg.mxu0
      %v947 = vadd.f32 %v503, %v933
      %v948 = vadd.f32 %v504, %v936
      %v949 = vadd.f32 %v505, %v941
      %v950 = vadd.f32 %v506, %v944
      %v951 = vpack.c.bf16 %v948, %v947
      %v952 = vpack.c.bf16 %v950, %v949
      %v955 = vunpack.c.l.b16 %v951
      %v956 = vunpack.c.h.b16 %v951
      %v957 = vunpack.c.l.b16 %v952
      %v958 = vunpack.c.h.b16 %v952
      %v959 = vpack.c.b16 %v955, %v955
      %v960 = vpack.c.b16 %v956, %v956
      %v961 = vpack.c.b16 %v957, %v957
      %v962 = vpack.c.b16 %v958, %v958
      %vm967 = vcmask 519168
      %968 = vst.msk [vmem:[%s383] sm:$0xf] %vm967, %v959
      %969 = vst.msk [vmem:[%s383 + $0x4] sm:$0xf] %vm967, %v960
      %970 = vst.msk [vmem:[%s383 + $0x8] sm:$0xf] %vm967, %v961
      %971 = vst.msk [vmem:[%s383 + $0xc] sm:$0xf] %vm967, %v962
      %s972 = smul.u32 4, %s21
      %p973 = scmp.lt.s32.totalorder %s972, 7
      %s974 = scalar_select %p973, %s972, 7
      %s975 = smul.addr %s974, 4
      %s976 = scalar_lea.vmem %s10, %s975
      // Predicated region
      $region61: #{text_encoder_forward.5} parent=59 // pred_check
        %p977 = pneg %p259
      $region62: #{text_encoder_forward.5} parent=59 // pred_check_branch
        %979 = sbr.rel (%p977) target = $region64
      $region63: #{text_encoder_forward.5} parent=59 // pred_region
        %s980 = smul.u32 4, %s21
      $region64: #{text_encoder_forward.5} parent=59 // pred_fallthru
        _
    $region60: #{text_encoder_forward.5} parent=5 // pred_fallthru
      _
    %p981 = scmp.le.s32.totalorder 2, %s16
    // Predicated region
    $region65: #{text_encoder_forward.5} parent=5 // pred_check
      %p982 = pneg %p981
    $region66: #{text_encoder_forward.5} parent=5 // pred_check_branch
      %984 = sbr.rel (%p982) target = $region68
    $region67: #{text_encoder_forward.5} parent=5 // pred_region
      %s985 = ssub.s32 %s16, 2
      // Predicated region
      $region69: #{text_encoder_forward.5} parent=67 // pred_check
        %p986 = pneg %p265
      $region70: #{text_encoder_forward.5} parent=67 // pred_check_branch
        %988 = sbr.rel (%p986) target = $region72
      $region71: #{text_encoder_forward.5} parent=67 // pred_region
        %s989 = smul.u32 4, %s22
        %p990 = scmp.lt.s32.totalorder %s989, 7
        %s991 = scalar_select %p990, %s989, 7
        %s992 = smul.addr %s991, 4
        %s993 = scalar_lea.vmem %s10, %s992
      $region72: #{text_encoder_forward.5} parent=67 // pred_fallthru
        _
    $region68: #{text_encoder_forward.5} parent=5 // pred_fallthru
      _
  $region6: #{text_encoder_forward.5} parent=0 // loop_footer
    %s20 = sadd.s32 1, %s16
  $region7: #{text_encoder_forward.5} parent=0 // loop_footer_branch
    %15 = sbr.rel target = $region3
  $region8: #{text_encoder_forward.5} parent=0 // loop_exit
    _

// kernel: text_encoder_forward.4
$region0: #{text_encoder_forward.4}
  #allocation0 [shape = 'u32[]', space=smem, size = 0x4, offset = 0x4, fixed_abs, tag = 'smem constant byte address 0x4 - core index']
  #allocation1 [shape = 'u32[144,128]{1,0:T(1,128)}', space=vmem, size = 0x12000, scoped, tag = 'internal scratch']
  #allocation2 [shape = 'bf16[2,16,192]{2,1,0:T(16,128)(2,1)}', space=vmem, size = 0x4000, scoped, tag = 'scratch operand']
  #allocation3 [shape = 'f32[2,16,64]{2,1,0:T(8,128)}', space=vmem, size = 0x4000, scoped, tag = 'scratch operand']
  %s0 = inlined_call_operand.vmem [shape: bf16[4,16,64], index: 0, kind: input, shape index: {}]
  %s1 = inlined_call_operand.vmem [shape: f32[1,64], index: 1, kind: input, shape index: {}]
  %s2 = inlined_call_operand.vmem [shape: f32[1,64], index: 2, kind: input, shape index: {}]
  %s3 = inlined_call_operand.vmem [shape: bf16[64,192], index: 3, kind: input, shape index: {}]
  %s4 = inlined_call_operand.vmem [shape: f32[1,192], index: 4, kind: input, shape index: {}]
  %s5 = inlined_call_operand.vmem [shape: bf16[4,16,64], index: 5, kind: output, shape index: {}]
  %s6 = sld [smem:[#allocation0]]
  $region53: #{text_encoder_forward.4} parent=0
    _
  %s8 = ssub.s32 1, %s6
  %s9 = scalar_select 0, %s8, %s6
  loop: start=0, step=1, limit=4
  $region2: #{text_encoder_forward.4} parent=0 // loop_pre_header
    _
  $region3: #{text_encoder_forward.4} parent=0 // loop_header
    %s11 = sphi 0, %s15
    %p12 = scmp.ge.s32.totalorder %s11, 4
    %s21 = sphi 0, %s23
    %s24 = sphi 0, %s21
    %s25 = sphi 0, %s24
    %s41 = sphi 0, %s25
    %s45 = sphi 0, %s45
    %s47 = sphi 0, %s45
    %s48 = sphi 0, %s47
    %s62 = sphi 0, %s48
    %s66 = sphi 0, %s66
    %s68 = sphi 0, %s66
    %s69 = sphi 0, %s68
    %s83 = sphi 0, %s69
    %s87 = sphi 0, %s87
    %s89 = sphi 0, %s87
    %s90 = sphi 0, %s89
    %s104 = sphi 0, %s90
    %s108 = sphi 0, %s108
    %s110 = sphi 0, %s108
    %s111 = sphi 0, %s110
    %s125 = sphi 0, %s111
    %s131 = sphi 0, %s133
    %s134 = sphi 0, %s131
    %s135 = sphi 0, %s134
    %s151 = sphi 0, %s135
  $region4: #{text_encoder_forward.4} parent=0 // loop_header_branch
    %14 = sbr.rel (%p12) target = $region8
  $region5: #{text_encoder_forward.4} parent=0 // loop_body
    %s16 = ssub.s32 %s11, 1
    %s17 = ssub.s32 %s11, 2
    %s18 = sadd.s32 %s11, 1
    %s19 = ssub.s32 %s11, %s18
    %p20 = scmp.eq.s32.totalorder %s19, 0
    %s22 = sadd.s32 %s21, 1
    %s23 = scalar_select %p20, %s21, %s22
    %p26 = pneg %p20
    %p27 = scmp.eq.s32.totalorder %s11, 1
    %p28 = por %p26, %p27
    %p29 = scmp.ne.s32.totalorder %s21, %s24
    %p30 = scmp.eq.s32.totalorder %s11, 0
    %p31 = por %p29, %p30
    %p32 = scmp.ne.s32.totalorder %s21, %s24
    %p33 = scmp.eq.s32.totalorder %s16, 1
    %p34 = por %p32, %p33
    %p35 = scmp.ne.s32.totalorder %s24, %s25
    %p36 = scmp.eq.s32.totalorder %s16, 0
    %p37 = por %p35, %p36
    %p38 = scmp.ne.s32.totalorder %s24, %s25
    %p39 = scmp.eq.s32.totalorder %s17, 1
    %p40 = por %p38, %p39
    %p42 = scmp.ne.s32.totalorder %s25, %s41
    %p43 = scmp.eq.s32.totalorder %s17, 0
    %p44 = por %p42, %p43
    %s46 = sadd.s32 %s45, 1
    %p49 = scmp.eq.s32.totalorder %s11, 1
    %p50 = scmp.ne.s32.totalorder %s45, %s47
    %p51 = scmp.eq.s32.totalorder %s11, 0
    %p52 = por %p50, %p51
    %p53 = scmp.ne.s32.totalorder %s45, %s47
    %p54 = scmp.eq.s32.totalorder %s16, 1
    %p55 = por %p53, %p54
    %p56 = scmp.ne.s32.totalorder %s47, %s48
    %p57 = scmp.eq.s32.totalorder %s16, 0
    %p58 = por %p56, %p57
    %p59 = scmp.ne.s32.totalorder %s47, %s48
    %p60 = scmp.eq.s32.totalorder %s17, 1
    %p61 = por %p59, %p60
    %p63 = scmp.ne.s32.totalorder %s48, %s62
    %p64 = scmp.eq.s32.totalorder %s17, 0
    %p65 = por %p63, %p64
    %s67 = sadd.s32 %s66, 1
    %p70 = scmp.eq.s32.totalorder %s11, 1
    %p71 = scmp.ne.s32.totalorder %s66, %s68
    %p72 = scmp.eq.s32.totalorder %s11, 0
    %p73 = por %p71, %p72
    %p74 = scmp.ne.s32.totalorder %s66, %s68
    %p75 = scmp.eq.s32.totalorder %s16, 1
    %p76 = por %p74, %p75
    %p77 = scmp.ne.s32.totalorder %s68, %s69
    %p78 = scmp.eq.s32.totalorder %s16, 0
    %p79 = por %p77, %p78
    %p80 = scmp.ne.s32.totalorder %s68, %s69
    %p81 = scmp.eq.s32.totalorder %s17, 1
    %p82 = por %p80, %p81
    %p84 = scmp.ne.s32.totalorder %s69, %s83
    %p85 = scmp.eq.s32.totalorder %s17, 0
    %p86 = por %p84, %p85
    %s88 = sadd.s32 %s87, 1
    %p91 = scmp.eq.s32.totalorder %s11, 1
    %p92 = scmp.ne.s32.totalorder %s87, %s89
    %p93 = scmp.eq.s32.totalorder %s11, 0
    %p94 = por %p92, %p93
    %p95 = scmp.ne.s32.totalorder %s87, %s89
    %p96 = scmp.eq.s32.totalorder %s16, 1
    %p97 = por %p95, %p96
    %p98 = scmp.ne.s32.totalorder %s89, %s90
    %p99 = scmp.eq.s32.totalorder %s16, 0
    %p100 = por %p98, %p99
    %p101 = scmp.ne.s32.totalorder %s89, %s90
    %p102 = scmp.eq.s32.totalorder %s17, 1
    %p103 = por %p101, %p102
    %p105 = scmp.ne.s32.totalorder %s90, %s104
    %p106 = scmp.eq.s32.totalorder %s17, 0
    %p107 = por %p105, %p106
    %s109 = sadd.s32 %s108, 1
    %p112 = scmp.eq.s32.totalorder %s11, 1
    %p113 = scmp.ne.s32.totalorder %s108, %s110
    %p114 = scmp.eq.s32.totalorder %s11, 0
    %p115 = por %p113, %p114
    %p116 = scmp.ne.s32.totalorder %s108, %s110
    %p117 = scmp.eq.s32.totalorder %s16, 1
    %p118 = por %p116, %p117
    %p119 = scmp.ne.s32.totalorder %s110, %s111
    %p120 = scmp.eq.s32.totalorder %s16, 0
    %p121 = por %p119, %p120
    %p122 = scmp.ne.s32.totalorder %s110, %s111
    %p123 = scmp.eq.s32.totalorder %s17, 1
    %p124 = por %p122, %p123
    %p126 = scmp.ne.s32.totalorder %s111, %s125
    %p127 = scmp.eq.s32.totalorder %s17, 0
    %p128 = por %p126, %p127
    %s129 = ssub.s32 %s11, %s18
    %p130 = scmp.eq.s32.totalorder %s129, 0
    %s132 = sadd.s32 %s131, 1
    %s133 = scalar_select %p130, %s131, %s132
    %p136 = pneg %p130
    %p137 = scmp.eq.s32.totalorder %s11, 1
    %p138 = por %p136, %p137
    %p139 = scmp.ne.s32.totalorder %s131, %s134
    %p140 = scmp.eq.s32.totalorder %s11, 0
    %p141 = por %p139, %p140
    %p142 = scmp.ne.s32.totalorder %s131, %s134
    %p143 = scmp.eq.s32.totalorder %s16, 1
    %p144 = por %p142, %p143
    %p145 = scmp.ne.s32.totalorder %s134, %s135
    %p146 = scmp.eq.s32.totalorder %s16, 0
    %p147 = por %p145, %p146
    %p148 = scmp.ne.s32.totalorder %s134, %s135
    %p149 = scmp.eq.s32.totalorder %s17, 1
    %p150 = por %p148, %p149
    %p152 = scmp.ne.s32.totalorder %s135, %s151
    %p153 = scmp.eq.s32.totalorder %s17, 0
    %p154 = por %p152, %p153
    %p155 = scmp.le.s32.totalorder 1, %s11
    %p156 = scmp.lt.s32.totalorder %s11, 3
    %p157 = pnand %p155, %p156
    %p158 = pneg %p157
    // Predicated region
    $region9: #{text_encoder_forward.4} parent=5 // pred_check
      _
    $region10: #{text_encoder_forward.4} parent=5 // pred_check_branch
      %160 = sbr.rel (%p157) target = $region12
    $region11: #{text_encoder_forward.4} parent=5 // pred_region
      %s161 = ssub.s32 %s11, 1
      // Predicated region
      $region13: #{text_encoder_forward.4} parent=11 // pred_check
        %p162 = pneg %p58
      $region14: #{text_encoder_forward.4} parent=11 // pred_check_branch
        %164 = sbr.rel (%p162) target = $region16
      $region15: #{text_encoder_forward.4} parent=11 // pred_region
        _
      $region16: #{text_encoder_forward.4} parent=11 // pred_fallthru
        _
      // Predicated region
      $region17: #{text_encoder_forward.4} parent=11 // pred_check
        %p165 = pneg %p79
      $region18: #{text_encoder_forward.4} parent=11 // pred_check_branch
        %167 = sbr.rel (%p165) target = $region20
      $region19: #{text_encoder_forward.4} parent=11 // pred_region
        _
      $region20: #{text_encoder_forward.4} parent=11 // pred_fallthru
        _
      // Predicated region
      $region21: #{text_encoder_forward.4} parent=11 // pred_check
        %p168 = pneg %p100
      $region22: #{text_encoder_forward.4} parent=11 // pred_check_branch
        %170 = sbr.rel (%p168) target = $region24
      $region23: #{text_encoder_forward.4} parent=11 // pred_region
        _
      $region24: #{text_encoder_forward.4} parent=11 // pred_fallthru
        _
      // Predicated region
      $region25: #{text_encoder_forward.4} parent=11 // pred_check
        %p171 = pneg %p121
      $region26: #{text_encoder_forward.4} parent=11 // pred_check_branch
        %173 = sbr.rel (%p171) target = $region28
      $region27: #{text_encoder_forward.4} parent=11 // pred_region
        _
      $region28: #{text_encoder_forward.4} parent=11 // pred_fallthru
        _
    $region12: #{text_encoder_forward.4} parent=5 // pred_fallthru
      _
    %p174 = scmp.lt.s32.totalorder %s11, 2
    // Predicated region
    $region29: #{text_encoder_forward.4} parent=5 // pred_check
      %p175 = pneg %p174
    $region30: #{text_encoder_forward.4} parent=5 // pred_check_branch
      %177 = sbr.rel (%p175) target = $region32
    $region31: #{text_encoder_forward.4} parent=5 // pred_region
      // Predicated region
      $region33: #{text_encoder_forward.4} parent=31 // pred_check
        %p178 = pneg %p31
      $region34: #{text_encoder_forward.4} parent=31 // pred_check_branch
        %180 = sbr.rel (%p178) target = $region36
      $region35: #{text_encoder_forward.4} parent=31 // pred_region
        %s181 = smul.u32 2, %s11
        %p182 = scmp.lt.s32.totalorder %s181, 3
        %s183 = scalar_select %p182, %s181, 3
        %s184 = smul.addr %s183, 2
        %s185 = smul.addr %s184, 4
        %s186 = scalar_lea.vmem %s0, %s185
        %s187 = smul.u32 2, %s11
      $region36: #{text_encoder_forward.4} parent=31 // pred_fallthru
        _
    $region32: #{text_encoder_forward.4} parent=5 // pred_fallthru
      _
    %p188 = scmp.le.s32.totalorder 1, %s11
    %p189 = scmp.lt.s32.totalorder %s11, 3
    %p190 = pnand %p188, %p189
    %p191 = pneg %p190
    // Predicated region
    $region37: #{text_encoder_forward.4} parent=5 // pred_check
      _
    $region38: #{text_encoder_forward.4} parent=5 // pred_check_branch
      %193 = sbr.rel (%p190) target = $region40
    $region39: #{text_encoder_forward.4} parent=5 // pred_region
      %s194 = ssub.s32 %s11, 1
      %s195 = smul.u32 2, %s16
      %p196 = scmp.lt.s32.totalorder %s195, 3
      %s197 = scalar_select %p196, %s195, 3
      %s198 = smul.addr %s197, 2
      %s199 = smul.addr %s198, 4
      %s200 = scalar_lea.vmem %s0, %s199
      %p201 = pneg %p37
      %p202 = pneg %p34
      %p203 = pneg %p58
      %p204 = pneg %p55
      %p205 = pneg %p79
      %p206 = pneg %p76
      %p207 = pneg %p100
      %p208 = pneg %p97
      %p209 = pneg %p121
      %p210 = pneg %p118
      %p211 = pneg %p147
      %p212 = pneg %p144
      %s213 = smul.u32 2, %s16
      %p214 = scmp.lt.s32.totalorder %s213, 3
      %s215 = scalar_select %p214, %s213, 3
      %s216 = smul.addr %s215, 2
      %s217 = smul.addr %s216, 4
      %s218 = scalar_lea.vmem %s5, %s217
      %s219 = smul.u32 2, %s16
      %p220 = scmp.lt.s32.totalorder %s219, 3
      %s221 = scalar_select %p220, %s219, 3
      %s222 = smul.addr %s221, 2
      %s223 = smul.addr %s222, 4
      %s224 = scalar_lea.vmem %s0, %s223
      %s225 = smul.u32 2, %s16
      %s226 = smul.u32 2, %s16
      %p227 = scmp.lt.s32.totalorder %s226, 3
      %s228 = scalar_select %p227, %s226, 3
      %s229 = smul.addr %s228, 2
      %s230 = smul.addr %s229, 4
      %s231 = scalar_lea.vmem %s5, %s230
      %s232 = smul.u32 2, %s16
      %v234 = vlaneseq
      %v235 = vshrl.u32 %v234, 7
      %v236 = vadd.s32 %v235, 8
      %v237 = vlaneseq
      %v238 = vand.u32 %v237, 127
      %vm239 = vcmp.ge.s32.totalorder %v235, %v238
      %vm240 = vcmp.ge.s32.totalorder %v236, %v238
      %v241 = vsel %vm239, 0.0, -1e+09
      %v242 = vsel %vm240, 0.0, -1e+09
      %v243 = vld [vmem:[%s1] sm:$0x1]
      %v244 = vld [vmem:[%s2] sm:$0x1]
      %v245 = vld [vmem:[%s3] sm:$0xff]
      %v246 = vld [vmem:[%s3 + $0x8] sm:$0xff]
      %v247 = vld [vmem:[%s3 + $0x10] sm:$0xff]
      %v248 = vld [vmem:[%s3 + $0x18] sm:$0xff]
      %v249 = vld [vmem:[%s3 + $0x20] sm:$0xff]
      %v250 = vld [vmem:[%s3 + $0x28] sm:$0xff]
      %v251 = vld [vmem:[%s3 + $0x30] sm:$0xff]
      %v252 = vld [vmem:[%s3 + $0x38] sm:$0xff]
      %v253 = vld [vmem:[%s4] sm:$0x3]
      %v254 = vld [vmem:[%s224] sm:$0xf]
      %v255 = vld [vmem:[%s224 + $0x4] sm:$0xf]
      %v256 = vunpack.c.l.bf16 %v254
      %v257 = vunpack.c.l.bf16 %v255
      %vm258 = vcmask 523264
      %v259 = vsel %vm258, %v256, 0.0
      %260 = vadd.xlane.f32.xlu0 %v259
      %v261 = vpop.xlane.xlu0 %260
      %v262 = vsel %vm258, %v257, 0.0
      %263 = vadd.xlane.f32.xlu0 %v262
      %v264 = vpop.xlane.xlu0 %263
      %v265 = vrcp.pop 64.0
      %v266 = vmul.f32 %v261, %v265
      %v267 = vmul.f32 %v264, %v265
      %v268 = vsub.f32 %v256, %v266
      %v269 = vsub.f32 %v257, %v267
      %v270 = vmul.f32 %v268, %v268
      %v271 = vmul.f32 %v269, %v269
      %v272 = vsel %vm258, %v270, 0.0
      %273 = vadd.xlane.f32.xlu0 %v272
      %v274 = vpop.xlane.xlu0 %273
      %v275 = vsel %vm258, %v271, 0.0
      %276 = vadd.xlane.f32.xlu0 %v275
      %v277 = vpop.xlane.xlu0 %276
      %v278 = vmul.f32 %v274, %v265
      %v279 = vmul.f32 %v277, %v265
      %v280 = vadd.f32 %v278, 1e-05
      %v281 = vadd.f32 %v279, 1e-05
      %v282 = vrsqrt.pop %v280
      %v283 = vrsqrt.pop %v281
      %v284 = vmul.f32 %v268, %v282
      %v285 = vmul.f32 %v269, %v283
      %v287 = vlaneseq
      %v288 = vshrl.u32 %v287, 7
      %v289 = vsub.s32 0, %v288
      %v290 = vrot.slane %v243, %v289
      %v292 = vmul.f32 %v284, %v290
      %v293 = vmul.f32 %v285, %v290
      %v295 = vlaneseq
      %v296 = vshrl.u32 %v295, 7
      %v297 = vsub.s32 0, %v296
      %v298 = vrot.slane %v244, %v297
      %v300 = vadd.f32 %v292, %v298
      %v301 = vadd.f32 %v293, %v298
      %v302 = vpack.c.bf16 %v301, %v300
      %v304 = vlaneseq
      %v305 = vshrl.u32 %v304, 7
      %v306 = vsub.s32 0, %v305
      %v307 = vrot.slane %v253, %v306
      %v308 = vlaneseq
      %v309 = vshrl.u32 %v308, 7
      %v310 = vsub.s32 1, %v309
      %v311 = vrot.slane %v253, %v310
      %v322 = vunpack.c.l.b16 %v245
      %v323 = vunpack.c.h.b16 %v245
      %v324 = vunpack.c.l.b16 %v246
      %v325 = vunpack.c.h.b16 %v246
      %v326 = vunpack.c.l.b16 %v247
      %v327 = vunpack.c.h.b16 %v247
      %v328 = vunpack.c.l.b16 %v248
      %v329 = vunpack.c.h.b16 %v248
      %v330 = vunpack.c.l.b16 %v249
      %v331 = vunpack.c.h.b16 %v249
      %v332 = vunpack.c.l.b16 %v250
      %v333 = vunpack.c.h.b16 %v250
      %v334 = vunpack.c.l.b16 %v251
      %v335 = vunpack.c.h.b16 %v251
      %v336 = vunpack.c.l.b16 %v252
      %v337 = vunpack.c.h.b16 %v252
      %v338 = vpack.c.b16 %v324, %v322
      %v339 = vpack.c.b16 %v325, %v323
      %v340 = vpack.c.b16 %v328, %v326
      %v341 = vpack.c.b16 %v329, %v327
      %v342 = vpack.c.b16 %v332, %v330
      %v343 = vpack.c.b16 %v333, %v331
      %v344 = vpack.c.b16 %v336, %v334
      %v345 = vpack.c.b16 %v337, %v335
      %v355 = vsel %vm258, %v302, 0
      %357 = vmatprep.subr.bf16.mxu0 %v339
      %358 = vmatpush1.bf16.msra.mxu0 %v338
      %359 = vmatprep.subr.bf16.mxu0 %v341
      %360 = vmatpush1.bf16.msra.mxu0 %v340
      %361 = vmatprep.subr.bf16.mxu0 %v343
      %362 = vmatpush1.bf16.msra.mxu0 %v342
      %363 = vmatprep.subr.bf16.mxu0 %v345
      %364 = vmatpush1.bf16.msra.mxu0 %v344
      %365 = vmatprep.subr.bf16.mxu0 0
      %366 = vmatpush1.bf16.msra.mxu0 0
      %367 = vmatprep.subr.bf16.mxu0 0
      %368 = vmatpush1.bf16.msra.mxu0 0
      %369 = vmatprep.subr.bf16.mxu0 0
      %370 = vmatpush1.bf16.msra.mxu0 0
      %371 = vmatprep.subr.bf16.mxu0 0
      %372 = vmatpush1.bf16.msra.mxu0 0
      %373 = vmatprep.subr.bf16.mxu0 0
      %374 = vmatpush1.bf16.msra.mxu0 0
      %375 = vmatprep.subr.bf16.mxu0 0
      %376 = vmatpush1.bf16.msra.mxu0 0
      %377 = vmatprep.subr.bf16.mxu0 0
      %378 = vmatpush1.bf16.msra.mxu0 0
      %379 = vmatprep.subr.bf16.mxu0 0
      %380 = vmatpush1.bf16.msra.mxu0 0
      %381 = vmatprep.subr.bf16.mxu0 0
      %382 = vmatpush1.bf16.msra.mxu0 0
      %383 = vmatprep.subr.bf16.mxu0 0
      %384 = vmatpush1.bf16.msra.mxu0 0
      %385 = vmatprep.subr.bf16.mxu0 0
      %386 = vmatpush1.bf16.msra.mxu0 0
      %387 = vmatprep.subr.bf16.mxu0 0
      %388 = vmatpush1.bf16.msra.mxu0 0
      %389 = vmatprep.mubr.bf16.mxu0 0
      %390 = vmatmul.mubr.bf16.gmra.mrb[0].mxu0 %v355
      %v391 = vpop.f32.mrb[0].mxu0
      %v392 = vadd.f32 %v307, %v391
      %v393 = vpop.f32.mrb[0].mxu0
      %v394 = vadd.f32 %v311, %v393
      %v395 = vpop.f32.mrb[0].mxu0
      %v396 = vadd.f32 %v307, %v395
      %v397 = vpop.f32.mrb[0].mxu0
      %v398 = vadd.f32 %v311, %v397
      %399 = vdwg.mxu0
      %v400 = vpack.c.bf16 %v396, %v392
      %v401 = vpack.c.bf16 %v398, %v394
      %402 = vst [vmem:[#allocation2] sm:$0xff] %v400
      %403 = vst.msk [vmem:[#allocation2 + $0x8] sm:$0xff] %vm258, %v401
      %s404 = scalar_lea.vmem %s224, 8
      %v405 = vld [vmem:[%s404] sm:$0xf]
      %v406 = vld [vmem:[%s404 + $0x4] sm:$0xf]
      %v407 = vunpack.c.l.bf16 %v405
      %v408 = vunpack.c.l.bf16 %v406
      %v409 = vsel %vm258, %v407, 0.0
      %410 = vadd.xlane.f32.xlu0 %v409
      %v411 = vpop.xlane.xlu0 %410
      %v412 = vsel %vm258, %v408, 0.0
      %413 = vadd.xlane.f32.xlu0 %v412
      %v414 = vpop.xlane.xlu0 %413
      %v415 = vmul.f32 %v411, %v265
      %v416 = vmul.f32 %v414, %v265
      %v417 = vsub.f32 %v407, %v415
      %v418 = vsub.f32 %v408, %v416
      %v419 = vmul.f32 %v417, %v417
      %v420 = vmul.f32 %v418, %v418
      %v421 = vsel %vm258, %v419, 0.0
      %422 = vadd.xlane.f32.xlu0 %v421
      %v423 = vpop.xlane.xlu0 %422
      %v424 = vsel %vm258, %v420, 0.0
      %425 = vadd.xlane.f32.xlu0 %v424
      %v426 = vpop.xlane.xlu0 %425
      %v427 = vmul.f32 %v423, %v265
      %v428 = vmul.f32 %v426, %v265
      %v429 = vadd.f32 %v427, 1e-05
      %v430 = vadd.f32 %v428, 1e-05
      %v431 = vrsqrt.pop %v429
      %v432 = vrsqrt.pop %v430
      %v433 = vmul.f32 %v417, %v431
      %v434 = vmul.f32 %v418, %v432
      %v435 = vmul.f32 %v433, %v290
      %v436 = vmul.f32 %v434, %v290
      %v437 = vadd.f32 %v435, %v298
      %v438 = vadd.f32 %v436, %v298
      %v439 = vpack.c.bf16 %v438, %v437
      %v441 = vsel %vm258, %v439, 0
      %443 = vmatprep.subr.bf16.mxu0 %v339
      %444 = vmatpush1.bf16.msra.mxu0 %v338
      %445 = vmatprep.subr.bf16.mxu0 %v341
      %446 = vmatpush1.bf16.msra.mxu0 %v340
      %447 = vmatprep.subr.bf16.mxu0 %v343
      %448 = vmatpush1.bf16.msra.mxu0 %v342
      %449 = vmatprep.subr.bf16.mxu0 %v345
      %450 = vmatpush1.bf16.msra.mxu0 %v344
      %451 = vmatprep.subr.bf16.mxu0 0
      %452 = vmatpush1.bf16.msra.mxu0 0
      %453 = vmatprep.subr.bf16.mxu0 0
      %454 = vmatpush1.bf16.msra.mxu0 0
      %455 = vmatprep.subr.bf16.mxu0 0
      %456 = vmatpush1.bf16.msra.mxu0 0
      %457 = vmatprep.subr.bf16.mxu0 0
      %458 = vmatpush1.bf16.msra.mxu0 0
      %459 = vmatprep.subr.bf16.mxu0 0
      %460 = vmatpush1.bf16.msra.mxu0 0
      %461 = vmatprep.subr.bf16.mxu0 0
      %462 = vmatpush1.bf16.msra.mxu0 0
      %463 = vmatprep.subr.bf16.mxu0 0
      %464 = vmatpush1.bf16.msra.mxu0 0
      %465 = vmatprep.subr.bf16.mxu0 0
      %466 = vmatpush1.bf16.msra.mxu0 0
      %467 = vmatprep.subr.bf16.mxu0 0
      %468 = vmatpush1.bf16.msra.mxu0 0
      %469 = vmatprep.subr.bf16.mxu0 0
      %470 = vmatpush1.bf16.msra.mxu0 0
      %471 = vmatprep.subr.bf16.mxu0 0
      %472 = vmatpush1.bf16.msra.mxu0 0
      %473 = vmatprep.subr.bf16.mxu0 0
      %474 = vmatpush1.bf16.msra.mxu0 0
      %475 = vmatprep.mubr.bf16.mxu0 0
      %476 = vmatmul.mubr.bf16.gmra.mrb[0].mxu0 %v441
      %v477 = vpop.f32.mrb[0].mxu0
      %v478 = vadd.f32 %v307, %v477
      %v479 = vpop.f32.mrb[0].mxu0
      %v480 = vadd.f32 %v311, %v479
      %v481 = vpop.f32.mrb[0].mxu0
      %v482 = vadd.f32 %v307, %v481
      %v483 = vpop.f32.mrb[0].mxu0
      %v484 = vadd.f32 %v311, %v483
      %485 = vdwg.mxu0
      %v486 = vpack.c.bf16 %v482, %v478
      %v487 = vpack.c.bf16 %v484, %v480
      %s488 = scalar_lea.vmem [#allocation2], 16
      %489 = vst [vmem:[%s488] sm:$0xff] %v486
      %490 = vst.msk [vmem:[%s488 + $0x8] sm:$0xff] %vm258, %v487
      %v491 = vld [vmem:[#allocation2] sm:$0xff]
      %v492 = vld [vmem:[#allocation2 + $0x10] sm:$0xff]
      %v493 = vld [vmem:[#allocation2 + $0x8] sm:$0xff]
      %v494 = vld [vmem:[#allocation2 + $0x18] sm:$0xff]
      %496 = vrot.lane.b32.xlu0 %v491, 64
      %v497 = vpop.permute.xlu0 %496
      %vm498 = vcmask 130048
      %v500 = vsel %vm498, %v491, 0
      %v503 = vsel %vm498, %v497, 0
      %505 = vmatprep.subr.bf16.mxu0 0
      %506 = vmatpush1.bf16.xpose.msra.mxu0 %v503
      %507 = vmatprep.subr.bf16.mxu0 0
      %508 = vmatpush1.bf16.xpose.msra.mxu0 0
      %509 = vmatprep.subr.bf16.mxu0 0
      %510 = vmatpush1.bf16.xpose.msra.mxu0 0
      %511 = vmatprep.subr.bf16.mxu0 0
      %512 = vmatpush1.bf16.xpose.msra.mxu0 0
      %513 = vmatprep.subr.bf16.mxu0 0
      %514 = vmatpush1.bf16.xpose.msra.mxu0 0
      %515 = vmatprep.subr.bf16.mxu0 0
      %516 = vmatpush1.bf16.xpose.msra.mxu0 0
      %517 = vmatprep.subr.bf16.mxu0 0
      %518 = vmatpush1.bf16.xpose.msra.mxu0 0
      %519 = vmatprep.subr.bf16.mxu0 0
      %520 = vmatpush1.bf16.xpose.msra.mxu0 0
      %521 = vmatprep.subr.bf16.mxu0 0
      %522 = vmatpush1.bf16.xpose.msra.mxu0 0
      %523 = vmatprep.subr.bf16.mxu0 0
      %524 = vmatpush1.bf16.xpose.msra.mxu0 0
      %525 = vmatprep.subr.bf16.mxu0 0
      %526 = vmatpush1.bf16.xpose.msra.mxu0 0
      %527 = vmatprep.subr.bf16.mxu0 0
      %528 = vmatpush1.bf16.xpose.msra.mxu0 0
      %529 = vmatprep.subr.bf16.mxu0 0
      %530 = vmatpush1.bf16.xpose.msra.mxu0 0
      %531 = vmatprep.subr.bf16.mxu0 0
      %532 = vmatpush1.bf16.xpose.msra.mxu0 0
      %533 = vmatprep.subr.bf16.mxu0 0
      %534 = vmatpush1.bf16.xpose.msra.mxu0 0
      %535 = vmatprep.subr.bf16.mxu0 0
      %536 = vmatpush1.bf16.xpose.msra.mxu0 0
      %537 = vmatprep.mubr.bf16.mxu0 0
      %538 = vmatmul.mubr.bf16.gmra.mrb[0].mxu0 %v500
      %v539 = vpop.f32.mrb[0].mxu0
      %v540 = vadd.f32 0.0, %v539
      %v541 = vpop.f32.mrb[0].mxu0
      %v542 = vpop.f32.mrb[0].mxu0
      %v543 = vadd.f32 0.0, %v542
      %v544 = vpop.f32.mrb[0].mxu0
      %545 = vdwg.mxu0
      %547 = vrot.lane.b32.xlu0 %v492, 64
      %v548 = vpop.permute.xlu0 %547
      %v550 = vsel %vm498, %v492, 0
      %v553 = vsel %vm498, %v548, 0
      %555 = vmatprep.subr.bf16.mxu0 0
      %556 = vmatpush1.bf16.xpose.msra.mxu0 %v553
      %557 = vmatprep.subr.bf16.mxu0 0
      %558 = vmatpush1.bf16.xpose.msra.mxu0 0
      %559 = vmatprep.subr.bf16.mxu0 0
      %560 = vmatpush1.bf16.xpose.msra.mxu0 0
      %561 = vmatprep.subr.bf16.mxu0 0
      %562 = vmatpush1.bf16.xpose.msra.mxu0 0
      %563 = vmatprep.subr.bf16.mxu0 0
      %564 = vmatpush1.bf16.xpose.msra.mxu0 0
      %565 = vmatprep.subr.bf16.mxu0 0
      %566 = vmatpush1.bf16.xpose.msra.mxu0 0
      %567 = vmatprep.subr.bf16.mxu0 0
      %568 = vmatpush1.bf16.xpose.msra.mxu0 0
      %569 = vmatprep.subr.bf16.mxu0 0
      %570 = vmatpush1.bf16.xpose.msra.mxu0 0
      %571 = vmatprep.subr.bf16.mxu0 0
      %572 = vmatpush1.bf16.xpose.msra.mxu0 0
      %573 = vmatprep.subr.bf16.mxu0 0
      %574 = vmatpush1.bf16.xpose.msra.mxu0 0
      %575 = vmatprep.subr.bf16.mxu0 0
      %576 = vmatpush1.bf16.xpose.msra.mxu0 0
      %577 = vmatprep.subr.bf16.mxu0 0
      %578 = vmatpush1.bf16.xpose.msra.mxu0 0
      %579 = vmatprep.subr.bf16.mxu0 0
      %580 = vmatpush1.bf16.xpose.msra.mxu0 0
      %581 = vmatprep.subr.bf16.mxu0 0
      %582 = vmatpush1.bf16.xpose.msra.mxu0 0
      %583 = vmatprep.subr.bf16.mxu0 0
      %584 = vmatpush1.bf16.xpose.msra.mxu0 0
      %585 = vmatprep.subr.bf16.mxu0 0
      %586 = vmatpush1.bf16.xpose.msra.mxu0 0
      %587 = vmatprep.mubr.bf16.mxu0 0
      %588 = vmatmul.mubr.bf16.gmra.mrb[0].mxu0 %v550
      %v589 = vpop.f32.mrb[0].mxu0
      %v590 = vadd.f32 0.0, %v589
      %v591 = vpop.f32.mrb[0].mxu0
      %v592 = vpop.f32.mrb[0].mxu0
      %v593 = vadd.f32 0.0, %v592
      %v594 = vpop.f32.mrb[0].mxu0
      %595 = vdwg.mxu0
      %v596 = vmul.f32 %v540, 0.25
      %v597 = vmul.f32 %v543, 0.25
      %v598 = vmul.f32 %v590, 0.25
      %v599 = vmul.f32 %v593, 0.25
      %v600 = vadd.f32 %v596, %v241
      %v601 = vadd.f32 %v597, %v242
      %v602 = vadd.f32 %v598, %v241
      %v603 = vadd.f32 %v599, %v242
      %v604 = vsel %vm498, %v600, -inf
      %605 = vmax.xlane.f32.xlu0 %v604
      %v606 = vpop.xlane.xlu0 %605
      %v607 = vsel %vm498, %v601, -inf
      %608 = vmax.xlane.f32.xlu0 %v607
      %v609 = vpop.xlane.xlu0 %608
      %v610 = vsel %vm498, %v602, -inf
      %611 = vmax.xlane.f32.xlu0 %v610
      %v612 = vpop.xlane.xlu0 %611
      %v613 = vsel %vm498, %v603, -inf
      %614 = vmax.xlane.f32.xlu0 %v613
      %v615 = vpop.xlane.xlu0 %614
      %v616 = vsub.f32 %v600, %v606
      %v617 = vsub.f32 %v601, %v609
      %v618 = vsub.f32 %v602, %v612
      %v619 = vsub.f32 %v603, %v615
      %v620 = vmul.f32 %v616, 1.442695
      %v621 = vpow.pop %v620
      %v622 = vmul.f32 %v617, 1.442695
      %v623 = vpow.pop %v622
      %v624 = vmul.f32 %v618, 1.442695
      %v625 = vpow.pop %v624
      %v626 = vmul.f32 %v619, 1.442695
      %v627 = vpow.pop %v626
      %v628 = vsel %vm498, %v621, 0.0
      %629 = vadd.xlane.f32.xlu0 %v628
      %v630 = vpop.xlane.xlu0 %629
      %v631 = vsel %vm498, %v623, 0.0
      %632 = vadd.xlane.f32.xlu0 %v631
      %v633 = vpop.xlane.xlu0 %632
      %v634 = vsel %vm498, %v625, 0.0
      %635 = vadd.xlane.f32.xlu0 %v634
      %v636 = vpop.xlane.xlu0 %635
      %v637 = vsel %vm498, %v627, 0.0
      %638 = vadd.xlane.f32.xlu0 %v637
      %v639 = vpop.xlane.xlu0 %638
      %v640 = vrcp.pop %v630
      %v641 = vrcp.pop %v633
      %v642 = vrcp.pop %v636
      %v643 = vrcp.pop %v639
      %v644 = vmul.f32 %v621, %v640
      %v645 = vmul.f32 %v623, %v641
      %v646 = vmul.f32 %v625, %v642
      %v647 = vmul.f32 %v627, %v643
      %v648 = vpack.c.bf16 %v645, %v644
      %v649 = vpack.c.bf16 %v647, %v646
      %v651 = vsel %vm498, %v648, 0
      %653 = vmatprep.subr.bf16.mxu0 0
      %654 = vmatpush1.bf16.msra.mxu0 %v493
      %655 = vmatprep.subr.bf16.mxu0 0
      %656 = vmatpush1.bf16.msra.mxu0 0
      %657 = vmatprep.subr.bf16.mxu0 0
      %658 = vmatpush1.bf16.msra.mxu0 0
      %659 = vmatprep.subr.bf16.mxu0 0
      %660 = vmatpush1.bf16.msra.mxu0 0
      %661 = vmatprep.subr.bf16.mxu0 0
      %662 = vmatpush1.bf16.msra.mxu0 0
      %663 = vmatprep.subr.bf16.mxu0 0
      %664 = vmatpush1.bf16.msra.mxu0 0
      %665 = vmatprep.subr.bf16.mxu0 0
      %666 = vmatpush1.bf16.msra.mxu0 0
      %667 = vmatprep.subr.bf16.mxu0 0
      %668 = vmatpush1.bf16.msra.mxu0 0
      %669 = vmatprep.subr.bf16.mxu0 0
      %670 = vmatpush1.bf16.msra.mxu0 0
      %671 = vmatprep.subr.bf16.mxu0 0
      %672 = vmatpush1.bf16.msra.mxu0 0
      %673 = vmatprep.subr.bf16.mxu0 0
      %674 = vmatpush1.bf16.msra.mxu0 0
      %675 = vmatprep.subr.bf16.mxu0 0
      %676 = vmatpush1.bf16.msra.mxu0 0
      %677 = vmatprep.subr.bf16.mxu0 0
      %678 = vmatpush1.bf16.msra.mxu0 0
      %679 = vmatprep.subr.bf16.mxu0 0
      %680 = vmatpush1.bf16.msra.mxu0 0
      %681 = vmatprep.subr.bf16.mxu0 0
      %682 = vmatpush1.bf16.msra.mxu0 0
      %683 = vmatprep.subr.bf16.mxu0 0
      %684 = vmatpush1.bf16.msra.mxu0 0
      %685 = vmatprep.mubr.bf16.mxu0 0
      %686 = vmatmul.mubr.bf16.gmra.mrb[0].mxu0 %v651
      %v687 = vpop.f32.mrb[0].mxu0
      %v688 = vadd.f32 0.0, %v687
      %v689 = vpop.f32.mrb[0].mxu0
      %v690 = vpop.f32.mrb[0].mxu0
      %v691 = vadd.f32 0.0, %v690
      %v692 = vpop.f32.mrb[0].mxu0
      %693 = vdwg.mxu0
      %v695 = vsel %vm498, %v649, 0
      %697 = vmatprep.subr.bf16.mxu0 0
      %698 = vmatpush1.bf16.msra.mxu0 %v494
      %699 = vmatprep.subr.bf16.mxu0 0
      %700 = vmatpush1.bf16.msra.mxu0 0
      %701 = vmatprep.subr.bf16.mxu0 0
      %702 = vmatpush1.bf16.msra.mxu0 0
      %703 = vmatprep.subr.bf16.mxu0 0
      %704 = vmatpush1.bf16.msra.mxu0 0
      %705 = vmatprep.subr.bf16.mxu0 0
      %706 = vmatpush1.bf16.msra.mxu0 0
      %707 = vmatprep.subr.bf16.mxu0 0
      %708 = vmatpush1.bf16.msra.mxu0 0
      %709 = vmatprep.subr.bf16.mxu0 0
      %710 = vmatpush1.bf16.msra.mxu0 0
      %711 = vmatprep.subr.bf16.mxu0 0
      %712 = vmatpush1.bf16.msra.mxu0 0
      %713 = vmatprep.subr.bf16.mxu0 0
      %714 = vmatpush1.bf16.msra.mxu0 0
      %715 = vmatprep.subr.bf16.mxu0 0
      %716 = vmatpush1.bf16.msra.mxu0 0
      %717 = vmatprep.subr.bf16.mxu0 0
      %718 = vmatpush1.bf16.msra.mxu0 0
      %719 = vmatprep.subr.bf16.mxu0 0
      %720 = vmatpush1.bf16.msra.mxu0 0
      %721 = vmatprep.subr.bf16.mxu0 0
      %722 = vmatpush1.bf16.msra.mxu0 0
      %723 = vmatprep.subr.bf16.mxu0 0
      %724 = vmatpush1.bf16.msra.mxu0 0
      %725 = vmatprep.subr.bf16.mxu0 0
      %726 = vmatpush1.bf16.msra.mxu0 0
      %727 = vmatprep.subr.bf16.mxu0 0
      %728 = vmatpush1.bf16.msra.mxu0 0
      %729 = vmatprep.mubr.bf16.mxu0 0
      %730 = vmatmul.mubr.bf16.gmra.mrb[0].mxu0 %v695
      %v731 = vpop.f32.mrb[0].mxu0
      %v732 = vadd.f32 0.0, %v731
      %v733 = vpop.f32.mrb[0].mxu0
      %v734 = vpop.f32.mrb[0].mxu0
      %v735 = vadd.f32 0.0, %v734
      %v736 = vpop.f32.mrb[0].mxu0
      %737 = vdwg.mxu0
      %738 = vst.msk [vmem:[#allocation3] sm:$0xff] %vm498, %v688
      %739 = vst.msk [vmem:[#allocation3 + $0x8] sm:$0xff] %vm498, %v691
      %740 = vst.msk [vmem:[#allocation3 + $0x10] sm:$0xff] %vm498, %v732
      %741 = vst.msk [vmem:[#allocation3 + $0x18] sm:$0xff] %vm498, %v735
      %v742 = vld [vmem:[#allocation2] sm:$0xff]
      %v743 = vld [vmem:[#allocation2 + $0x10] sm:$0xff]
      %v744 = vld [vmem:[#allocation2 + $0x8] sm:$0xff]
      %v745 = vld [vmem:[#allocation2 + $0x18] sm:$0xff]
      %747 = vrot.lane.b32.xlu0 %v742, 112
      %v748 = vpop.permute.xlu0 %747
      %749 = vrot.lane.b32.xlu0 %v742, 48
      %v750 = vpop.permute.xlu0 %749
      %v752 = vsel %vm498, %v748, 0
      %v755 = vsel %vm498, %v750, 0
      %757 = vmatprep.subr.bf16.mxu0 0
      %758 = vmatpush1.bf16.xpose.msra.mxu0 %v755
      %759 = vmatprep.subr.bf16.mxu0 0
      %760 = vmatpush1.bf16.xpose.msra.mxu0 0
      %761 = vmatprep.subr.bf16.mxu0 0
      %762 = vmatpush1.bf16.xpose.msra.mxu0 0
      %763 = vmatprep.subr.bf16.mxu0 0
      %764 = vmatpush1.bf16.xpose.msra.mxu0 0
      %765 = vmatprep.subr.bf16.mxu0 0
      %766 = vmatpush1.bf16.xpose.msra.mxu0 0
      %767 = vmatprep.subr.bf16.mxu0 0
      %768 = vmatpush1.bf16.xpose.msra.mxu0 0
      %769 = vmatprep.subr.bf16.mxu0 0
      %770 = vmatpush1.bf16.xpose.msra.mxu0 0
      %771 = vmatprep.subr.bf16.mxu0 0
      %772 = vmatpush1.bf16.xpose.msra.mxu0 0
      %773 = vmatprep.subr.bf16.mxu0 0
      %774 = vmatpush1.bf16.xpose.msra.mxu0 0
      %775 = vmatprep.subr.bf16.mxu0 0
      %776 = vmatpush1.bf16.xpose.msra.mxu0 0
      %777 = vmatprep.subr.bf16.mxu0 0
      %778 = vmatpush1.bf16.xpose.msra.mxu0 0
      %779 = vmatprep.subr.bf16.mxu0 0
      %780 = vmatpush1.bf16.xpose.msra.mxu0 0
      %781 = vmatprep.subr.bf16.mxu0 0
      %782 = vmatpush1.bf16.xpose.msra.mxu0 0
      %783 = vmatprep.subr.bf16.mxu0 0
      %784 = vmatpush1.bf16.xpose.msra.mxu0 0
      %785 = vmatprep.subr.bf16.mxu0 0
      %786 = vmatpush1.bf16.xpose.msra.mxu0 0
      %787 = vmatprep.subr.bf16.mxu0 0
      %788 = vmatpush1.bf16.xpose.msra.mxu0 0
      %789 = vmatprep.mubr.bf16.mxu0 0
      %790 = vmatmul.mubr.bf16.gmra.mrb[0].mxu0 %v752
      %v791 = vpop.f32.mrb[0].mxu0
      %v792 = vadd.f32 0.0, %v791
      %v793 = vpop.f32.mrb[0].mxu0
      %v794 = vpop.f32.mrb[0].mxu0
      %v795 = vadd.f32 0.0, %v794
      %v796 = vpop.f32.mrb[0].mxu0
      %797 = vdwg.mxu0
      %799 = vrot.lane.b32.xlu0 %v743, 112
      %v800 = vpop.permute.xlu0 %799
      %801 = vrot.lane.b32.xlu0 %v743, 48
      %v802 = vpop.permute.xlu0 %801
      %v804 = vsel %vm498, %v800, 0
      %v807 = vsel %vm498, %v802, 0
      %809 = vmatprep.subr.bf16.mxu0 0
      %810 = vmatpush1.bf16.xpose.msra.mxu0 %v807
      %811 = vmatprep.subr.bf16.mxu0 0
      %812 = vmatpush1.bf16.xpose.msra.mxu0 0
      %813 = vmatprep.subr.bf16.mxu0 0
      %814 = vmatpush1.bf16.xpose.msra.mxu0 0
      %815 = vmatprep.subr.bf16.mxu0 0
      %816 = vmatpush1.bf16.xpose.msra.mxu0 0
      %817 = vmatprep.subr.bf16.mxu0 0
      %818 = vmatpush1.bf16.xpose.msra.mxu0 0
      %819 = vmatprep.subr.bf16.mxu0 0
      %820 = vmatpush1.bf16.xpose.msra.mxu0 0
      %821 = vmatprep.subr.bf16.mxu0 0
      %822 = vmatpush1.bf16.xpose.msra.mxu0 0
      %823 = vmatprep.subr.bf16.mxu0 0
      %824 = vmatpush1.bf16.xpose.msra.mxu0 0
      %825 = vmatprep.subr.bf16.mxu0 0
      %826 = vmatpush1.bf16.xpose.msra.mxu0 0
      %827 = vmatprep.subr.bf16.mxu0 0
      %828 = vmatpush1.bf16.xpose.msra.mxu0 0
      %829 = vmatprep.subr.bf16.mxu0 0
      %830 = vmatpush1.bf16.xpose.msra.mxu0 0
      %831 = vmatprep.subr.bf16.mxu0 0
      %832 = vmatpush1.bf16.xpose.msra.mxu0 0
      %833 = vmatprep.subr.bf16.mxu0 0
      %834 = vmatpush1.bf16.xpose.msra.mxu0 0
      %835 = vmatprep.subr.bf16.mxu0 0
      %836 = vmatpush1.bf16.xpose.msra.mxu0 0
      %837 = vmatprep.subr.bf16.mxu0 0
      %838 = vmatpush1.bf16.xpose.msra.mxu0 0
      %839 = vmatprep.subr.bf16.mxu0 0
      %840 = vmatpush1.bf16.xpose.msra.mxu0 0
      %841 = vmatprep.mubr.bf16.mxu0 0
      %842 = vmatmul.mubr.bf16.gmra.mrb[0].mxu0 %v804
      %v843 = vpop.f32.mrb[0].mxu0
      %v844 = vadd.f32 0.0, %v843
      %v845 = vpop.f32.mrb[0].mxu0
      %v846 = vpop.f32.mrb[0].mxu0
      %v847 = vadd.f32 0.0, %v846
      %v848 = vpop.f32.mrb[0].mxu0
      %849 = vdwg.mxu0
      %v850 = vmul.f32 %v792, 0.25
      %v851 = vmul.f32 %v795, 0.25
      %v852 = vmul.f32 %v844, 0.25
      %v853 = vmul.f32 %v847, 0.25
      %v854 = vadd.f32 %v850, %v241
      %v855 = vadd.f32 %v851, %v242
      %v856 = vadd.f32 %v852, %v241
      %v857 = vadd.f32 %v853, %v242
      %v858 = vsel %vm498, %v854, -inf
      %859 = vmax.xlane.f32.xlu0 %v858
      %v860 = vpop.xlane.xlu0 %859
      %v861 = vsel %vm498, %v855, -inf
      %862 = vmax.xlane.f32.xlu0 %v861
      %v863 = vpop.xlane.xlu0 %862
      %v864 = vsel %vm498, %v856, -inf
      %865 = vmax.xlane.f32.xlu0 %v864
      %v866 = vpop.xlane.xlu0 %865
      %v867 = vsel %vm498, %v857, -inf
      %868 = vmax.xlane.f32.xlu0 %v867
      %v869 = vpop.xlane.xlu0 %868
      %v870 = vsub.f32 %v854, %v860
      %v871 = vsub.f32 %v855, %v863
      %v872 = vsub.f32 %v856, %v866
      %v873 = vsub.f32 %v857, %v869
      %v874 = vmul.f32 %v870, 1.442695
      %v875 = vpow.pop %v874
      %v876 = vmul.f32 %v871, 1.442695
      %v877 = vpow.pop %v876
      %v878 = vmul.f32 %v872, 1.442695
      %v879 = vpow.pop %v878
      %v880 = vmul.f32 %v873, 1.442695
      %v881 = vpow.pop %v880
      %v882 = vsel %vm498, %v875, 0.0
      %883 = vadd.xlane.f32.xlu0 %v882
      %v884 = vpop.xlane.xlu0 %883
      %v885 = vsel %vm498, %v877, 0.0
      %886 = vadd.xlane.f32.xlu0 %v885
      %v887 = vpop.xlane.xlu0 %886
      %v888 = vsel %vm498, %v879, 0.0
      %889 = vadd.xlane.f32.xlu0 %v888
      %v890 = vpop.xlane.xlu0 %889
      %v891 = vsel %vm498, %v881, 0.0
      %892 = vadd.xlane.f32.xlu0 %v891
      %v893 = vpop.xlane.xlu0 %892
      %v894 = vrcp.pop %v884
      %v895 = vrcp.pop %v887
      %v896 = vrcp.pop %v890
      %v897 = vrcp.pop %v893
      %v898 = vmul.f32 %v875, %v894
      %v899 = vmul.f32 %v877, %v895
      %v900 = vmul.f32 %v879, %v896
      %v901 = vmul.f32 %v881, %v897
      %v902 = vpack.c.bf16 %v899, %v898
      %v903 = vpack.c.bf16 %v901, %v900
      %905 = vrot.lane.b32.xlu0 %v744, 112
      %v906 = vpop.permute.xlu0 %905
      %v909 = vsel %vm498, %v902, 0
      %911 = vmatprep.subr.bf16.mxu0 0
      %912 = vmatpush1.bf16.msra.mxu0 %v906
      %913 = vmatprep.subr.bf16.mxu0 0
      %914 = vmatpush1.bf16.msra.mxu0 0
      %915 = vmatprep.subr.bf16.mxu0 0
      %916 = vmatpush1.bf16.msra.mxu0 0
      %917 = vmatprep.subr.bf16.mxu0 0
      %918 = vmatpush1.bf16.msra.mxu0 0
      %919 = vmatprep.subr.bf16.mxu0 0
      %920 = vmatpush1.bf16.msra.mxu0 0
      %921 = vmatprep.subr.bf16.mxu0 0
      %922 = vmatpush1.bf16.msra.mxu0 0
      %923 = vmatprep.subr.bf16.mxu0 0
      %924 = vmatpush1.bf16.msra.mxu0 0
      %925 = vmatprep.subr.bf16.mxu0 0
      %926 = vmatpush1.bf16.msra.mxu0 0
      %927 = vmatprep.subr.bf16.mxu0 0
      %928 = vmatpush1.bf16.msra.mxu0 0
      %929 = vmatprep.subr.bf16.mxu0 0
      %930 = vmatpush1.bf16.msra.mxu0 0
      %931 = vmatprep.subr.bf16.mxu0 0
      %932 = vmatpush1.bf16.msra.mxu0 0
      %933 = vmatprep.subr.bf16.mxu0 0
      %934 = vmatpush1.bf16.msra.mxu0 0
      %935 = vmatprep.subr.bf16.mxu0 0
      %936 = vmatpush1.bf16.msra.mxu0 0
      %937 = vmatprep.subr.bf16.mxu0 0
      %938 = vmatpush1.bf16.msra.mxu0 0
      %939 = vmatprep.subr.bf16.mxu0 0
      %940 = vmatpush1.bf16.msra.mxu0 0
      %941 = vmatprep.subr.bf16.mxu0 0
      %942 = vmatpush1.bf16.msra.mxu0 0
      %943 = vmatprep.mubr.bf16.mxu0 0
      %944 = vmatmul.mubr.bf16.gmra.mrb[0].mxu0 %v909
      %v945 = vpop.f32.mrb[0].mxu0
      %v946 = vadd.f32 0.0, %v945
      %v947 = vpop.f32.mrb[0].mxu0
      %v948 = vpop.f32.mrb[0].mxu0
      %v949 = vadd.f32 0.0, %v948
      %v950 = vpop.f32.mrb[0].mxu0
      %951 = vdwg.mxu0
      %953 = vrot.lane.b32.xlu0 %v745, 112
      %v954 = vpop.permute.xlu0 %953
      %v957 = vsel %vm498, %v903, 0
      %959 = vmatprep.subr.bf16.mxu0 0
      %960 = vmatpush1.bf16.msra.mxu0 %v954
      %961 = vmatprep.subr.bf16.mxu0 0
      %962 = vmatpush1.bf16.msra.mxu0 0
      %963 = vmatprep.subr.bf16.mxu0 0
      %964 = vmatpush1.bf16.msra.mxu0 0
      %965 = vmatprep.subr.bf16.mxu0 0
      %966 = vmatpush1.bf16.msra.mxu0 0
      %967 = vmatprep.subr.bf16.mxu0 0
      %968 = vmatpush1.bf16.msra.mxu0 0
      %969 = vmatprep.subr.bf16.mxu0 0
      %970 = vmatpush1.bf16.msra.mxu0 0
      %971 = vmatprep.subr.bf16.mxu0 0
      %972 = vmatpush1.bf16.msra.mxu0 0
      %973 = vmatprep.subr.bf16.mxu0 0
      %974 = vmatpush1.bf16.msra.mxu0 0
      %975 = vmatprep.subr.bf16.mxu0 0
      %976 = vmatpush1.bf16.msra.mxu0 0
      %977 = vmatprep.subr.bf16.mxu0 0
      %978 = vmatpush1.bf16.msra.mxu0 0
      %979 = vmatprep.subr.bf16.mxu0 0
      %980 = vmatpush1.bf16.msra.mxu0 0
      %981 = vmatprep.subr.bf16.mxu0 0
      %982 = vmatpush1.bf16.msra.mxu0 0
      %983 = vmatprep.subr.bf16.mxu0 0
      %984 = vmatpush1.bf16.msra.mxu0 0
      %985 = vmatprep.subr.bf16.mxu0 0
      %986 = vmatpush1.bf16.msra.mxu0 0
      %987 = vmatprep.subr.bf16.mxu0 0
      %988 = vmatpush1.bf16.msra.mxu0 0
      %989 = vmatprep.subr.bf16.mxu0 0
      %990 = vmatpush1.bf16.msra.mxu0 0
      %991 = vmatprep.mubr.bf16.mxu0 0
      %992 = vmatmul.mubr.bf16.gmra.mrb[0].mxu0 %v957
      %v993 = vpop.f32.mrb[0].mxu0
      %v994 = vadd.f32 0.0, %v993
      %v995 = vpop.f32.mrb[0].mxu0
      %v996 = vpop.f32.mrb[0].mxu0
      %v997 = vadd.f32 0.0, %v996
      %v998 = vpop.f32.mrb[0].mxu0
      %999 = vdwg.mxu0
      %1004 = vrot.lane.b32.xlu0 %v946, 16
      %v1005 = vpop.permute.xlu0 %1004
      %1006 = vrot.lane.b32.xlu0 %v949, 16
      %v1007 = vpop.permute.xlu0 %1006
      %1008 = vrot.lane.b32.xlu0 %v994, 16
      %v1009 = vpop.permute.xlu0 %1008
      %1010 = vrot.lane.b32.xlu0 %v997, 16
      %v1011 = vpop.permute.xlu0 %1010
      %vm1016 = vcmask 261248
      %1017 = vst.msk [vmem:[#allocation3] sm:$0xff] %vm1016, %v1005
      %1018 = vst.msk [vmem:[#allocation3 + $0x8] sm:$0xff] %vm1016, %v1007
      %1019 = vst.msk [vmem:[#allocation3 + $0x10] sm:$0xff] %vm1016, %v1009
      %1020 = vst.msk [vmem:[#allocation3 + $0x18] sm:$0xff] %vm1016, %v1011
      %v1021 = vld [vmem:[#allocation2] sm:$0xff]
      %v1022 = vld [vmem:[#allocation2 + $0x10] sm:$0xff]
      %v1023 = vld [vmem:[#allocation2 + $0x8] sm:$0xff]
      %v1024 = vld [vmem:[#allocation2 + $0x18] sm:$0xff]
      %1026 = vrot.lane.b32.xlu0 %v1021, 96
      %v1027 = vpop.permute.xlu0 %1026
      %1028 = vrot.lane.b32.xlu0 %v1021, 32
      %v1029 = vpop.permute.xlu0 %1028
      %v1031 = vsel %vm498, %v1027, 0
      %v1034 = vsel %vm498, %v1029, 0
      %1036 = vmatprep.subr.bf16.mxu0 0
      %1037 = vmatpush1.bf16.xpose.msra.mxu0 %v1034
      %1038 = vmatprep.subr.bf16.mxu0 0
      %1039 = vmatpush1.bf16.xpose.msra.mxu0 0
      %1040 = vmatprep.subr.bf16.mxu0 0
      %1041 = vmatpush1.bf16.xpose.msra.mxu0 0
      %1042 = vmatprep.subr.bf16.mxu0 0
      %1043 = vmatpush1.bf16.xpose.msra.mxu0 0
      %1044 = vmatprep.subr.bf16.mxu0 0
      %1045 = vmatpush1.bf16.xpose.msra.mxu0 0
      %1046 = vmatprep.subr.bf16.mxu0 0
      %1047 = vmatpush1.bf16.xpose.msra.mxu0 0
      %1048 = vmatprep.subr.bf16.mxu0 0
      %1049 = vmatpush1.bf16.xpose.msra.mxu0 0
      %1050 = vmatprep.subr.bf16.mxu0 0
      %1051 = vmatpush1.bf16.xpose.msra.mxu0 0
      %1052 = vmatprep.subr.bf16.mxu0 0
      %1053 = vmatpush1.bf16.xpose.msra.mxu0 0
      %1054 = vmatprep.subr.bf16.mxu0 0
      %1055 = vmatpush1.bf16.xpose.msra.mxu0 0
      %1056 = vmatprep.subr.bf16.mxu0 0
      %1057 = vmatpush1.bf16.xpose.msra.mxu0 0
      %1058 = vmatprep.subr.bf16.mxu0 0
      %1059 = vmatpush1.bf16.xpose.msra.mxu0 0
      %1060 = vmatprep.subr.bf16.mxu0 0
      %1061 = vmatpush1.bf16.xpose.msra.mxu0 0
      %1062 = vmatprep.subr.bf16.mxu0 0
      %1063 = vmatpush1.bf16.xpose.msra.mxu0 0
      %1064 = vmatprep.subr.bf16.mxu0 0
      %1065 = vmatpush1.bf16.xpose.msra.mxu0 0
      %1066 = vmatprep.subr.bf16.mxu0 0
      %1067 = vmatpush1.bf16.xpose.msra.mxu0 0
      %1068 = vmatprep.mubr.bf16.mxu0 0
      %1069 = vmatmul.mubr.bf16.gmra.mrb[0].mxu0 %v1031
      %v1070 = vpop.f32.mrb[0].mxu0
      %v1071 = vadd.f32 0.0, %v1070
      %v1072 = vpop.f32.mrb[0].mxu0
      %v1073 = vpop.f32.mrb[0].mxu0
      %v1074 = vadd.f32 0.0, %v1073
      %v1075 = vpop.f32.mrb[0].mxu0
      %1076 = vdwg.mxu0
      %1078 = vrot.lane.b32.xlu0 %v1022, 96
      %v1079 = vpop.permute.xlu0 %1078
      %1080 = vrot.lane.b32.xlu0 %v1022, 32
      %v1081 = vpop.permute.xlu0 %1080
      %v1083 = vsel %vm498, %v1079, 0
      %v1086 = vsel %vm498, %v1081, 0
      %1088 = vmatprep.subr.bf16.mxu0 0
      %1089 = vmatpush1.bf16.xpose.msra.mxu0 %v1086
      %1090 = vmatprep.subr.bf16.mxu0 0
      %1091 = vmatpush1.bf16.xpose.msra.mxu0 0
      %1092 = vmatprep.subr.bf16.mxu0 0
      %1093 = vmatpush1.bf16.xpose.msra.mxu0 0
      %1094 = vmatprep.subr.bf16.mxu0 0
      %1095 = vmatpush1.bf16.xpose.msra.mxu0 0
      %1096 = vmatprep.subr.bf16.mxu0 0
      %1097 = vmatpush1.bf16.xpose.msra.mxu0 0
      %1098 = vmatprep.subr.bf16.mxu0 0
      %1099 = vmatpush1.bf16.xpose.msra.mxu0 0
      %1100 = vmatprep.subr.bf16.mxu0 0
      %1101 = vmatpush1.bf16.xpose.msra.mxu0 0
      %1102 = vmatprep.subr.bf16.mxu0 0
      %1103 = vmatpush1.bf16.xpose.msra.mxu0 0
      %1104 = vmatprep.subr.bf16.mxu0 0
      %1105 = vmatpush1.bf16.xpose.msra.mxu0 0
      %1106 = vmatprep.subr.bf16.mxu0 0
      %1107 = vmatpush1.bf16.xpose.msra.mxu0 0
      %1108 = vmatprep.subr.bf16.mxu0 0
      %1109 = vmatpush1.bf16.xpose.msra.mxu0 0
      %1110 = vmatprep.subr.bf16.mxu0 0
      %1111 = vmatpush1.bf16.xpose.msra.mxu0 0
      %1112 = vmatprep.subr.bf16.mxu0 0
      %1113 = vmatpush1.bf16.xpose.msra.mxu0 0
      %1114 = vmatprep.subr.bf16.mxu0 0
      %1115 = vmatpush1.bf16.xpose.msra.mxu0 0
      %1116 = vmatprep.subr.bf16.mxu0 0
      %1117 = vmatpush1.bf16.xpose.msra.mxu0 0
      %1118 = vmatprep.subr.bf16.mxu0 0
      %1119 = vmatpush1.bf16.xpose.msra.mxu0 0
      %1120 = vmatprep.mubr.bf16.mxu0 0
      %1121 = vmatmul.mubr.bf16.gmra.mrb[0].mxu0 %v1083
      %v1122 = vpop.f32.mrb[0].mxu0
      %v1123 = vadd.f32 0.0, %v1122
      %v1124 = vpop.f32.mrb[0].mxu0
      %v1125 = vpop.f32.mrb[0].mxu0
      %v1126 = vadd.f32 0.0, %v1125
      %v1127 = vpop.f32.mrb[0].mxu0
      %1128 = vdwg.mxu0
      %v1129 = vmul.f32 %v1071, 0.25
      %v1130 = vmul.f32 %v1074, 0.25
      %v1131 = vmul.f32 %v1123, 0.25
      %v1132 = vmul.f32 %v1126, 0.25
      %v1133 = vadd.f32 %v1129, %v241
      %v1134 = vadd.f32 %v1130, %v242
      %v1135 = vadd.f32 %v1131, %v241
      %v1136 = vadd.f32 %v1132, %v242
      %v1137 = vsel %vm498, %v1133, -inf
      %1138 = vmax.xlane.f32.xlu0 %v1137
      %v1139 = vpop.xlane.xlu0 %1138
      %v1140 = vsel %vm498, %v1134, -inf
      %1141 = vmax.xlane.f32.xlu0 %v1140
      %v1142 = vpop.xlane.xlu0 %1141
      %v1143 = vsel %vm498, %v1135, -inf
      %1144 = vmax.xlane.f32.xlu0 %v1143
      %v1145 = vpop.xlane.xlu0 %1144
      %v1146 = vsel %vm498, %v1136, -inf
      %1147 = vmax.xlane.f32.xlu0 %v1146
      %v1148 = vpop.xlane.xlu0 %1147
      %v1149 = vsub.f32 %v1133, %v1139
      %v1150 = vsub.f32 %v1134, %v1142
      %v1151 = vsub.f32 %v1135, %v1145
      %v1152 = vsub.f32 %v1136, %v1148
      %v1153 = vmul.f32 %v1149, 1.442695
      %v1154 = vpow.pop %v1153
      %v1155 = vmul.f32 %v1150, 1.442695
      %v1156 = vpow.pop %v1155
      %v1157 = vmul.f32 %v1151, 1.442695
      %v1158 = vpow.pop %v1157
      %v1159 = vmul.f32 %v1152, 1.442695
      %v1160 = vpow.pop %v1159
      %v1161 = vsel %vm498, %v1154, 0.0
      %1162 = vadd.xlane.f32.xlu0 %v1161
      %v1163 = vpop.xlane.xlu0 %1162
      %v1164 = vsel %vm498, %v1156, 0.0
      %1165 = vadd.xlane.f32.xlu0 %v1164
      %v1166 = vpop.xlane.xlu0 %1165
      %v1167 = vsel %vm498, %v1158, 0.0
      %1168 = vadd.xlane.f32.xlu0 %v1167
      %v1169 = vpop.xlane.xlu0 %1168
      %v1170 = vsel %vm498, %v1160, 0.0
      %1171 = vadd.xlane.f32.xlu0 %v1170
      %v1172 = vpop.xlane.xlu0 %1171
      %v1173 = vrcp.pop %v1163
      %v1174 = vrcp.pop %v1166
      %v1175 = vrcp.pop %v1169
      %v1176 = vrcp.pop %v1172
      %v1177 = vmul.f32 %v1154, %v1173
      %v1178 = vmul.f32 %v1156, %v1174
      %v1179 = vmul.f32 %v1158, %v1175
      %v1180 = vmul.f32 %v1160, %v1176
      %v1181 = vpack.c.bf16 %v1178, %v1177
      %v1182 = vpack.c.bf16 %v1180, %v1179
      %1184 = vrot.lane.b32.xlu0 %v1023, 96
      %v1185 = vpop.permute.xlu0 %1184
      %v1188 = vsel %vm498, %v1181, 0
      %1190 = vmatprep.subr.bf16.mxu0 0
      %1191 = vmatpush1.bf16.msra.mxu0 %v1185
      %1192 = vmatprep.subr.bf16.mxu0 0
      %1193 = vmatpush1.bf16.msra.mxu0 0
      %1194 = vmatprep.subr.bf16.mxu0 0
      %1195 = vmatpush1.bf16.msra.mxu0 0
      %1196 = vmatprep.subr.bf16.mxu0 0
      %1197 = vmatpush1.bf16.msra.mxu0 0
      %1198 = vmatprep.subr.bf16.mxu0 0
      %1199 = vmatpush1.bf16.msra.mxu0 0
      %1200 = vmatprep.subr.bf16.mxu0 0
      %1201 = vmatpush1.bf16.msra.mxu0 0
      %1202 = vmatprep.subr.bf16.mxu0 0
      %1203 = vmatpush1.bf16.msra.mxu0 0
      %1204 = vmatprep.subr.bf16.mxu0 0
      %1205 = vmatpush1.bf16.msra.mxu0 0
      %1206 = vmatprep.subr.bf16.mxu0 0
      %1207 = vmatpush1.bf16.msra.mxu0 0
      %1208 = vmatprep.subr.bf16.mxu0 0
      %1209 = vmatpush1.bf16.msra.mxu0 0
      %1210 = vmatprep.subr.bf16.mxu0 0
      %1211 = vmatpush1.bf16.msra.mxu0 0
      %1212 = vmatprep.subr.bf16.mxu0 0
      %1213 = vmatpush1.bf16.msra.mxu0 0
      %1214 = vmatprep.subr.bf16.mxu0 0
      %1215 = vmatpush1.bf16.msra.mxu0 0
      %1216 = vmatprep.subr.bf16.mxu0 0
      %1217 = vmatpush1.bf16.msra.mxu0 0
      %1218 = vmatprep.subr.bf16.mxu0 0
      %1219 = vmatpush1.bf16.msra.mxu0 0
      %1220 = vmatprep.subr.bf16.mxu0 0
      %1221 = vmatpush1.bf16.msra.mxu0 0
      %1222 = vmatprep.mubr.bf16.mxu0 0
      %1223 = vmatmul.mubr.bf16.gmra.mrb[0].mxu0 %v1188
      %v1224 = vpop.f32.mrb[0].mxu0
      %v1225 = vadd.f32 0.0, %v1224
      %v1226 = vpop.f32.mrb[0].mxu0
      %v1227 = vpop.f32.mrb[0].mxu0
      %v1228 = vadd.f32 0.0, %v1227
      %v1229 = vpop.f32.mrb[0].mxu0
      %1230 = vdwg.mxu0
      %1232 = vrot.lane.b32.xlu0 %v1024, 96
      %v1233 = vpop.permute.xlu0 %1232
      %v1236 = vsel %vm498, %v1182, 0
      %1238 = vmatprep.subr.bf16.mxu0 0
      %1239 = vmatpush1.bf16.msra.mxu0 %v1233
      %1240 = vmatprep.subr.bf16.mxu0 0
      %1241 = vmatpush1.bf16.msra.mxu0 0
      %1242 = vmatprep.subr.bf16.mxu0 0
      %1243 = vmatpush1.bf16.msra.mxu0 0
      %1244 = vmatprep.subr.bf16.mxu0 0
      %1245 = vmatpush1.bf16.msra.mxu0 0
      %1246 = vmatprep.subr.bf16.mxu0 0
      %1247 = vmatpush1.bf16.msra.mxu0 0
      %1248 = vmatprep.subr.bf16.mxu0 0
      %1249 = vmatpush1.bf16.msra.mxu0 0
      %1250 = vmatprep.subr.bf16.mxu0 0
      %1251 = vmatpush1.bf16.msra.mxu0 0
      %1252 = vmatprep.subr.bf16.mxu0 0
      %1253 = vmatpush1.bf16.msra.mxu0 0
      %1254 = vmatprep.subr.bf16.mxu0 0
      %1255 = vmatpush1.bf16.msra.mxu0 0
      %1256 = vmatprep.subr.bf16.mxu0 0
      %1257 = vmatpush1.bf16.msra.mxu0 0
      %1258 = vmatprep.subr.bf16.mxu0 0
      %1259 = vmatpush1.bf16.msra.mxu0 0
      %1260 = vmatprep.subr.bf16.mxu0 0
      %1261 = vmatpush1.bf16.msra.mxu0 0
      %1262 = vmatprep.subr.bf16.mxu0 0
      %1263 = vmatpush1.bf16.msra.mxu0 0
      %1264 = vmatprep.subr.bf16.mxu0 0
      %1265 = vmatpush1.bf16.msra.mxu0 0
      %1266 = vmatprep.subr.bf16.mxu0 0
      %1267 = vmatpush1.bf16.msra.mxu0 0
      %1268 = vmatprep.subr.bf16.mxu0 0
      %1269 = vmatpush1.bf16.msra.mxu0 0
      %1270 = vmatprep.mubr.bf16.mxu0 0
      %1271 = vmatmul.mubr.bf16.gmra.mrb[0].mxu0 %v1236
      %v1272 = vpop.f32.mrb[0].mxu0
      %v1273 = vadd.f32 0.0, %v1272
      %v1274 = vpop.f32.mrb[0].mxu0
      %v1275 = vpop.f32.mrb[0].mxu0
      %v1276 = vadd.f32 0.0, %v1275
      %v1277 = vpop.f32.mrb[0].mxu0
      %1278 = vdwg.mxu0
      %1283 = vrot.lane.b32.xlu0 %v1225, 32
      %v1284 = vpop.permute.xlu0 %1283
      %1285 = vrot.lane.b32.xlu0 %v1228, 32
      %v1286 = vpop.permute.xlu0 %1285
      %1287 = vrot.lane.b32.xlu0 %v1273, 32
      %v1288 = vpop.permute.xlu0 %1287
      %1289 = vrot.lane.b32.xlu0 %v1276, 32
      %v1290 = vpop.permute.xlu0 %1289
      %vm1295 = vcmask 392448
      %1296 = vst.msk [vmem:[#allocation3] sm:$0xff] %vm1295, %v1284
      %1297 = vst.msk [vmem:[#allocation3 + $0x8] sm:$0xff] %vm1295, %v1286
      %1298 = vst.msk [vmem:[#allocation3 + $0x10] sm:$0xff] %vm1295, %v1288
      %1299 = vst.msk [vmem:[#allocation3 + $0x18] sm:$0xff] %vm1295, %v1290
      %v1300 = vld [vmem:[#allocation2] sm:$0xff]
      %v1301 = vld [vmem:[#allocation2 + $0x10] sm:$0xff]
      %v1302 = vld [vmem:[#allocation2 + $0x8] sm:$0xff]
      %v1303 = vld [vmem:[#allocation2 + $0x18] sm:$0xff]
      %1305 = vrot.lane.b32.xlu0 %v1300, 80
      %v1306 = vpop.permute.xlu0 %1305
      %1307 = vrot.lane.b32.xlu0 %v1300, 16
      %v1308 = vpop.permute.xlu0 %1307
      %v1310 = vsel %vm498, %v1306, 0
      %v1313 = vsel %vm498, %v1308, 0
      %1315 = vmatprep.subr.bf16.mxu0 0
      %1316 = vmatpush1.bf16.xpose.msra.mxu0 %v1313
      %1317 = vmatprep.subr.bf16.mxu0 0
      %1318 = vmatpush1.bf16.xpose.msra.mxu0 0
      %1319 = vmatprep.subr.bf16.mxu0 0
      %1320 = vmatpush1.bf16.xpose.msra.mxu0 0
      %1321 = vmatprep.subr.bf16.mxu0 0
      %1322 = vmatpush1.bf16.xpose.msra.mxu0 0
      %1323 = vmatprep.subr.bf16.mxu0 0
      %1324 = vmatpush1.bf16.xpose.msra.mxu0 0
      %1325 = vmatprep.subr.bf16.mxu0 0
      %1326 = vmatpush1.bf16.xpose.msra.mxu0 0
      %1327 = vmatprep.subr.bf16.mxu0 0
      %1328 = vmatpush1.bf16.xpose.msra.mxu0 0
      %1329 = vmatprep.subr.bf16.mxu0 0
      %1330 = vmatpush1.bf16.xpose.msra.mxu0 0
      %1331 = vmatprep.subr.bf16.mxu0 0
      %1332 = vmatpush1.bf16.xpose.msra.mxu0 0
      %1333 = vmatprep.subr.bf16.mxu0 0
      %1334 = vmatpush1.bf16.xpose.msra.mxu0 0
      %1335 = vmatprep.subr.bf16.mxu0 0
      %1336 = vmatpush1.bf16.xpose.msra.mxu0 0
      %1337 = vmatprep.subr.bf16.mxu0 0
      %1338 = vmatpush1.bf16.xpose.msra.mxu0 0
      %1339 = vmatprep.subr.bf16.mxu0 0
      %1340 = vmatpush1.bf16.xpose.msra.mxu0 0
      %1341 = vmatprep.subr.bf16.mxu0 0
      %1342 = vmatpush1.bf16.xpose.msra.mxu0 0
      %1343 = vmatprep.subr.bf16.mxu0 0
      %1344 = vmatpush1.bf16.xpose.msra.mxu0 0
      %1345 = vmatprep.subr.bf16.mxu0 0
      %1346 = vmatpush1.bf16.xpose.msra.mxu0 0
      %1347 = vmatprep.mubr.bf16.mxu0 0
      %1348 = vmatmul.mubr.bf16.gmra.mrb[0].mxu0 %v1310
      %v1349 = vpop.f32.mrb[0].mxu0
      %v1350 = vadd.f32 0.0, %v1349
      %v1351 = vpop.f32.mrb[0].mxu0
      %v1352 = vpop.f32.mrb[0].mxu0
      %v1353 = vadd.f32 0.0, %v1352
      %v1354 = vpop.f32.mrb[0].mxu0
      %1355 = vdwg.mxu0
      %1357 = vrot.lane.b32.xlu0 %v1301, 80
      %v1358 = vpop.permute.xlu0 %1357
      %1359 = vrot.lane.b32.xlu0 %v1301, 16
      %v1360 = vpop.permute.xlu0 %1359
      %v1362 = vsel %vm498, %v1358, 0
      %v1365 = vsel %vm498, %v1360, 0
      %1367 = vmatprep.subr.bf16.mxu0 0
      %1368 = vmatpush1.bf16.xpose.msra.mxu0 %v1365
      %1369 = vmatprep.subr.bf16.mxu0 0
      %1370 = vmatpush1.bf16.xpose.msra.mxu0 0
      %1371 = vmatprep.subr.bf16.mxu0 0
      %1372 = vmatpush1.bf16.xpose.msra.mxu0 0
      %1373 = vmatprep.subr.bf16.mxu0 0
      %1374 = vmatpush1.bf16.xpose.msra.mxu0 0
      %1375 = vmatprep.subr.bf16.mxu0 0
      %1376 = vmatpush1.bf16.xpose.msra.mxu0 0
      %1377 = vmatprep.subr.bf16.mxu0 0
      %1378 = vmatpush1.bf16.xpose.msra.mxu0 0
      %1379 = vmatprep.subr.bf16.mxu0 0
      %1380 = vmatpush1.bf16.xpose.msra.mxu0 0
      %1381 = vmatprep.subr.bf16.mxu0 0
      %1382 = vmatpush1.bf16.xpose.msra.mxu0 0
      %1383 = vmatprep.subr.bf16.mxu0 0
      %1384 = vmatpush1.bf16.xpose.msra.mxu0 0
      %1385 = vmatprep.subr.bf16.mxu0 0
      %1386 = vmatpush1.bf16.xpose.msra.mxu0 0
      %1387 = vmatprep.subr.bf16.mxu0 0
      %1388 = vmatpush1.bf16.xpose.msra.mxu0 0
      %1389 = vmatprep.subr.bf16.mxu0 0
      %1390 = vmatpush1.bf16.xpose.msra.mxu0 0
      %1391 = vmatprep.subr.bf16.mxu0 0
      %1392 = vmatpush1.bf16.xpose.msra.mxu0 0
      %1393 = vmatprep.subr.bf16.mxu0 0
      %1394 = vmatpush1.bf16.xpose.msra.mxu0 0
      %1395 = vmatprep.subr.bf16.mxu0 0
      %1396 = vmatpush1.bf16.xpose.msra.mxu0 0
      %1397 = vmatprep.subr.bf16.mxu0 0
      %1398 = vmatpush1.bf16.xpose.msra.mxu0 0
      %1399 = vmatprep.mubr.bf16.mxu0 0
      %1400 = vmatmul.mubr.bf16.gmra.mrb[0].mxu0 %v1362
      %v1401 = vpop.f32.mrb[0].mxu0
      %v1402 = vadd.f32 0.0, %v1401
      %v1403 = vpop.f32.mrb[0].mxu0
      %v1404 = vpop.f32.mrb[0].mxu0
      %v1405 = vadd.f32 0.0, %v1404
      %v1406 = vpop.f32.mrb[0].mxu0
      %1407 = vdwg.mxu0
      %v1408 = vmul.f32 %v1350, 0.25
      %v1409 = vmul.f32 %v1353, 0.25
      %v1410 = vmul.f32 %v1402, 0.25
      %v1411 = vmul.f32 %v1405, 0.25
      %v1412 = vadd.f32 %v1408, %v241
      %v1413 = vadd.f32 %v1409, %v242
      %v1414 = vadd.f32 %v1410, %v241
      %v1415 = vadd.f32 %v1411, %v242
      %v1416 = vsel %vm498, %v1412, -inf
      %1417 = vmax.xlane.f32.xlu0 %v1416
      %v1418 = vpop.xlane.xlu0 %1417
      %v1419 = vsel %vm498, %v1413, -inf
      %1420 = vmax.xlane.f32.xlu0 %v1419
      %v1421 = vpop.xlane.xlu0 %1420
      %v1422 = vsel %vm498, %v1414, -inf
      %1423 = vmax.xlane.f32.xlu0 %v1422
      %v1424 = vpop.xlane.xlu0 %1423
      %v1425 = vsel %vm498, %v1415, -inf
      %1426 = vmax.xlane.f32.xlu0 %v1425
      %v1427 = vpop.xlane.xlu0 %1426
      %v1428 = vsub.f32 %v1412, %v1418
      %v1429 = vsub.f32 %v1413, %v1421
      %v1430 = vsub.f32 %v1414, %v1424
      %v1431 = vsub.f32 %v1415, %v1427
      %v1432 = vmul.f32 %v1428, 1.442695
      %v1433 = vpow.pop %v1432
      %v1434 = vmul.f32 %v1429, 1.442695
      %v1435 = vpow.pop %v1434
      %v1436 = vmul.f32 %v1430, 1.442695
      %v1437 = vpow.pop %v1436
      %v1438 = vmul.f32 %v1431, 1.442695
      %v1439 = vpow.pop %v1438
      %v1440 = vsel %vm498, %v1433, 0.0
      %1441 = vadd.xlane.f32.xlu0 %v1440
      %v1442 = vpop.xlane.xlu0 %1441
      %v1443 = vsel %vm498, %v1435, 0.0
      %1444 = vadd.xlane.f32.xlu0 %v1443
      %v1445 = vpop.xlane.xlu0 %1444
      %v1446 = vsel %vm498, %v1437, 0.0
      %1447 = vadd.xlane.f32.xlu0 %v1446
      %v1448 = vpop.xlane.xlu0 %1447
      %v1449 = vsel %vm498, %v1439, 0.0
      %1450 = vadd.xlane.f32.xlu0 %v1449
      %v1451 = vpop.xlane.xlu0 %1450
      %v1452 = vrcp.pop %v1442
      %v1453 = vrcp.pop %v1445
      %v1454 = vrcp.pop %v1448
      %v1455 = vrcp.pop %v1451
      %v1456 = vmul.f32 %v1433, %v1452
      %v1457 = vmul.f32 %v1435, %v1453
      %v1458 = vmul.f32 %v1437, %v1454
      %v1459 = vmul.f32 %v1439, %v1455
      %v1460 = vpack.c.bf16 %v1457, %v1456
      %v1461 = vpack.c.bf16 %v1459, %v1458
      %1463 = vrot.lane.b32.xlu0 %v1302, 80
      %v1464 = vpop.permute.xlu0 %1463
      %v1467 = vsel %vm498, %v1460, 0
      %1469 = vmatprep.subr.bf16.mxu0 0
      %1470 = vmatpush1.bf16.msra.mxu0 %v1464
      %1471 = vmatprep.subr.bf16.mxu0 0
      %1472 = vmatpush1.bf16.msra.mxu0 0
      %1473 = vmatprep.subr.bf16.mxu0 0
      %1474 = vmatpush1.bf16.msra.mxu0 0
      %1475 = vmatprep.subr.bf16.mxu0 0
      %1476 = vmatpush1.bf16.msra.mxu0 0
      %1477 = vmatprep.subr.bf16.mxu0 0
      %1478 = vmatpush1.bf16.msra.mxu0 0
      %1479 = vmatprep.subr.bf16.mxu0 0
      %1480 = vmatpush1.bf16.msra.mxu0 0
      %1481 = vmatprep.subr.bf16.mxu0 0
      %1482 = vmatpush1.bf16.msra.mxu0 0
      %1483 = vmatprep.subr.bf16.mxu0 0
      %1484 = vmatpush1.bf16.msra.mxu0 0
      %1485 = vmatprep.subr.bf16.mxu0 0
      %1486 = vmatpush1.bf16.msra.mxu0 0
      %1487 = vmatprep.subr.bf16.mxu0 0
      %1488 = vmatpush1.bf16.msra.mxu0 0
      %1489 = vmatprep.subr.bf16.mxu0 0
      %1490 = vmatpush1.bf16.msra.mxu0 0
      %1491 = vmatprep.subr.bf16.mxu0 0
      %1492 = vmatpush1.bf16.msra.mxu0 0
      %1493 = vmatprep.subr.bf16.mxu0 0
      %1494 = vmatpush1.bf16.msra.mxu0 0
      %1495 = vmatprep.subr.bf16.mxu0 0
      %1496 = vmatpush1.bf16.msra.mxu0 0
      %1497 = vmatprep.subr.bf16.mxu0 0
      %1498 = vmatpush1.bf16.msra.mxu0 0
      %1499 = vmatprep.subr.bf16.mxu0 0
      %1500 = vmatpush1.bf16.msra.mxu0 0
      %1501 = vmatprep.mubr.bf16.mxu0 0
      %1502 = vmatmul.mubr.bf16.gmra.mrb[0].mxu0 %v1467
      %v1503 = vpop.f32.mrb[0].mxu0
      %v1504 = vadd.f32 0.0, %v1503
      %v1505 = vpop.f32.mrb[0].mxu0
      %v1506 = vpop.f32.mrb[0].mxu0
      %v1507 = vadd.f32 0.0, %v1506
      %v1508 = vpop.f32.mrb[0].mxu0
      %1509 = vdwg.mxu0
      %1511 = vrot.lane.b32.xlu0 %v1303, 80
      %v1512 = vpop.permute.xlu0 %1511
      %v1515 = vsel %vm498, %v1461, 0
      %1517 = vmatprep.subr.bf16.mxu0 0
      %1518 = vmatpush1.bf16.msra.mxu0 %v1512
      %1519 = vmatprep.subr.bf16.mxu0 0
      %1520 = vmatpush1.bf16.msra.mxu0 0
      %1521 = vmatprep.subr.bf16.mxu0 0
      %1522 = vmatpush1.bf16.msra.mxu0 0
      %1523 = vmatprep.subr.bf16.mxu0 0
      %1524 = vmatpush1.bf16.msra.mxu0 0
      %1525 = vmatprep.subr.bf16.mxu0 0
      %1526 = vmatpush1.bf16.msra.mxu0 0
      %1527 = vmatprep.subr.bf16.mxu0 0
      %1528 = vmatpush1.bf16.msra.mxu0 0
      %1529 = vmatprep.subr.bf16.mxu0 0
      %1530 = vmatpush1.bf16.msra.mxu0 0
      %1531 = vmatprep.subr.bf16.mxu0 0
      %1532 = vmatpush1.bf16.msra.mxu0 0
      %1533 = vmatprep.subr.bf16.mxu0 0
      %1534 = vmatpush1.bf16.msra.mxu0 0
      %1535 = vmatprep.subr.bf16.mxu0 0
      %1536 = vmatpush1.bf16.msra.mxu0 0
      %1537 = vmatprep.subr.bf16.mxu0 0
      %1538 = vmatpush1.bf16.msra.mxu0 0
      %1539 = vmatprep.subr.bf16.mxu0 0
      %1540 = vmatpush1.bf16.msra.mxu0 0
      %1541 = vmatprep.subr.bf16.mxu0 0
      %1542 = vmatpush1.bf16.msra.mxu0 0
      %1543 = vmatprep.subr.bf16.mxu0 0
      %1544 = vmatpush1.bf16.msra.mxu0 0
      %1545 = vmatprep.subr.bf16.mxu0 0
      %1546 = vmatpush1.bf16.msra.mxu0 0
      %1547 = vmatprep.subr.bf16.mxu0 0
      %1548 = vmatpush1.bf16.msra.mxu0 0
      %1549 = vmatprep.mubr.bf16.mxu0 0
      %1550 = vmatmul.mubr.bf16.gmra.mrb[0].mxu0 %v1515
      %v1551 = vpop.f32.mrb[0].mxu0
      %v1552 = vadd.f32 0.0, %v1551
      %v1553 = vpop.f32.mrb[0].mxu0
      %v1554 = vpop.f32.mrb[0].mxu0
      %v1555 = vadd.f32 0.0, %v1554
      %v1556 = vpop.f32.mrb[0].mxu0
      %1557 = vdwg.mxu0
      %1562 = vrot.lane.b32.xlu0 %v1504, 48
      %v1563 = vpop.permute.xlu0 %1562
      %1564 = vrot.lane.b32.xlu0 %v1507, 48
      %v1565 = vpop.permute.xlu0 %1564
      %1566 = vrot.lane.b32.xlu0 %v1552, 48
      %v1567 = vpop.permute.xlu0 %1566
      %1568 = vrot.lane.b32.xlu0 %v1555, 48
      %v1569 = vpop.permute.xlu0 %1568
      %vm1574 = vcmask 523648
      %1575 = vst.msk [vmem:[#allocation3] sm:$0xff] %vm1574, %v1563
      %1576 = vst.msk [vmem:[#allocation3 + $0x8] sm:$0xff] %vm1574, %v1565
      %1577 = vst.msk [vmem:[#allocation3 + $0x10] sm:$0xff] %vm1574, %v1567
      %1578 = vst.msk [vmem:[#allocation3 + $0x18] sm:$0xff] %vm1574, %v1569
      %v1579 = vld [vmem:[#allocation3] sm:$0xff]
      %v1580 = vld [vmem:[#allocation3 + $0x8] sm:$0xff]
      %v1581 = vld [vmem:[#allocation3 + $0x10] sm:$0xff]
      %v1582 = vld [vmem:[#allocation3 + $0x18] sm:$0xff]
      %v1583 = vpack.c.bf16 %v1580, %v1579
      %v1584 = vpack.c.bf16 %v1582, %v1581
      %v1587 = vunpack.c.l.b16 %v1583
      %v1588 = vunpack.c.h.b16 %v1583
      %v1589 = vunpack.c.l.b16 %v1584
      %v1590 = vunpack.c.h.b16 %v1584
      %v1591 = vpack.c.b16 %v1587, %v1587
      %v1592 = vpack.c.b16 %v1588, %v1588
      %v1593 = vpack.c.b16 %v1589, %v1589
      %v1594 = vpack.c.b16 %v1590, %v1590
      %vm1599 = vcmask 519168
      %1600 = vst.msk [vmem:[%s231] sm:$0xf] %vm1599, %v1591
      %1601 = vst.msk [vmem:[%s231 + $0x4] sm:$0xf] %vm1599, %v1592
      %1602 = vst.msk [vmem:[%s231 + $0x8] sm:$0xf] %vm1599, %v1593
      %1603 = vst.msk [vmem:[%s231 + $0xc] sm:$0xf] %vm1599, %v1594
      %s1604 = smul.u32 2, %s16
      %p1605 = scmp.lt.s32.totalorder %s1604, 3
      %s1606 = scalar_select %p1605, %s1604, 3
      %s1607 = smul.addr %s1606, 2
      %s1608 = smul.addr %s1607, 4
      %s1609 = scalar_lea.vmem %s5, %s1608
      // Predicated region
      $region41: #{text_encoder_forward.4} parent=39 // pred_check
        %p1610 = pneg %p144
      $region42: #{text_encoder_forward.4} parent=39 // pred_check_branch
        %1612 = sbr.rel (%p1610) target = $region44
      $region43: #{text_encoder_forward.4} parent=39 // pred_region
        %s1613 = smul.u32 2, %s16
      $region44: #{text_encoder_forward.4} parent=39 // pred_fallthru
        _
    $region40: #{text_encoder_forward.4} parent=5 // pred_fallthru
      _
    %p1614 = scmp.le.s32.totalorder 2, %s11
    // Predicated region
    $region45: #{text_encoder_forward.4} parent=5 // pred_check
      %p1615 = pneg %p1614
    $region46: #{text_encoder_forward.4} parent=5 // pred_check_branch
      %1617 = sbr.rel (%p1615) target = $region48
    $region47: #{text_encoder_forward.4} parent=5 // pred_region
      %s1618 = ssub.s32 %s11, 2
      // Predicated region
      $region49: #{text_encoder_forward.4} parent=47 // pred_check
        %p1619 = pneg %p150
      $region50: #{text_encoder_forward.4} parent=47 // pred_check_branch
        %1621 = sbr.rel (%p1619) target = $region52
      $region51: #{text_encoder_forward.4} parent=47 // pred_region
        %s1622 = smul.u32 2, %s17
        %p1623 = scmp.lt.s32.totalorder %s1622, 3
        %s1624 = scalar_select %p1623, %s1622, 3
        %s1625 = smul.addr %s1624, 2
        %s1626 = smul.addr %s1625, 4
        %s1627 = scalar_lea.vmem %s5, %s1626
      $region52: #{text_encoder_forward.4} parent=47 // pred_fallthru
        _
    $region48: #{text_encoder_forward.4} parent=5 // pred_fallthru
      _
  $region6: #{text_encoder_forward.4} parent=0 // loop_footer
    %s15 = sadd.s32 1, %s11
  $region7: #{text_encoder_forward.4} parent=0 // loop_footer_branch
    %10 = sbr.rel target = $region3
  $region8: #{text_encoder_forward.4} parent=0 // loop_exit
    _

</llo_original>
